<compile_context>
chip_gen: v5e
topology: v5e:2x2
jax: 0.10.0
libtpu: 0.0.40
codegen_flags: <defaults>
</compile_context>

<pallas_src>
import jax
import jax.numpy as jnp
import numpy as np
from jax.experimental import pallas as pl
from jax.experimental.pallas import tpu as pltpu

INPUT_DIM = 22
NUM_CHANNELS = [64, 64, 64]
KSIZE = 3
N_BLOCKS = len(NUM_CHANNELS)
C = NUM_CHANNELS[0]
CP = 128   # channel dim padded to full 128-lane width


def _round_up(x, m):
    return ((x + m - 1) // m) * m


def _choose_block_b(B):
    # BB multiple of 8 (sublane-aligned (BB, 128) output block), capped at 32,
    # and ~B/2 so realistic batches keep >= 2 grid steps (v7x megacore).
    bb = _round_up(max(1, pl.cdiv(B, 2)), 8)
    return int(max(8, min(32, bb)))


# ----------------------------- Pallas kernel --------------------------------
def tcn_kernel(x_ref, seq_ref, w_in_ref, b_in_ref, w1_ref, b1_ref,
               w2_ref, b2_ref, wfc_ref, out_ref):
    BB, L, F = x_ref.shape

    # Input projection as one tall matmul (f32, K=22 is tiny).
    x2 = x_ref[...].reshape(BB * L, F)
    h = jnp.dot(x2, w_in_ref[...], preferred_element_type=jnp.float32)
    h = (h + b_in_ref[...]).reshape(BB, L, CP)

    def causal_conv(hin, w_slab, b_row, dil):
        # Dilated causal conv: zero-pad the per-sequence time axis once, take
        # K static slices (axis=1 -> never crosses a sequence boundary), pack
        # them on the lane axis and run ONE tall MXU matmul.
        pad = (KSIZE - 1) * dil
        hp = jnp.concatenate(
            [jnp.zeros((BB, pad, CP), hin.dtype), hin], axis=1)  # (BB, L+pad, CP)
        taps = [hp[:, j * dil:j * dil + L, :] for j in range(KSIZE)]
        xs = jnp.concatenate(taps, axis=-1)                      # (BB, L, K*CP)
        xs = xs.reshape(BB * L, KSIZE * CP).astype(jnp.bfloat16)
        y = jnp.dot(xs, w_slab, preferred_element_type=jnp.float32) + b_row
        return y.reshape(BB, L, CP)

    for blk in range(N_BLOCKS):
        dil = 2 ** blk
        res = h                                   # residual path is Identity
        h1 = jnp.maximum(causal_conv(h, w1_ref[blk], b1_ref[blk], dil), 0.0)
        # dropout1 / dropout2: identity at inference
        h2 = jnp.maximum(causal_conv(h1, w2_ref[blk], b2_ref[blk], dil), 0.0)
        h = h2 + res

    # Masked temporal mean: iota mask + sublane reduce (no pooling matmul).
    seq = seq_ref[...]                                           # (BB, CP) i32
    t = jax.lax.broadcasted_iota(jnp.int32, (BB, L, CP), 1)
    hm = jnp.where(t < seq[:, None, :], h, 0.0)
    # NOTE: max(seq, 1) differs from the reference only for seq_len == 0
    # (reference would produce inf/nan there); kept as a benign guard.
    mean = jnp.sum(hm, axis=1) / jnp.maximum(seq, 1).astype(jnp.float32)

    # Lane/sublane-dense store of the per-lane fc contribution; the 128-lane
    # sum and the fc bias are a trivial XLA epilogue in the wrapper.
    out_ref[...] = mean * wfc_ref[...]


# ------------------------------- wrapper -------------------------------------
def prepare_args(x, seq_lens, params, BB):
    B, L, F = x.shape
    assert F == INPUT_DIM
    Bp = _round_up(B, BB)

    xp = jnp.zeros((Bp, L, F), jnp.float32).at[:B].set(x.astype(jnp.float32))
    seq = jnp.zeros((Bp,), jnp.int32).at[:B].set(seq_lens.astype(jnp.int32))
    seq_b = jnp.broadcast_to(seq[:, None], (Bp, CP))

    w_in = jnp.zeros((F, CP), jnp.float32).at[:, :C].set(params["w_in"])
    b_in = jnp.zeros((1, CP), jnp.float32).at[:, :C].set(params["b_in"])

    def pack_conv(w):   # (N_BLOCKS, K, C, C) -> (N_BLOCKS, K*CP, CP) bf16 slabs
        slab = jnp.zeros((N_BLOCKS, KSIZE * CP, CP), jnp.float32)
        for blk in range(N_BLOCKS):
            for j in range(KSIZE):
                slab = slab.at[blk, j * CP:j * CP + C, :C].set(w[blk, j])
        return slab.astype(jnp.bfloat16)

    def pack_bias(bv):  # (N_BLOCKS, 1, C) -> (N_BLOCKS, 1, CP)
        return jnp.zeros((N_BLOCKS, 1, CP), jnp.float32).at[:, :, :C].set(bv)

    w1 = pack_conv(params["w1"]); b1 = pack_bias(params["b1"])
    w2 = pack_conv(params["w2"]); b2 = pack_bias(params["b2"])
    w_fc = jnp.zeros((1, CP), jnp.float32).at[:, :C].set(params["w_fc"].T)
    return (xp, seq_b, w_in, b_in, w1, b1, w2, b2, w_fc), Bp


def tcn_forward(x, seq_lens, params, block_b=None):
    B, L, F = x.shape
    BB = block_b if block_b is not None else _choose_block_b(B)
    args, Bp = prepare_args(x, seq_lens, params, BB)
    grid = (Bp // BB,)

    const2 = lambda i: (0, 0)
    const3 = lambda i: (0, 0, 0)
    in_specs = [
        pl.BlockSpec((BB, L, F), lambda i: (i, 0, 0)),                 # x (natural 22-wide)
        pl.BlockSpec((BB, CP), lambda i: (i, 0)),                      # seq lengths
        pl.BlockSpec((F, CP), const2),                                 # w_in
        pl.BlockSpec((1, CP), const2),                                 # b_in
        pl.BlockSpec((N_BLOCKS, KSIZE * CP, CP), const3),              # w1 slabs
        pl.BlockSpec((N_BLOCKS, 1, CP), const3),                       # b1
        pl.BlockSpec((N_BLOCKS, KSIZE * CP, CP), const3),              # w2 slabs
        pl.BlockSpec((N_BLOCKS, 1, CP), const3),                       # b2
        pl.BlockSpec((1, CP), const2),                                 # w_fc
    ]
    out = pl.pallas_call(
        tcn_kernel,
        out_shape=jax.ShapeDtypeStruct((Bp, CP), jnp.float32),
        grid=grid,
        in_specs=in_specs,
        out_specs=pl.BlockSpec((BB, CP), lambda i: (i, 0)),
        compiler_params=pltpu.CompilerParams(
            dimension_semantics=("parallel",)),
    )(*args)
    # Epilogue: 128-lane reduction (padded lanes contribute 0) + fc bias.
    return out[:B].sum(axis=-1, keepdims=True) + params["b_fc"]


# --------------------------- deterministic params ----------------------------
def init_params(key):
    ks = jax.random.split(key, 8)
    return {
        "w_in": jax.random.normal(ks[0], (INPUT_DIM, C), jnp.float32) * 0.1,
        "b_in": jax.random.normal(ks[1], (1, C), jnp.float32) * 0.1,
        # conv weights stored per tap: [block, tap, C_in, C_out]
        "w1": jax.random.normal(ks[2], (N_BLOCKS, KSIZE, C, C), jnp.float32) * 0.05,
        "b1": jax.random.normal(ks[3], (N_BLOCKS, 1, C), jnp.float32) * 0.05,
        "w2": jax.random.normal(ks[4], (N_BLOCKS, KSIZE, C, C), jnp.float32) * 0.05,
        "b2": jax.random.normal(ks[5], (N_BLOCKS, 1, C), jnp.float32) * 0.05,
        "w_fc": jax.random.normal(ks[6], (C, 1), jnp.float32) * 0.1,
        "b_fc": jax.random.normal(ks[7], (1, 1), jnp.float32) * 0.1,
    }


# -------------------------- pure-JAX reference (check) -----------------------
def _torch_conv1d(x_ncl, w_oik, b_o, pad, dil):
    out = jax.lax.conv_general_dilated(
        x_ncl, w_oik, window_strides=(1,), padding=[(pad, pad)],
        rhs_dilation=(dil,), dimension_numbers=("NCH", "OIH", "NCH"))
    return out + b_o[None, :, None]


def reference_forward(x, seq_lens, params):
    B, L, _ = x.shape
    h = x @ params["w_in"] + params["b_in"]              # (B, L, C)
    h = jnp.transpose(h, (0, 2, 1))                      # (B, C, L)  (PyTorch NCL)
    for blk in range(N_BLOCKS):
        dil = 2 ** blk
        pad = (KSIZE - 1) * dil
        res = h
        w1 = jnp.transpose(params["w1"][blk], (2, 1, 0))  # -> (C_out, C_in, K)
        w2 = jnp.transpose(params["w2"][blk], (2, 1, 0))
        c1 = jnp.maximum(_torch_conv1d(h, w1, params["b1"][blk, 0], pad, dil), 0.0)
        c2 = jnp.maximum(_torch_conv1d(c1, w2, params["b2"][blk, 0], pad, dil), 0.0)
        h = c2[:, :, :L] + res
    h = jnp.transpose(h, (0, 2, 1))                      # (B, L, C)
    mask = (jnp.arange(L)[None, :] < seq_lens[:, None]).astype(jnp.float32)[:, :, None]
    h = h * mask
    mean = h.sum(axis=1) / seq_lens[:, None].astype(jnp.float32)
    return mean @ params["w_fc"] + params["b_fc"]


# --------------------------------- main ---------------------------------------
if __name__ == "__main__":
    key = jax.random.PRNGKey(0)
    kp, kx = jax.random.split(key)
    params = init_params(kp)

    # B=20 exercises batch padding (20 -> 32) and a 2-step grid with BB=16.
    B, L = 20, 16
    x = jax.random.normal(kx, (B, L, INPUT_DIM), jnp.float32)
    seq_lens = jnp.array([16, 11, 7, 16, 3, 9, 14, 5, 16, 12,
                          8, 6, 10, 15, 4, 13, 16, 7, 11, 9], dtype=jnp.int32)

    out = jax.block_until_ready(tcn_forward(x, seq_lens, params))
    ref = reference_forward(x, seq_lens, params)
    assert out.shape == (B, 1)
    # bf16 MXU operands with f32 accumulation -> slightly looser tolerance
    np.testing.assert_allclose(np.asarray(out), np.asarray(ref),
                               rtol=2e-2, atol=2e-2)

    print("KERNEL_OK")
</pallas_src>

<mosaic_0001>
module attributes {stable_mosaic.version = 11 : i64} {
  func.func @tcn_kernel(%arg0: i32, %arg1: memref<16x16x22xf32, #tpu.memory_space<vmem>>, %arg2: memref<16x128xi32, #tpu.memory_space<vmem>>, %arg3: memref<22x128xf32, #tpu.memory_space<vmem>>, %arg4: memref<1x128xf32, #tpu.memory_space<vmem>>, %arg5: memref<3x384x128xbf16, #tpu.memory_space<vmem>>, %arg6: memref<3x1x128xf32, #tpu.memory_space<vmem>>, %arg7: memref<3x384x128xbf16, #tpu.memory_space<vmem>>, %arg8: memref<3x1x128xf32, #tpu.memory_space<vmem>>, %arg9: memref<1x128xf32, #tpu.memory_space<vmem>>, %arg10: memref<16x128xf32, #tpu.memory_space<vmem>>) attributes {dimension_semantics = [#tpu.dimension_semantics<parallel>], iteration_bounds = array<i64: 2>, scalar_prefetch = 0 : i64, scratch_operands = 0 : i64, tpu.core_type = #tpu.core_type<tc>, window_params = [{transform_indices = @transform_0, window_bounds = array<i64: 16, 16, 22>}, {transform_indices = @transform_1, window_bounds = array<i64: 16, 128>}, {pipeline_mode = #tpu.pipeline_mode<synchronous>, transform_indices = @transform_2, window_bounds = array<i64: 22, 128>}, {pipeline_mode = #tpu.pipeline_mode<synchronous>, transform_indices = @transform_3, window_bounds = array<i64: 1, 128>}, {pipeline_mode = #tpu.pipeline_mode<synchronous>, transform_indices = @transform_4, window_bounds = array<i64: 3, 384, 128>}, {pipeline_mode = #tpu.pipeline_mode<synchronous>, transform_indices = @transform_5, window_bounds = array<i64: 3, 1, 128>}, {pipeline_mode = #tpu.pipeline_mode<synchronous>, transform_indices = @transform_6, window_bounds = array<i64: 3, 384, 128>}, {pipeline_mode = #tpu.pipeline_mode<synchronous>, transform_indices = @transform_7, window_bounds = array<i64: 3, 1, 128>}, {pipeline_mode = #tpu.pipeline_mode<synchronous>, transform_indices = @transform_8, window_bounds = array<i64: 1, 128>}, {transform_indices = @transform_9, window_bounds = array<i64: 16, 128>}]} {
    %c0 = arith.constant 0 : index
    %c0_0 = arith.constant 0 : index
    %c0_1 = arith.constant 0 : index
    %0 = vector.load %arg1[%c0, %c0_0, %c0_1] : memref<16x16x22xf32, #tpu.memory_space<vmem>>, vector<16x16x22xf32>
    %1 = vector.shape_cast %0 : vector<16x16x22xf32> to vector<256x22xf32>
    %c0_2 = arith.constant 0 : index
    %c0_3 = arith.constant 0 : index
    %2 = vector.load %arg3[%c0_2, %c0_3] : memref<22x128xf32, #tpu.memory_space<vmem>>, vector<22x128xf32>
    %cst = arith.constant dense<0.000000e+00> : vector<256x128xf32>
    %3 = tpu.matmul %1, %2, %cst {dimension_numbers = #tpu.dot_dimension_numbers<[1], [0], [0], [1], [0, 0, 1, 1], [], []>} : vector<256x22xf32>, vector<22x128xf32>, vector<256x128xf32> -> vector<256x128xf32>
    %c0_4 = arith.constant 0 : index
    %c0_5 = arith.constant 0 : index
    %4 = vector.load %arg4[%c0_4, %c0_5] : memref<1x128xf32, #tpu.memory_space<vmem>>, vector<1x128xf32>
    %5 = vector.broadcast %4 : vector<1x128xf32> to vector<256x128xf32>
    %6 = arith.addf %3, %5 : vector<256x128xf32>
    %7 = vector.shape_cast %6 : vector<256x128xf32> to vector<16x16x128xf32>
    %c0_6 = arith.constant 0 : index
    %c0_7 = arith.constant 0 : index
    %c0_8 = arith.constant 0 : index
    %8 = vector.load %arg5[%c0_6, %c0_7, %c0_8] : memref<3x384x128xbf16, #tpu.memory_space<vmem>>, vector<1x384x128xbf16>
    %9 = vector.shape_cast %8 : vector<1x384x128xbf16> to vector<384x128xbf16>
    %c0_9 = arith.constant 0 : index
    %c0_10 = arith.constant 0 : index
    %c0_11 = arith.constant 0 : index
    %10 = vector.load %arg6[%c0_9, %c0_10, %c0_11] : memref<3x1x128xf32, #tpu.memory_space<vmem>>, vector<1x1x128xf32>
    %11 = vector.shape_cast %10 : vector<1x1x128xf32> to vector<1x128xf32>
    %cst_12 = arith.constant 0.000000e+00 : f32
    %12 = vector.broadcast %cst_12 : f32 to vector<16x2x128xf32>
    %13 = tpu.concatenate %12, %7 in 1 : vector<16x2x128xf32>, vector<16x16x128xf32> -> vector<16x18x128xf32>
    %14 = vector.extract_strided_slice %13 {offsets = [0, 0, 0], sizes = [16, 16, 128], strides = [1, 1, 1]} : vector<16x18x128xf32> to vector<16x16x128xf32>
    %15 = vector.extract_strided_slice %13 {offsets = [0, 1, 0], sizes = [16, 16, 128], strides = [1, 1, 1]} : vector<16x18x128xf32> to vector<16x16x128xf32>
    %16 = vector.extract_strided_slice %13 {offsets = [0, 2, 0], sizes = [16, 16, 128], strides = [1, 1, 1]} : vector<16x18x128xf32> to vector<16x16x128xf32>
    %17 = tpu.concatenate %14, %15, %16 in 2 : vector<16x16x128xf32>, vector<16x16x128xf32>, vector<16x16x128xf32> -> vector<16x16x384xf32>
    %18 = vector.shape_cast %17 : vector<16x16x384xf32> to vector<256x384xf32>
    %19 = arith.truncf %18 : vector<256x384xf32> to vector<256x384xbf16>
    %cst_13 = arith.constant dense<0.000000e+00> : vector<256x128xf32>
    %20 = tpu.matmul %19, %9, %cst_13 {dimension_numbers = #tpu.dot_dimension_numbers<[1], [0], [0], [1], [0, 0, 1, 1], [], []>} : vector<256x384xbf16>, vector<384x128xbf16>, vector<256x128xf32> -> vector<256x128xf32>
    %21 = vector.broadcast %11 : vector<1x128xf32> to vector<256x128xf32>
    %22 = arith.addf %20, %21 : vector<256x128xf32>
    %23 = vector.shape_cast %22 : vector<256x128xf32> to vector<16x16x128xf32>
    %cst_14 = arith.constant 0.000000e+00 : f32
    %24 = vector.broadcast %cst_14 : f32 to vector<16x16x128xf32>
    %25 = arith.maximumf %23, %24 : vector<16x16x128xf32>
    %c0_15 = arith.constant 0 : index
    %c0_16 = arith.constant 0 : index
    %c0_17 = arith.constant 0 : index
    %26 = vector.load %arg7[%c0_15, %c0_16, %c0_17] : memref<3x384x128xbf16, #tpu.memory_space<vmem>>, vector<1x384x128xbf16>
    %27 = vector.shape_cast %26 : vector<1x384x128xbf16> to vector<384x128xbf16>
    %c0_18 = arith.constant 0 : index
    %c0_19 = arith.constant 0 : index
    %c0_20 = arith.constant 0 : index
    %28 = vector.load %arg8[%c0_18, %c0_19, %c0_20] : memref<3x1x128xf32, #tpu.memory_space<vmem>>, vector<1x1x128xf32>
    %29 = vector.shape_cast %28 : vector<1x1x128xf32> to vector<1x128xf32>
    %cst_21 = arith.constant 0.000000e+00 : f32
    %30 = vector.broadcast %cst_21 : f32 to vector<16x2x128xf32>
    %31 = tpu.concatenate %30, %25 in 1 : vector<16x2x128xf32>, vector<16x16x128xf32> -> vector<16x18x128xf32>
    %32 = vector.extract_strided_slice %31 {offsets = [0, 0, 0], sizes = [16, 16, 128], strides = [1, 1, 1]} : vector<16x18x128xf32> to vector<16x16x128xf32>
    %33 = vector.extract_strided_slice %31 {offsets = [0, 1, 0], sizes = [16, 16, 128], strides = [1, 1, 1]} : vector<16x18x128xf32> to vector<16x16x128xf32>
    %34 = vector.extract_strided_slice %31 {offsets = [0, 2, 0], sizes = [16, 16, 128], strides = [1, 1, 1]} : vector<16x18x128xf32> to vector<16x16x128xf32>
    %35 = tpu.concatenate %32, %33, %34 in 2 : vector<16x16x128xf32>, vector<16x16x128xf32>, vector<16x16x128xf32> -> vector<16x16x384xf32>
    %36 = vector.shape_cast %35 : vector<16x16x384xf32> to vector<256x384xf32>
    %37 = arith.truncf %36 : vector<256x384xf32> to vector<256x384xbf16>
    %cst_22 = arith.constant dense<0.000000e+00> : vector<256x128xf32>
    %38 = tpu.matmul %37, %27, %cst_22 {dimension_numbers = #tpu.dot_dimension_numbers<[1], [0], [0], [1], [0, 0, 1, 1], [], []>} : vector<256x384xbf16>, vector<384x128xbf16>, vector<256x128xf32> -> vector<256x128xf32>
    %39 = vector.broadcast %29 : vector<1x128xf32> to vector<256x128xf32>
    %40 = arith.addf %38, %39 : vector<256x128xf32>
    %41 = vector.shape_cast %40 : vector<256x128xf32> to vector<16x16x128xf32>
    %cst_23 = arith.constant 0.000000e+00 : f32
    %42 = vector.broadcast %cst_23 : f32 to vector<16x16x128xf32>
    %43 = arith.maximumf %41, %42 : vector<16x16x128xf32>
    %44 = arith.addf %43, %7 : vector<16x16x128xf32>
    %c1 = arith.constant 1 : index
    %c0_24 = arith.constant 0 : index
    %c0_25 = arith.constant 0 : index
    %45 = vector.load %arg5[%c1, %c0_24, %c0_25] : memref<3x384x128xbf16, #tpu.memory_space<vmem>>, vector<1x384x128xbf16>
    %46 = vector.shape_cast %45 : vector<1x384x128xbf16> to vector<384x128xbf16>
    %c1_26 = arith.constant 1 : index
    %c0_27 = arith.constant 0 : index
    %c0_28 = arith.constant 0 : index
    %47 = vector.load %arg6[%c1_26, %c0_27, %c0_28] : memref<3x1x128xf32, #tpu.memory_space<vmem>>, vector<1x1x128xf32>
    %48 = vector.shape_cast %47 : vector<1x1x128xf32> to vector<1x128xf32>
    %cst_29 = arith.constant 0.000000e+00 : f32
    %49 = vector.broadcast %cst_29 : f32 to vector<16x4x128xf32>
    %50 = tpu.concatenate %49, %44 in 1 : vector<16x4x128xf32>, vector<16x16x128xf32> -> vector<16x20x128xf32>
    %51 = vector.extract_strided_slice %50 {offsets = [0, 0, 0], sizes = [16, 16, 128], strides = [1, 1, 1]} : vector<16x20x128xf32> to vector<16x16x128xf32>
    %52 = vector.extract_strided_slice %50 {offsets = [0, 2, 0], sizes = [16, 16, 128], strides = [1, 1, 1]} : vector<16x20x128xf32> to vector<16x16x128xf32>
    %53 = vector.extract_strided_slice %50 {offsets = [0, 4, 0], sizes = [16, 16, 128], strides = [1, 1, 1]} : vector<16x20x128xf32> to vector<16x16x128xf32>
    %54 = tpu.concatenate %51, %52, %53 in 2 : vector<16x16x128xf32>, vector<16x16x128xf32>, vector<16x16x128xf32> -> vector<16x16x384xf32>
    %55 = vector.shape_cast %54 : vector<16x16x384xf32> to vector<256x384xf32>
    %56 = arith.truncf %55 : vector<256x384xf32> to vector<256x384xbf16>
    %cst_30 = arith.constant dense<0.000000e+00> : vector<256x128xf32>
    %57 = tpu.matmul %56, %46, %cst_30 {dimension_numbers = #tpu.dot_dimension_numbers<[1], [0], [0], [1], [0, 0, 1, 1], [], []>} : vector<256x384xbf16>, vector<384x128xbf16>, vector<256x128xf32> -> vector<256x128xf32>
    %58 = vector.broadcast %48 : vector<1x128xf32> to vector<256x128xf32>
    %59 = arith.addf %57, %58 : vector<256x128xf32>
    %60 = vector.shape_cast %59 : vector<256x128xf32> to vector<16x16x128xf32>
    %cst_31 = arith.constant 0.000000e+00 : f32
    %61 = vector.broadcast %cst_31 : f32 to vector<16x16x128xf32>
    %62 = arith.maximumf %60, %61 : vector<16x16x128xf32>
    %c1_32 = arith.constant 1 : index
    %c0_33 = arith.constant 0 : index
    %c0_34 = arith.constant 0 : index
    %63 = vector.load %arg7[%c1_32, %c0_33, %c0_34] : memref<3x384x128xbf16, #tpu.memory_space<vmem>>, vector<1x384x128xbf16>
    %64 = vector.shape_cast %63 : vector<1x384x128xbf16> to vector<384x128xbf16>
    %c1_35 = arith.constant 1 : index
    %c0_36 = arith.constant 0 : index
    %c0_37 = arith.constant 0 : index
    %65 = vector.load %arg8[%c1_35, %c0_36, %c0_37] : memref<3x1x128xf32, #tpu.memory_space<vmem>>, vector<1x1x128xf32>
    %66 = vector.shape_cast %65 : vector<1x1x128xf32> to vector<1x128xf32>
    %cst_38 = arith.constant 0.000000e+00 : f32
    %67 = vector.broadcast %cst_38 : f32 to vector<16x4x128xf32>
    %68 = tpu.concatenate %67, %62 in 1 : vector<16x4x128xf32>, vector<16x16x128xf32> -> vector<16x20x128xf32>
    %69 = vector.extract_strided_slice %68 {offsets = [0, 0, 0], sizes = [16, 16, 128], strides = [1, 1, 1]} : vector<16x20x128xf32> to vector<16x16x128xf32>
    %70 = vector.extract_strided_slice %68 {offsets = [0, 2, 0], sizes = [16, 16, 128], strides = [1, 1, 1]} : vector<16x20x128xf32> to vector<16x16x128xf32>
    %71 = vector.extract_strided_slice %68 {offsets = [0, 4, 0], sizes = [16, 16, 128], strides = [1, 1, 1]} : vector<16x20x128xf32> to vector<16x16x128xf32>
    %72 = tpu.concatenate %69, %70, %71 in 2 : vector<16x16x128xf32>, vector<16x16x128xf32>, vector<16x16x128xf32> -> vector<16x16x384xf32>
    %73 = vector.shape_cast %72 : vector<16x16x384xf32> to vector<256x384xf32>
    %74 = arith.truncf %73 : vector<256x384xf32> to vector<256x384xbf16>
    %cst_39 = arith.constant dense<0.000000e+00> : vector<256x128xf32>
    %75 = tpu.matmul %74, %64, %cst_39 {dimension_numbers = #tpu.dot_dimension_numbers<[1], [0], [0], [1], [0, 0, 1, 1], [], []>} : vector<256x384xbf16>, vector<384x128xbf16>, vector<256x128xf32> -> vector<256x128xf32>
    %76 = vector.broadcast %66 : vector<1x128xf32> to vector<256x128xf32>
    %77 = arith.addf %75, %76 : vector<256x128xf32>
    %78 = vector.shape_cast %77 : vector<256x128xf32> to vector<16x16x128xf32>
    %cst_40 = arith.constant 0.000000e+00 : f32
    %79 = vector.broadcast %cst_40 : f32 to vector<16x16x128xf32>
    %80 = arith.maximumf %78, %79 : vector<16x16x128xf32>
    %81 = arith.addf %80, %44 : vector<16x16x128xf32>
    %c2 = arith.constant 2 : index
    %c0_41 = arith.constant 0 : index
    %c0_42 = arith.constant 0 : index
    %82 = vector.load %arg5[%c2, %c0_41, %c0_42] : memref<3x384x128xbf16, #tpu.memory_space<vmem>>, vector<1x384x128xbf16>
    %83 = vector.shape_cast %82 : vector<1x384x128xbf16> to vector<384x128xbf16>
    %c2_43 = arith.constant 2 : index
    %c0_44 = arith.constant 0 : index
    %c0_45 = arith.constant 0 : index
    %84 = vector.load %arg6[%c2_43, %c0_44, %c0_45] : memref<3x1x128xf32, #tpu.memory_space<vmem>>, vector<1x1x128xf32>
    %85 = vector.shape_cast %84 : vector<1x1x128xf32> to vector<1x128xf32>
    %cst_46 = arith.constant 0.000000e+00 : f32
    %86 = vector.broadcast %cst_46 : f32 to vector<16x8x128xf32>
    %87 = tpu.concatenate %86, %81 in 1 : vector<16x8x128xf32>, vector<16x16x128xf32> -> vector<16x24x128xf32>
    %88 = vector.extract_strided_slice %87 {offsets = [0, 0, 0], sizes = [16, 16, 128], strides = [1, 1, 1]} : vector<16x24x128xf32> to vector<16x16x128xf32>
    %89 = vector.extract_strided_slice %87 {offsets = [0, 4, 0], sizes = [16, 16, 128], strides = [1, 1, 1]} : vector<16x24x128xf32> to vector<16x16x128xf32>
    %90 = vector.extract_strided_slice %87 {offsets = [0, 8, 0], sizes = [16, 16, 128], strides = [1, 1, 1]} : vector<16x24x128xf32> to vector<16x16x128xf32>
    %91 = tpu.concatenate %88, %89, %90 in 2 : vector<16x16x128xf32>, vector<16x16x128xf32>, vector<16x16x128xf32> -> vector<16x16x384xf32>
    %92 = vector.shape_cast %91 : vector<16x16x384xf32> to vector<256x384xf32>
    %93 = arith.truncf %92 : vector<256x384xf32> to vector<256x384xbf16>
    %cst_47 = arith.constant dense<0.000000e+00> : vector<256x128xf32>
    %94 = tpu.matmul %93, %83, %cst_47 {dimension_numbers = #tpu.dot_dimension_numbers<[1], [0], [0], [1], [0, 0, 1, 1], [], []>} : vector<256x384xbf16>, vector<384x128xbf16>, vector<256x128xf32> -> vector<256x128xf32>
    %95 = vector.broadcast %85 : vector<1x128xf32> to vector<256x128xf32>
    %96 = arith.addf %94, %95 : vector<256x128xf32>
    %97 = vector.shape_cast %96 : vector<256x128xf32> to vector<16x16x128xf32>
    %cst_48 = arith.constant 0.000000e+00 : f32
    %98 = vector.broadcast %cst_48 : f32 to vector<16x16x128xf32>
    %99 = arith.maximumf %97, %98 : vector<16x16x128xf32>
    %c2_49 = arith.constant 2 : index
    %c0_50 = arith.constant 0 : index
    %c0_51 = arith.constant 0 : index
    %100 = vector.load %arg7[%c2_49, %c0_50, %c0_51] : memref<3x384x128xbf16, #tpu.memory_space<vmem>>, vector<1x384x128xbf16>
    %101 = vector.shape_cast %100 : vector<1x384x128xbf16> to vector<384x128xbf16>
    %c2_52 = arith.constant 2 : index
    %c0_53 = arith.constant 0 : index
    %c0_54 = arith.constant 0 : index
    %102 = vector.load %arg8[%c2_52, %c0_53, %c0_54] : memref<3x1x128xf32, #tpu.memory_space<vmem>>, vector<1x1x128xf32>
    %103 = vector.shape_cast %102 : vector<1x1x128xf32> to vector<1x128xf32>
    %cst_55 = arith.constant 0.000000e+00 : f32
    %104 = vector.broadcast %cst_55 : f32 to vector<16x8x128xf32>
    %105 = tpu.concatenate %104, %99 in 1 : vector<16x8x128xf32>, vector<16x16x128xf32> -> vector<16x24x128xf32>
    %106 = vector.extract_strided_slice %105 {offsets = [0, 0, 0], sizes = [16, 16, 128], strides = [1, 1, 1]} : vector<16x24x128xf32> to vector<16x16x128xf32>
    %107 = vector.extract_strided_slice %105 {offsets = [0, 4, 0], sizes = [16, 16, 128], strides = [1, 1, 1]} : vector<16x24x128xf32> to vector<16x16x128xf32>
    %108 = vector.extract_strided_slice %105 {offsets = [0, 8, 0], sizes = [16, 16, 128], strides = [1, 1, 1]} : vector<16x24x128xf32> to vector<16x16x128xf32>
    %109 = tpu.concatenate %106, %107, %108 in 2 : vector<16x16x128xf32>, vector<16x16x128xf32>, vector<16x16x128xf32> -> vector<16x16x384xf32>
    %110 = vector.shape_cast %109 : vector<16x16x384xf32> to vector<256x384xf32>
    %111 = arith.truncf %110 : vector<256x384xf32> to vector<256x384xbf16>
    %cst_56 = arith.constant dense<0.000000e+00> : vector<256x128xf32>
    %112 = tpu.matmul %111, %101, %cst_56 {dimension_numbers = #tpu.dot_dimension_numbers<[1], [0], [0], [1], [0, 0, 1, 1], [], []>} : vector<256x384xbf16>, vector<384x128xbf16>, vector<256x128xf32> -> vector<256x128xf32>
    %113 = vector.broadcast %103 : vector<1x128xf32> to vector<256x128xf32>
    %114 = arith.addf %112, %113 : vector<256x128xf32>
    %115 = vector.shape_cast %114 : vector<256x128xf32> to vector<16x16x128xf32>
    %cst_57 = arith.constant 0.000000e+00 : f32
    %116 = vector.broadcast %cst_57 : f32 to vector<16x16x128xf32>
    %117 = arith.maximumf %115, %116 : vector<16x16x128xf32>
    %118 = arith.addf %117, %81 : vector<16x16x128xf32>
    %c0_58 = arith.constant 0 : index
    %c0_59 = arith.constant 0 : index
    %119 = vector.load %arg2[%c0_58, %c0_59] : memref<16x128xi32, #tpu.memory_space<vmem>>, vector<16x128xi32>
    %120 = tpu.iota {dimensions = array<i32: 1>} : vector<16x16x128xi32>
    %121 = vector.shape_cast %119 : vector<16x128xi32> to vector<16x1x128xi32>
    %122 = vector.broadcast %121 : vector<16x1x128xi32> to vector<16x16x128xi32>
    %123 = arith.cmpi slt, %120, %122 : vector<16x16x128xi32>
    %cst_60 = arith.constant 0.000000e+00 : f32
    %124 = vector.broadcast %cst_60 : f32 to vector<16x16x128xf32>
    %125 = arith.select %123, %118, %124 : vector<16x16x128xi1>, vector<16x16x128xf32>
    %cst_61 = arith.constant dense<0.000000e+00> : vector<16x128xf32>
    %126 = vector.multi_reduction <add>, %125, %cst_61 [1] : vector<16x16x128xf32> to vector<16x128xf32>
    %c1_i32 = arith.constant 1 : i32
    %127 = vector.broadcast %c1_i32 : i32 to vector<16x128xi32>
    %128 = arith.maxsi %119, %127 : vector<16x128xi32>
    %129 = arith.sitofp %128 : vector<16x128xi32> to vector<16x128xf32>
    %130 = arith.divf %126, %129 : vector<16x128xf32>
    %c0_62 = arith.constant 0 : index
    %c0_63 = arith.constant 0 : index
    %131 = vector.load %arg9[%c0_62, %c0_63] : memref<1x128xf32, #tpu.memory_space<vmem>>, vector<1x128xf32>
    %132 = vector.broadcast %131 : vector<1x128xf32> to vector<16x128xf32>
    %133 = arith.mulf %130, %132 : vector<16x128xf32>
    %c0_64 = arith.constant 0 : index
    %c0_65 = arith.constant 0 : index
    %134 = vector.load %arg10[%c0_64, %c0_65] : memref<16x128xf32, #tpu.memory_space<vmem>>, vector<16x128xf32>
    tpu.vector_store %arg10[%c0_64, %c0_65], %133 {strides = array<i32>} : memref<16x128xf32, #tpu.memory_space<vmem>>, vector<16x128xf32>,
    return
  }
  func.func @transform_0(%arg0: i32) -> (i32, i32, i32) {
    %c0_i32 = arith.constant 0 : i32
    %c0_i32_0 = arith.constant 0 : i32
    %c0_i32_1 = arith.constant 0 : i32
    return %arg0, %c0_i32, %c0_i32_0 : i32, i32, i32
  }
  func.func @transform_1(%arg0: i32) -> (i32, i32) {
    %c0_i32 = arith.constant 0 : i32
    %c0_i32_0 = arith.constant 0 : i32
    return %arg0, %c0_i32 : i32, i32
  }
  func.func @transform_2(%arg0: i32) -> (i32, i32) {
    %c0_i32 = arith.constant 0 : i32
    %c0_i32_0 = arith.constant 0 : i32
    %c0_i32_1 = arith.constant 0 : i32
    return %c0_i32, %c0_i32_0 : i32, i32
  }
  func.func @transform_3(%arg0: i32) -> (i32, i32) {
    %c0_i32 = arith.constant 0 : i32
    %c0_i32_0 = arith.constant 0 : i32
    %c0_i32_1 = arith.constant 0 : i32
    return %c0_i32, %c0_i32_0 : i32, i32
  }
  func.func @transform_4(%arg0: i32) -> (i32, i32, i32) {
    %c0_i32 = arith.constant 0 : i32
    %c0_i32_0 = arith.constant 0 : i32
    %c0_i32_1 = arith.constant 0 : i32
    %c0_i32_2 = arith.constant 0 : i32
    return %c0_i32, %c0_i32_0, %c0_i32_1 : i32, i32, i32
  }
  func.func @transform_5(%arg0: i32) -> (i32, i32, i32) {
    %c0_i32 = arith.constant 0 : i32
    %c0_i32_0 = arith.constant 0 : i32
    %c0_i32_1 = arith.constant 0 : i32
    %c0_i32_2 = arith.constant 0 : i32
    return %c0_i32, %c0_i32_0, %c0_i32_1 : i32, i32, i32
  }
  func.func @transform_6(%arg0: i32) -> (i32, i32, i32) {
    %c0_i32 = arith.constant 0 : i32
    %c0_i32_0 = arith.constant 0 : i32
    %c0_i32_1 = arith.constant 0 : i32
    %c0_i32_2 = arith.constant 0 : i32
    return %c0_i32, %c0_i32_0, %c0_i32_1 : i32, i32, i32
  }
  func.func @transform_7(%arg0: i32) -> (i32, i32, i32) {
    %c0_i32 = arith.constant 0 : i32
    %c0_i32_0 = arith.constant 0 : i32
    %c0_i32_1 = arith.constant 0 : i32
    %c0_i32_2 = arith.constant 0 : i32
    return %c0_i32, %c0_i32_0, %c0_i32_1 : i32, i32, i32
  }
  func.func @transform_8(%arg0: i32) -> (i32, i32) {
    %c0_i32 = arith.constant 0 : i32
    %c0_i32_0 = arith.constant 0 : i32
    %c0_i32_1 = arith.constant 0 : i32
    return %c0_i32, %c0_i32_0 : i32, i32
  }
  func.func @transform_9(%arg0: i32) -> (i32, i32) {
    %c0_i32 = arith.constant 0 : i32
    %c0_i32_0 = arith.constant 0 : i32
    return %arg0, %c0_i32 : i32, i32
  }
}

</mosaic_0001>

<llo_original>
// kernel: tpu_custom_call.1
$region0: #{tpu_custom_call.1}
  #allocation0 [shape = 'u32[]', space=smem, size = 0x4, offset = 0x4, fixed_abs, tag = 'smem constant byte address 0x4 - core index']
  #allocation1 [shape = 'u32[72,128]{1,0:T(1,128)}', space=vmem, size = 0x9000, scoped, tag = 'internal scratch']
  %s0 = inlined_call_operand.vmem [shape: f32[32,16,22], index: 0, kind: input, shape index: {}]
  %s1 = inlined_call_operand.vmem [shape: s32[32,128], index: 1, kind: input, shape index: {}]
  %s2 = inlined_call_operand.vmem [shape: f32[22,128], index: 2, kind: input, shape index: {}]
  %s3 = inlined_call_operand.vmem [shape: f32[1,128], index: 3, kind: input, shape index: {}]
  %s4 = inlined_call_operand.vmem [shape: bf16[3,384,128], index: 4, kind: input, shape index: {}]
  %s5 = inlined_call_operand.vmem [shape: f32[3,1,128], index: 5, kind: input, shape index: {}]
  %s6 = inlined_call_operand.hbm [shape: bf16[3,384,128], index: 6, kind: input, shape index: {}]
  %s7 = inlined_call_operand.vmem [shape: f32[3,1,128], index: 7, kind: input, shape index: {}]
  %s8 = inlined_call_operand.vmem [shape: f32[1,128], index: 8, kind: input, shape index: {}]
  %s9 = inlined_call_operand.hbm [shape: f32[32,128], index: 9, kind: output, shape index: {}]
  %s10 = sld [smem:[#allocation0]]
  $region73: #{tpu_custom_call.1} parent=0
    _
  %s12 = ssub.s32 1, %s10
  %s13 = scalar_select 0, %s12, %s10
  $region1: #{tpu_custom_call.1} parent=0
    #allocation2 [shape = 'u8[294912]{0}', space=vmem, size = 0x48000, scoped, tag = 'input window, operand 6, single buffered']
    #allocation3 [shape = 's32[2]{0}', space=sflag, size = 0x8, scoped, tag = 'scoped memory for tpu_custom_call.1']
    #allocation4 [shape = 's32[2]{0}', space=sflag, size = 0x8, scoped, tag = 'scoped memory for tpu_custom_call.1']
    #allocation5 [shape = 'u8[16384]{0}', space=vmem, size = 0x4000, scoped, tag = 'output window, operand 0']
    %14 = vsyncpa [#allocation3], 0
    %15 = vsyncpa [#allocation4], 0
    %s16 = scalar_lea.sflag [#allocation4], 1
    %17 = vsyncpa %s16, 0
    loop: start=0, step=1, limit=4
    $region2: #{tpu_custom_call.1} parent=1 // loop_pre_header
      _
    $region3: #{tpu_custom_call.1} parent=1 // loop_header
      %s19 = sphi 0, %s23
      %p20 = scmp.ge.s32.totalorder %s19, 4
      %s29 = sphi 0, %s31
      %s32 = sphi 0, %s29
      %s33 = sphi 0, %s32
      %s49 = sphi 0, %s33
      %s55 = sphi 0, %s57
      %s58 = sphi 0, %s55
      %s59 = sphi 0, %s58
      %s75 = sphi 0, %s59
      %s79 = sphi 0, %s79
      %s81 = sphi 0, %s79
      %s82 = sphi 0, %s81
      %s96 = sphi 0, %s82
      %s100 = sphi 0, %s100
      %s102 = sphi 0, %s100
      %s103 = sphi 0, %s102
      %s117 = sphi 0, %s103
      %s121 = sphi 0, %s121
      %s123 = sphi 0, %s121
      %s124 = sphi 0, %s123
      %s138 = sphi 0, %s124
      %s142 = sphi 0, %s142
      %s144 = sphi 0, %s142
      %s145 = sphi 0, %s144
      %s159 = sphi 0, %s145
      %s163 = sphi 0, %s163
      %s165 = sphi 0, %s163
      %s166 = sphi 0, %s165
      %s180 = sphi 0, %s166
      %s184 = sphi 0, %s184
      %s186 = sphi 0, %s184
      %s187 = sphi 0, %s186
      %s201 = sphi 0, %s187
      %s205 = sphi 0, %s205
      %s207 = sphi 0, %s205
      %s208 = sphi 0, %s207
      %s222 = sphi 0, %s208
      %s228 = sphi 0, %s230
      %s231 = sphi 0, %s228
      %s232 = sphi 0, %s231
      %s248 = sphi 0, %s232
    $region4: #{tpu_custom_call.1} parent=1 // loop_header_branch
      %22 = sbr.rel (%p20) target = $region8
    $region5: #{tpu_custom_call.1} parent=1 // loop_body
      %s24 = ssub.s32 %s19, 1
      %s25 = ssub.s32 %s19, 2
      %s26 = sadd.s32 %s19, 1
      %s27 = ssub.s32 %s19, %s26
      %p28 = scmp.eq.s32.totalorder %s27, 0
      %s30 = sadd.s32 %s29, 1
      %s31 = scalar_select %p28, %s29, %s30
      %p34 = pneg %p28
      %p35 = scmp.eq.s32.totalorder %s19, 1
      %p36 = por %p34, %p35
      %p37 = scmp.ne.s32.totalorder %s29, %s32
      %p38 = scmp.eq.s32.totalorder %s19, 0
      %p39 = por %p37, %p38
      %p40 = scmp.ne.s32.totalorder %s29, %s32
      %p41 = scmp.eq.s32.totalorder %s24, 1
      %p42 = por %p40, %p41
      %p43 = scmp.ne.s32.totalorder %s32, %s33
      %p44 = scmp.eq.s32.totalorder %s24, 0
      %p45 = por %p43, %p44
      %p46 = scmp.ne.s32.totalorder %s32, %s33
      %p47 = scmp.eq.s32.totalorder %s25, 1
      %p48 = por %p46, %p47
      %p50 = scmp.ne.s32.totalorder %s33, %s49
      %p51 = scmp.eq.s32.totalorder %s25, 0
      %p52 = por %p50, %p51
      %s53 = ssub.s32 %s19, %s26
      %p54 = scmp.eq.s32.totalorder %s53, 0
      %s56 = sadd.s32 %s55, 1
      %s57 = scalar_select %p54, %s55, %s56
      %p60 = pneg %p54
      %p61 = scmp.eq.s32.totalorder %s19, 1
      %p62 = por %p60, %p61
      %p63 = scmp.ne.s32.totalorder %s55, %s58
      %p64 = scmp.eq.s32.totalorder %s19, 0
      %p65 = por %p63, %p64
      %p66 = scmp.ne.s32.totalorder %s55, %s58
      %p67 = scmp.eq.s32.totalorder %s24, 1
      %p68 = por %p66, %p67
      %p69 = scmp.ne.s32.totalorder %s58, %s59
      %p70 = scmp.eq.s32.totalorder %s24, 0
      %p71 = por %p69, %p70
      %p72 = scmp.ne.s32.totalorder %s58, %s59
      %p73 = scmp.eq.s32.totalorder %s25, 1
      %p74 = por %p72, %p73
      %p76 = scmp.ne.s32.totalorder %s59, %s75
      %p77 = scmp.eq.s32.totalorder %s25, 0
      %p78 = por %p76, %p77
      %s80 = sadd.s32 %s79, 1
      %p83 = scmp.eq.s32.totalorder %s19, 1
      %p84 = scmp.ne.s32.totalorder %s79, %s81
      %p85 = scmp.eq.s32.totalorder %s19, 0
      %p86 = por %p84, %p85
      %p87 = scmp.ne.s32.totalorder %s79, %s81
      %p88 = scmp.eq.s32.totalorder %s24, 1
      %p89 = por %p87, %p88
      %p90 = scmp.ne.s32.totalorder %s81, %s82
      %p91 = scmp.eq.s32.totalorder %s24, 0
      %p92 = por %p90, %p91
      %p93 = scmp.ne.s32.totalorder %s81, %s82
      %p94 = scmp.eq.s32.totalorder %s25, 1
      %p95 = por %p93, %p94
      %p97 = scmp.ne.s32.totalorder %s82, %s96
      %p98 = scmp.eq.s32.totalorder %s25, 0
      %p99 = por %p97, %p98
      %s101 = sadd.s32 %s100, 1
      %p104 = scmp.eq.s32.totalorder %s19, 1
      %p105 = scmp.ne.s32.totalorder %s100, %s102
      %p106 = scmp.eq.s32.totalorder %s19, 0
      %p107 = por %p105, %p106
      %p108 = scmp.ne.s32.totalorder %s100, %s102
      %p109 = scmp.eq.s32.totalorder %s24, 1
      %p110 = por %p108, %p109
      %p111 = scmp.ne.s32.totalorder %s102, %s103
      %p112 = scmp.eq.s32.totalorder %s24, 0
      %p113 = por %p111, %p112
      %p114 = scmp.ne.s32.totalorder %s102, %s103
      %p115 = scmp.eq.s32.totalorder %s25, 1
      %p116 = por %p114, %p115
      %p118 = scmp.ne.s32.totalorder %s103, %s117
      %p119 = scmp.eq.s32.totalorder %s25, 0
      %p120 = por %p118, %p119
      %s122 = sadd.s32 %s121, 1
      %p125 = scmp.eq.s32.totalorder %s19, 1
      %p126 = scmp.ne.s32.totalorder %s121, %s123
      %p127 = scmp.eq.s32.totalorder %s19, 0
      %p128 = por %p126, %p127
      %p129 = scmp.ne.s32.totalorder %s121, %s123
      %p130 = scmp.eq.s32.totalorder %s24, 1
      %p131 = por %p129, %p130
      %p132 = scmp.ne.s32.totalorder %s123, %s124
      %p133 = scmp.eq.s32.totalorder %s24, 0
      %p134 = por %p132, %p133
      %p135 = scmp.ne.s32.totalorder %s123, %s124
      %p136 = scmp.eq.s32.totalorder %s25, 1
      %p137 = por %p135, %p136
      %p139 = scmp.ne.s32.totalorder %s124, %s138
      %p140 = scmp.eq.s32.totalorder %s25, 0
      %p141 = por %p139, %p140
      %s143 = sadd.s32 %s142, 1
      %p146 = scmp.eq.s32.totalorder %s19, 1
      %p147 = scmp.ne.s32.totalorder %s142, %s144
      %p148 = scmp.eq.s32.totalorder %s19, 0
      %p149 = por %p147, %p148
      %p150 = scmp.ne.s32.totalorder %s142, %s144
      %p151 = scmp.eq.s32.totalorder %s24, 1
      %p152 = por %p150, %p151
      %p153 = scmp.ne.s32.totalorder %s144, %s145
      %p154 = scmp.eq.s32.totalorder %s24, 0
      %p155 = por %p153, %p154
      %p156 = scmp.ne.s32.totalorder %s144, %s145
      %p157 = scmp.eq.s32.totalorder %s25, 1
      %p158 = por %p156, %p157
      %p160 = scmp.ne.s32.totalorder %s145, %s159
      %p161 = scmp.eq.s32.totalorder %s25, 0
      %p162 = por %p160, %p161
      %s164 = sadd.s32 %s163, 1
      %p167 = scmp.eq.s32.totalorder %s19, 1
      %p168 = scmp.ne.s32.totalorder %s163, %s165
      %p169 = scmp.eq.s32.totalorder %s19, 0
      %p170 = por %p168, %p169
      %p171 = scmp.ne.s32.totalorder %s163, %s165
      %p172 = scmp.eq.s32.totalorder %s24, 1
      %p173 = por %p171, %p172
      %p174 = scmp.ne.s32.totalorder %s165, %s166
      %p175 = scmp.eq.s32.totalorder %s24, 0
      %p176 = por %p174, %p175
      %p177 = scmp.ne.s32.totalorder %s165, %s166
      %p178 = scmp.eq.s32.totalorder %s25, 1
      %p179 = por %p177, %p178
      %p181 = scmp.ne.s32.totalorder %s166, %s180
      %p182 = scmp.eq.s32.totalorder %s25, 0
      %p183 = por %p181, %p182
      %s185 = sadd.s32 %s184, 1
      %p188 = scmp.eq.s32.totalorder %s19, 1
      %p189 = scmp.ne.s32.totalorder %s184, %s186
      %p190 = scmp.eq.s32.totalorder %s19, 0
      %p191 = por %p189, %p190
      %p192 = scmp.ne.s32.totalorder %s184, %s186
      %p193 = scmp.eq.s32.totalorder %s24, 1
      %p194 = por %p192, %p193
      %p195 = scmp.ne.s32.totalorder %s186, %s187
      %p196 = scmp.eq.s32.totalorder %s24, 0
      %p197 = por %p195, %p196
      %p198 = scmp.ne.s32.totalorder %s186, %s187
      %p199 = scmp.eq.s32.totalorder %s25, 1
      %p200 = por %p198, %p199
      %p202 = scmp.ne.s32.totalorder %s187, %s201
      %p203 = scmp.eq.s32.totalorder %s25, 0
      %p204 = por %p202, %p203
      %s206 = sadd.s32 %s205, 1
      %p209 = scmp.eq.s32.totalorder %s19, 1
      %p210 = scmp.ne.s32.totalorder %s205, %s207
      %p211 = scmp.eq.s32.totalorder %s19, 0
      %p212 = por %p210, %p211
      %p213 = scmp.ne.s32.totalorder %s205, %s207
      %p214 = scmp.eq.s32.totalorder %s24, 1
      %p215 = por %p213, %p214
      %p216 = scmp.ne.s32.totalorder %s207, %s208
      %p217 = scmp.eq.s32.totalorder %s24, 0
      %p218 = por %p216, %p217
      %p219 = scmp.ne.s32.totalorder %s207, %s208
      %p220 = scmp.eq.s32.totalorder %s25, 1
      %p221 = por %p219, %p220
      %p223 = scmp.ne.s32.totalorder %s208, %s222
      %p224 = scmp.eq.s32.totalorder %s25, 0
      %p225 = por %p223, %p224
      %s226 = ssub.s32 %s19, %s26
      %p227 = scmp.eq.s32.totalorder %s226, 0
      %s229 = sadd.s32 %s228, 1
      %s230 = scalar_select %p227, %s228, %s229
      %p233 = pneg %p227
      %p234 = scmp.eq.s32.totalorder %s19, 1
      %p235 = por %p233, %p234
      %p236 = scmp.ne.s32.totalorder %s228, %s231
      %p237 = scmp.eq.s32.totalorder %s19, 0
      %p238 = por %p236, %p237
      %p239 = scmp.ne.s32.totalorder %s228, %s231
      %p240 = scmp.eq.s32.totalorder %s24, 1
      %p241 = por %p239, %p240
      %p242 = scmp.ne.s32.totalorder %s231, %s232
      %p243 = scmp.eq.s32.totalorder %s24, 0
      %p244 = por %p242, %p243
      %p245 = scmp.ne.s32.totalorder %s231, %s232
      %p246 = scmp.eq.s32.totalorder %s25, 1
      %p247 = por %p245, %p246
      %p249 = scmp.ne.s32.totalorder %s232, %s248
      %p250 = scmp.eq.s32.totalorder %s25, 0
      %p251 = por %p249, %p250
      %p252 = scmp.le.s32.totalorder 1, %s19
      %p253 = scmp.lt.s32.totalorder %s19, 3
      %p254 = pnand %p252, %p253
      %p255 = pneg %p254
      // Predicated region
      $region9: #{tpu_custom_call.1} parent=5 // pred_check
        _
      $region10: #{tpu_custom_call.1} parent=5 // pred_check_branch
        %257 = sbr.rel (%p254) target = $region12
      $region11: #{tpu_custom_call.1} parent=5 // pred_region
        %s258 = ssub.s32 %s19, 1
        // Predicated region
        $region13: #{tpu_custom_call.1} parent=11 // pred_check
          %p259 = pneg %p92
        $region14: #{tpu_custom_call.1} parent=11 // pred_check_branch
          %261 = sbr.rel (%p259) target = $region16
        $region15: #{tpu_custom_call.1} parent=11 // pred_region
          _
        $region16: #{tpu_custom_call.1} parent=11 // pred_fallthru
          _
        // Predicated region
        $region17: #{tpu_custom_call.1} parent=11 // pred_check
          %p262 = pneg %p113
        $region18: #{tpu_custom_call.1} parent=11 // pred_check_branch
          %264 = sbr.rel (%p262) target = $region20
        $region19: #{tpu_custom_call.1} parent=11 // pred_region
          _
        $region20: #{tpu_custom_call.1} parent=11 // pred_fallthru
          _
        // Predicated region
        $region21: #{tpu_custom_call.1} parent=11 // pred_check
          %p265 = pneg %p134
        $region22: #{tpu_custom_call.1} parent=11 // pred_check_branch
          %267 = sbr.rel (%p265) target = $region24
        $region23: #{tpu_custom_call.1} parent=11 // pred_region
          _
        $region24: #{tpu_custom_call.1} parent=11 // pred_fallthru
          _
        // Predicated region
        $region25: #{tpu_custom_call.1} parent=11 // pred_check
          %p268 = pneg %p155
        $region26: #{tpu_custom_call.1} parent=11 // pred_check_branch
          %270 = sbr.rel (%p268) target = $region28
        $region27: #{tpu_custom_call.1} parent=11 // pred_region
          _
        $region28: #{tpu_custom_call.1} parent=11 // pred_fallthru
          _
        // Predicated region
        $region29: #{tpu_custom_call.1} parent=11 // pred_check
          %p271 = pneg %p176
        $region30: #{tpu_custom_call.1} parent=11 // pred_check_branch
          %273 = sbr.rel (%p271) target = $region32
        $region31: #{tpu_custom_call.1} parent=11 // pred_region
          %275 = vsyncadd [#allocation3], 0
          %s276 = sshll.u32 %s6, 4
          %s277 = int_to_ptr.hbm [resolvable:$true] %s276
          %s278 = sshll.u32 [#allocation2], 4
          %s279 = int_to_ptr.vmem [resolvable:$true] %s278
          %284 = dma.hbm_to_vmem [thread:$0]  %s277, 9216, %s279, [#allocation3], 64, 64, 4
        $region32: #{tpu_custom_call.1} parent=11 // pred_fallthru
          _
        // Predicated region
        $region33: #{tpu_custom_call.1} parent=11 // pred_check
          %p285 = pneg %p197
        $region34: #{tpu_custom_call.1} parent=11 // pred_check_branch
          %287 = sbr.rel (%p285) target = $region36
        $region35: #{tpu_custom_call.1} parent=11 // pred_region
          _
        $region36: #{tpu_custom_call.1} parent=11 // pred_fallthru
          _
        // Predicated region
        $region37: #{tpu_custom_call.1} parent=11 // pred_check
          %p288 = pneg %p218
        $region38: #{tpu_custom_call.1} parent=11 // pred_check_branch
          %290 = sbr.rel (%p288) target = $region40
        $region39: #{tpu_custom_call.1} parent=11 // pred_region
          _
        $region40: #{tpu_custom_call.1} parent=11 // pred_fallthru
          _
      $region12: #{tpu_custom_call.1} parent=5 // pred_fallthru
        _
      %p291 = scmp.lt.s32.totalorder %s19, 2
      // Predicated region
      $region41: #{tpu_custom_call.1} parent=5 // pred_check
        %p292 = pneg %p291
      $region42: #{tpu_custom_call.1} parent=5 // pred_check_branch
        %294 = sbr.rel (%p292) target = $region44
      $region43: #{tpu_custom_call.1} parent=5 // pred_region
        // Predicated region
        $region45: #{tpu_custom_call.1} parent=43 // pred_check
          %p295 = pneg %p39
        $region46: #{tpu_custom_call.1} parent=43 // pred_check_branch
          %297 = sbr.rel (%p295) target = $region48
        $region47: #{tpu_custom_call.1} parent=43 // pred_region
          %s298 = smul.u32 16, %s19
          %p299 = scmp.lt.s32.totalorder %s298, 31
          %s300 = scalar_select %p299, %s298, 31
          %s301 = smul.addr %s300, 2
          %s302 = smul.addr %s301, 8
          %s303 = scalar_lea.vmem %s0, %s302
          %s304 = smul.u32 16, %s19
        $region48: #{tpu_custom_call.1} parent=43 // pred_fallthru
          _
        // Predicated region
        $region49: #{tpu_custom_call.1} parent=43 // pred_check
          %p305 = pneg %p65
        $region50: #{tpu_custom_call.1} parent=43 // pred_check_branch
          %307 = sbr.rel (%p305) target = $region52
        $region51: #{tpu_custom_call.1} parent=43 // pred_region
          %s308 = smul.u32 2, %s19
          %p309 = scmp.lt.s32.totalorder %s308, 3
          %s310 = scalar_select %p309, %s308, 3
          %s311 = smul.addr %s310, 8
          %s312 = scalar_lea.vmem %s1, %s311
          %s313 = smul.u32 2, %s19
        $region52: #{tpu_custom_call.1} parent=43 // pred_fallthru
          _
      $region44: #{tpu_custom_call.1} parent=5 // pred_fallthru
        _
      %p314 = scmp.le.s32.totalorder 1, %s19
      %p315 = scmp.lt.s32.totalorder %s19, 3
      %p316 = pnand %p314, %p315
      %p317 = pneg %p316
      // Predicated region
      $region53: #{tpu_custom_call.1} parent=5 // pred_check
        _
      $region54: #{tpu_custom_call.1} parent=5 // pred_check_branch
        %319 = sbr.rel (%p316) target = $region56
      $region55: #{tpu_custom_call.1} parent=5 // pred_region
        %s320 = ssub.s32 %s19, 1
        // Predicated region
        $region57: #{tpu_custom_call.1} parent=55 // pred_check
          %p321 = pneg %p176
        $region58: #{tpu_custom_call.1} parent=55 // pred_check_branch
          %323 = sbr.rel (%p321) target = $region60
        $region59: #{tpu_custom_call.1} parent=55 // pred_region
          %325 = dma.done [#allocation3], 9216
        $region60: #{tpu_custom_call.1} parent=55 // pred_fallthru
          _
        %s326 = smul.u32 16, %s24
        %p327 = scmp.lt.s32.totalorder %s326, 31
        %s328 = scalar_select %p327, %s326, 31
        %s329 = smul.addr %s328, 2
        %s330 = smul.addr %s329, 8
        %s331 = scalar_lea.vmem %s0, %s330
        %p332 = pneg %p45
        %p333 = pneg %p42
        %s334 = smul.u32 2, %s24
        %p335 = scmp.lt.s32.totalorder %s334, 3
        %s336 = scalar_select %p335, %s334, 3
        %s337 = smul.addr %s336, 8
        %s338 = scalar_lea.vmem %s1, %s337
        %p339 = pneg %p71
        %p340 = pneg %p68
        %p341 = pneg %p92
        %p342 = pneg %p89
        %p343 = pneg %p113
        %p344 = pneg %p110
        %p345 = pneg %p134
        %p346 = pneg %p131
        %p347 = pneg %p155
        %p348 = pneg %p152
        %p349 = pneg %p176
        %p350 = pneg %p173
        %p351 = pneg %p197
        %p352 = pneg %p194
        %p353 = pneg %p218
        %p354 = pneg %p215
        %p355 = pneg %p244
        %p356 = pneg %p241
        %s357 = sand.u32 %s231, 1
        %s358 = scalar_lea.sflag [#allocation4], %s357
        %s359 = sand.u32 %s231, 1
        %s360 = smul.addr %s359, 16
        %s361 = scalar_lea.vmem [#allocation5], %s360
        %s362 = smul.u32 16, %s24
        %p363 = scmp.lt.s32.totalorder %s362, 31
        %s364 = scalar_select %p363, %s362, 31
        %s365 = smul.addr %s364, 2
        %s366 = smul.addr %s365, 8
        %s367 = scalar_lea.vmem %s0, %s366
        %s368 = smul.u32 16, %s24
        %s369 = smul.u32 2, %s24
        %p370 = scmp.lt.s32.totalorder %s369, 3
        %s371 = scalar_select %p370, %s369, 3
        %s372 = smul.addr %s371, 8
        %s373 = scalar_lea.vmem %s1, %s372
        %s374 = smul.u32 2, %s24
        %s375 = smul.u32 2, %s24
        %v376 = vld [vmem:[%s367] sm:$0xff]
        %v377 = vld [vmem:[%s367 + $0x8] sm:$0xff]
        %v378 = vld [vmem:[%s367 + $0x10] sm:$0xff]
        %v379 = vld [vmem:[%s367 + $0x18] sm:$0xff]
        %v380 = vld [vmem:[%s367 + $0x20] sm:$0xff]
        %v381 = vld [vmem:[%s367 + $0x28] sm:$0xff]
        %v382 = vld [vmem:[%s367 + $0x30] sm:$0xff]
        %v383 = vld [vmem:[%s367 + $0x38] sm:$0xff]
        %v384 = vld [vmem:[%s367 + $0x40] sm:$0xff]
        %v385 = vld [vmem:[%s367 + $0x48] sm:$0xff]
        %v386 = vld [vmem:[%s367 + $0x50] sm:$0xff]
        %v387 = vld [vmem:[%s367 + $0x58] sm:$0xff]
        %v388 = vld [vmem:[%s367 + $0x60] sm:$0xff]
        %v389 = vld [vmem:[%s367 + $0x68] sm:$0xff]
        %v390 = vld [vmem:[%s367 + $0x70] sm:$0xff]
        %v391 = vld [vmem:[%s367 + $0x78] sm:$0xff]
        %v392 = vld [vmem:[%s367 + $0x80] sm:$0xff]
        %v393 = vld [vmem:[%s367 + $0x88] sm:$0xff]
        %v394 = vld [vmem:[%s367 + $0x90] sm:$0xff]
        %v395 = vld [vmem:[%s367 + $0x98] sm:$0xff]
        %v396 = vld [vmem:[%s367 + $0xa0] sm:$0xff]
        %v397 = vld [vmem:[%s367 + $0xa8] sm:$0xff]
        %v398 = vld [vmem:[%s367 + $0xb0] sm:$0xff]
        %v399 = vld [vmem:[%s367 + $0xb8] sm:$0xff]
        %v400 = vld [vmem:[%s367 + $0xc0] sm:$0xff]
        %v401 = vld [vmem:[%s367 + $0xc8] sm:$0xff]
        %v402 = vld [vmem:[%s367 + $0xd0] sm:$0xff]
        %v403 = vld [vmem:[%s367 + $0xd8] sm:$0xff]
        %v404 = vld [vmem:[%s367 + $0xe0] sm:$0xff]
        %v405 = vld [vmem:[%s367 + $0xe8] sm:$0xff]
        %v406 = vld [vmem:[%s367 + $0xf0] sm:$0xff]
        %v407 = vld [vmem:[%s367 + $0xf8] sm:$0xff]
        %v408 = vld [vmem:[%s2] sm:$0xff]
        %v409 = vld [vmem:[%s2 + $0x8] sm:$0xff]
        %v410 = vld [vmem:[%s2 + $0x10] sm:$0x3f]
        %v411 = vld [vmem:[%s3] sm:$0x1]
        %v413 = vperm.slane %v411, 0
        %vm415 = vcmask 179200
        %v417 = vsel %vm415, %v376, 0
        %v420 = vsel %vm415, %v377, 0
        %v423 = vsel %vm415, %v378, 0
        %v426 = vsel %vm415, %v379, 0
        %v429 = vsel %vm415, %v380, 0
        %v432 = vsel %vm415, %v381, 0
        %v435 = vsel %vm415, %v382, 0
        %v438 = vsel %vm415, %v383, 0
        %v441 = vsel %vm415, %v384, 0
        %v444 = vsel %vm415, %v385, 0
        %v447 = vsel %vm415, %v386, 0
        %v450 = vsel %vm415, %v387, 0
        %v453 = vsel %vm415, %v388, 0
        %v456 = vsel %vm415, %v389, 0
        %v459 = vsel %vm415, %v390, 0
        %v462 = vsel %vm415, %v391, 0
        %v465 = vsel %vm415, %v392, 0
        %v468 = vsel %vm415, %v393, 0
        %v471 = vsel %vm415, %v394, 0
        %v474 = vsel %vm415, %v395, 0
        %v477 = vsel %vm415, %v396, 0
        %v480 = vsel %vm415, %v397, 0
        %v483 = vsel %vm415, %v398, 0
        %v486 = vsel %vm415, %v399, 0
        %v489 = vsel %vm415, %v400, 0
        %v492 = vsel %vm415, %v401, 0
        %v495 = vsel %vm415, %v402, 0
        %v498 = vsel %vm415, %v403, 0
        %v501 = vsel %vm415, %v404, 0
        %v504 = vsel %vm415, %v405, 0
        %v507 = vsel %vm415, %v406, 0
        %v510 = vsel %vm415, %v407, 0
        %vm512 = vcmask 1045504
        %v514 = vsel %vm512, %v410, 0
        %516 = vmatpush.msra.mxu0 0.0
        %517 = vmatpush.msra.mxu0 0.0
        %518 = vmatpush.msra.mxu0 0.0
        %519 = vmatpush.msra.mxu0 0.0
        %520 = vmatpush.msra.mxu0 0.0
        %521 = vmatpush.msra.mxu0 0.0
        %522 = vmatpush.msra.mxu0 0.0
        %523 = vmatpush.msra.mxu0 0.0
        %524 = vmatpush.msra.mxu0 0.0
        %525 = vmatpush.msra.mxu0 0.0
        %526 = vmatpush.msra.mxu0 0.0
        %527 = vmatpush.msra.mxu0 0.0
        %528 = vmatpush.msra.mxu0 0.0
        %529 = vmatpush.msra.mxu0 %v514
        %530 = vmatpush.msra.mxu0 %v409
        %531 = vmatpush.msra.mxu0 %v408
        %532 = vmatmul.f32.gmra.mxu0 %v417
        %v533 = vpop.f32.mrf.mxu0
        %v534 = vadd.f32 %v413, %v533
        %535 = vmatmul.f32.gmra.mxu0 %v420
        %v536 = vpop.f32.mrf.mxu0
        %v537 = vadd.f32 %v413, %v536
        %538 = vmatmul.f32.gmra.mxu0 %v423
        %v539 = vpop.f32.mrf.mxu0
        %v540 = vadd.f32 %v413, %v539
        %541 = vmatmul.f32.gmra.mxu0 %v426
        %v542 = vpop.f32.mrf.mxu0
        %v543 = vadd.f32 %v413, %v542
        %544 = vmatmul.f32.gmra.mxu0 %v429
        %v545 = vpop.f32.mrf.mxu0
        %v546 = vadd.f32 %v413, %v545
        %547 = vmatmul.f32.gmra.mxu0 %v432
        %v548 = vpop.f32.mrf.mxu0
        %v549 = vadd.f32 %v413, %v548
        %550 = vmatmul.f32.gmra.mxu0 %v435
        %v551 = vpop.f32.mrf.mxu0
        %v552 = vadd.f32 %v413, %v551
        %553 = vmatmul.f32.gmra.mxu0 %v438
        %v554 = vpop.f32.mrf.mxu0
        %v555 = vadd.f32 %v413, %v554
        %556 = vmatmul.f32.gmra.mxu0 %v441
        %v557 = vpop.f32.mrf.mxu0
        %v558 = vadd.f32 %v413, %v557
        %559 = vmatmul.f32.gmra.mxu0 %v444
        %v560 = vpop.f32.mrf.mxu0
        %v561 = vadd.f32 %v413, %v560
        %562 = vmatmul.f32.gmra.mxu0 %v447
        %v563 = vpop.f32.mrf.mxu0
        %v564 = vadd.f32 %v413, %v563
        %565 = vmatmul.f32.gmra.mxu0 %v450
        %v566 = vpop.f32.mrf.mxu0
        %v567 = vadd.f32 %v413, %v566
        %568 = vmatmul.f32.gmra.mxu0 %v453
        %v569 = vpop.f32.mrf.mxu0
        %v570 = vadd.f32 %v413, %v569
        %571 = vmatmul.f32.gmra.mxu0 %v456
        %v572 = vpop.f32.mrf.mxu0
        %v573 = vadd.f32 %v413, %v572
        %574 = vmatmul.f32.gmra.mxu0 %v459
        %v575 = vpop.f32.mrf.mxu0
        %v576 = vadd.f32 %v413, %v575
        %577 = vmatmul.f32.gmra.mxu0 %v462
        %v578 = vpop.f32.mrf.mxu0
        %v579 = vadd.f32 %v413, %v578
        %580 = vmatmul.f32.gmra.mxu0 %v465
        %v581 = vpop.f32.mrf.mxu0
        %v582 = vadd.f32 %v413, %v581
        %583 = vmatmul.f32.gmra.mxu0 %v468
        %v584 = vpop.f32.mrf.mxu0
        %v585 = vadd.f32 %v413, %v584
        %586 = vmatmul.f32.gmra.mxu0 %v471
        %v587 = vpop.f32.mrf.mxu0
        %v588 = vadd.f32 %v413, %v587
        %589 = vmatmul.f32.gmra.mxu0 %v474
        %v590 = vpop.f32.mrf.mxu0
        %v591 = vadd.f32 %v413, %v590
        %592 = vmatmul.f32.gmra.mxu0 %v477
        %v593 = vpop.f32.mrf.mxu0
        %v594 = vadd.f32 %v413, %v593
        %595 = vmatmul.f32.gmra.mxu0 %v480
        %v596 = vpop.f32.mrf.mxu0
        %v597 = vadd.f32 %v413, %v596
        %598 = vmatmul.f32.gmra.mxu0 %v483
        %v599 = vpop.f32.mrf.mxu0
        %v600 = vadd.f32 %v413, %v599
        %601 = vmatmul.f32.gmra.mxu0 %v486
        %v602 = vpop.f32.mrf.mxu0
        %v603 = vadd.f32 %v413, %v602
        %604 = vmatmul.f32.gmra.mxu0 %v489
        %v605 = vpop.f32.mrf.mxu0
        %v606 = vadd.f32 %v413, %v605
        %607 = vmatmul.f32.gmra.mxu0 %v492
        %v608 = vpop.f32.mrf.mxu0
        %v609 = vadd.f32 %v413, %v608
        %610 = vmatmul.f32.gmra.mxu0 %v495
        %v611 = vpop.f32.mrf.mxu0
        %v612 = vadd.f32 %v413, %v611
        %613 = vmatmul.f32.gmra.mxu0 %v498
        %v614 = vpop.f32.mrf.mxu0
        %v615 = vadd.f32 %v413, %v614
        %616 = vmatmul.f32.gmra.mxu0 %v501
        %v617 = vpop.f32.mrf.mxu0
        %v618 = vadd.f32 %v413, %v617
        %619 = vmatmul.f32.gmra.mxu0 %v504
        %v620 = vpop.f32.mrf.mxu0
        %v621 = vadd.f32 %v413, %v620
        %622 = vmatmul.f32.gmra.mxu0 %v507
        %v623 = vpop.f32.mrf.mxu0
        %v624 = vadd.f32 %v413, %v623
        %625 = vmatmul.f32.gmra.mxu0 %v510
        %v626 = vpop.f32.mrf.mxu0
        %v627 = vadd.f32 %v413, %v626
        %628 = vdwg.mxu0
        %v629 = vld [vmem:[%s4] sm:$0xf]
        %v630 = vld [vmem:[%s4 + $0x4] sm:$0xf]
        %v631 = vld [vmem:[%s4 + $0x8] sm:$0xf]
        %v632 = vld [vmem:[%s4 + $0xc] sm:$0xf]
        %v633 = vld [vmem:[%s4 + $0x10] sm:$0xf]
        %v634 = vld [vmem:[%s4 + $0x14] sm:$0xf]
        %v635 = vld [vmem:[%s4 + $0x18] sm:$0xf]
        %v636 = vld [vmem:[%s4 + $0x1c] sm:$0xf]
        %v637 = vld [vmem:[%s4 + $0x20] sm:$0xf]
        %v638 = vld [vmem:[%s4 + $0x24] sm:$0xf]
        %v639 = vld [vmem:[%s4 + $0x28] sm:$0xf]
        %v640 = vld [vmem:[%s4 + $0x2c] sm:$0xf]
        %v641 = vld [vmem:[%s4 + $0x30] sm:$0xf]
        %v642 = vld [vmem:[%s4 + $0x34] sm:$0xf]
        %v643 = vld [vmem:[%s4 + $0x38] sm:$0xf]
        %v644 = vld [vmem:[%s4 + $0x3c] sm:$0xf]
        %v645 = vld [vmem:[%s4 + $0x40] sm:$0xf]
        %v646 = vld [vmem:[%s4 + $0x44] sm:$0xf]
        %v647 = vld [vmem:[%s4 + $0x48] sm:$0xf]
        %v648 = vld [vmem:[%s4 + $0x4c] sm:$0xf]
        %v649 = vld [vmem:[%s4 + $0x50] sm:$0xf]
        %v650 = vld [vmem:[%s4 + $0x54] sm:$0xf]
        %v651 = vld [vmem:[%s4 + $0x58] sm:$0xf]
        %v652 = vld [vmem:[%s4 + $0x5c] sm:$0xf]
        %v653 = vld [vmem:[%s4 + $0x60] sm:$0xf]
        %v654 = vld [vmem:[%s4 + $0x64] sm:$0xf]
        %v655 = vld [vmem:[%s4 + $0x68] sm:$0xf]
        %v656 = vld [vmem:[%s4 + $0x6c] sm:$0xf]
        %v657 = vld [vmem:[%s4 + $0x70] sm:$0xf]
        %v658 = vld [vmem:[%s4 + $0x74] sm:$0xf]
        %v659 = vld [vmem:[%s4 + $0x78] sm:$0xf]
        %v660 = vld [vmem:[%s4 + $0x7c] sm:$0xf]
        %v661 = vld [vmem:[%s4 + $0x80] sm:$0xf]
        %v662 = vld [vmem:[%s4 + $0x84] sm:$0xf]
        %v663 = vld [vmem:[%s4 + $0x88] sm:$0xf]
        %v664 = vld [vmem:[%s4 + $0x8c] sm:$0xf]
        %v665 = vld [vmem:[%s4 + $0x90] sm:$0xf]
        %v666 = vld [vmem:[%s4 + $0x94] sm:$0xf]
        %v667 = vld [vmem:[%s4 + $0x98] sm:$0xf]
        %v668 = vld [vmem:[%s4 + $0x9c] sm:$0xf]
        %v669 = vld [vmem:[%s4 + $0xa0] sm:$0xf]
        %v670 = vld [vmem:[%s4 + $0xa4] sm:$0xf]
        %v671 = vld [vmem:[%s4 + $0xa8] sm:$0xf]
        %v672 = vld [vmem:[%s4 + $0xac] sm:$0xf]
        %v673 = vld [vmem:[%s4 + $0xb0] sm:$0xf]
        %v674 = vld [vmem:[%s4 + $0xb4] sm:$0xf]
        %v675 = vld [vmem:[%s4 + $0xb8] sm:$0xf]
        %v676 = vld [vmem:[%s4 + $0xbc] sm:$0xf]
        %v677 = vld [vmem:[%s5] sm:$0x1]
        %vm710 = vcmask 1041408
        %v711 = vrot.slane %v534, 6
        %v712 = vrot.slane %v537, 6
        %v713 = vsel %vm710, %v711, %v712
        %v714 = vrot.slane %v540, 6
        %v715 = vrot.slane %v543, 6
        %v716 = vsel %vm710, %v714, %v715
        %v717 = vrot.slane %v546, 6
        %v718 = vrot.slane %v549, 6
        %v719 = vsel %vm710, %v717, %v718
        %v720 = vrot.slane %v552, 6
        %v721 = vrot.slane %v555, 6
        %v722 = vsel %vm710, %v720, %v721
        %v723 = vrot.slane %v558, 6
        %v724 = vrot.slane %v561, 6
        %v725 = vsel %vm710, %v723, %v724
        %v726 = vrot.slane %v564, 6
        %v727 = vrot.slane %v567, 6
        %v728 = vsel %vm710, %v726, %v727
        %v729 = vrot.slane %v570, 6
        %v730 = vrot.slane %v573, 6
        %v731 = vsel %vm710, %v729, %v730
        %v732 = vrot.slane %v576, 6
        %v733 = vrot.slane %v579, 6
        %v734 = vsel %vm710, %v732, %v733
        %v735 = vrot.slane %v582, 6
        %v736 = vrot.slane %v585, 6
        %v737 = vsel %vm710, %v735, %v736
        %v738 = vrot.slane %v588, 6
        %v739 = vrot.slane %v591, 6
        %v740 = vsel %vm710, %v738, %v739
        %v741 = vrot.slane %v594, 6
        %v742 = vrot.slane %v597, 6
        %v743 = vsel %vm710, %v741, %v742
        %v744 = vrot.slane %v600, 6
        %v745 = vrot.slane %v603, 6
        %v746 = vsel %vm710, %v744, %v745
        %v747 = vrot.slane %v606, 6
        %v748 = vrot.slane %v609, 6
        %v749 = vsel %vm710, %v747, %v748
        %v750 = vrot.slane %v612, 6
        %v751 = vrot.slane %v615, 6
        %v752 = vsel %vm710, %v750, %v751
        %v753 = vrot.slane %v618, 6
        %v754 = vrot.slane %v621, 6
        %v755 = vsel %vm710, %v753, %v754
        %v756 = vrot.slane %v624, 6
        %v757 = vrot.slane %v627, 6
        %v758 = vsel %vm710, %v756, %v757
        %v791 = vsel %vm710, 0.0, %v711
        %v792 = vsel %vm710, 0.0, %v714
        %v793 = vsel %vm710, 0.0, %v717
        %v794 = vsel %vm710, 0.0, %v720
        %v795 = vsel %vm710, 0.0, %v723
        %v796 = vsel %vm710, 0.0, %v726
        %v797 = vsel %vm710, 0.0, %v729
        %v798 = vsel %vm710, 0.0, %v732
        %v799 = vsel %vm710, 0.0, %v735
        %v800 = vsel %vm710, 0.0, %v738
        %v801 = vsel %vm710, 0.0, %v741
        %v802 = vsel %vm710, 0.0, %v744
        %v803 = vsel %vm710, 0.0, %v747
        %v804 = vsel %vm710, 0.0, %v750
        %v805 = vsel %vm710, 0.0, %v753
        %v806 = vsel %vm710, 0.0, %v756
        %vm823 = vcmask 1046528
        %v824 = vrot.slane %v791, 1
        %v825 = vrot.slane %v713, 1
        %v826 = vsel %vm823, %v824, %v825
        %v827 = vrot.slane %v712, 1
        %v828 = vsel %vm823, %v825, %v827
        %v829 = vrot.slane %v792, 1
        %v830 = vrot.slane %v716, 1
        %v831 = vsel %vm823, %v829, %v830
        %v832 = vrot.slane %v715, 1
        %v833 = vsel %vm823, %v830, %v832
        %v834 = vrot.slane %v793, 1
        %v835 = vrot.slane %v719, 1
        %v836 = vsel %vm823, %v834, %v835
        %v837 = vrot.slane %v718, 1
        %v838 = vsel %vm823, %v835, %v837
        %v839 = vrot.slane %v794, 1
        %v840 = vrot.slane %v722, 1
        %v841 = vsel %vm823, %v839, %v840
        %v842 = vrot.slane %v721, 1
        %v843 = vsel %vm823, %v840, %v842
        %v844 = vrot.slane %v795, 1
        %v845 = vrot.slane %v725, 1
        %v846 = vsel %vm823, %v844, %v845
        %v847 = vrot.slane %v724, 1
        %v848 = vsel %vm823, %v845, %v847
        %v849 = vrot.slane %v796, 1
        %v850 = vrot.slane %v728, 1
        %v851 = vsel %vm823, %v849, %v850
        %v852 = vrot.slane %v727, 1
        %v853 = vsel %vm823, %v850, %v852
        %v854 = vrot.slane %v797, 1
        %v855 = vrot.slane %v731, 1
        %v856 = vsel %vm823, %v854, %v855
        %v857 = vrot.slane %v730, 1
        %v858 = vsel %vm823, %v855, %v857
        %v859 = vrot.slane %v798, 1
        %v860 = vrot.slane %v734, 1
        %v861 = vsel %vm823, %v859, %v860
        %v862 = vrot.slane %v733, 1
        %v863 = vsel %vm823, %v860, %v862
        %v864 = vrot.slane %v799, 1
        %v865 = vrot.slane %v737, 1
        %v866 = vsel %vm823, %v864, %v865
        %v867 = vrot.slane %v736, 1
        %v868 = vsel %vm823, %v865, %v867
        %v869 = vrot.slane %v800, 1
        %v870 = vrot.slane %v740, 1
        %v871 = vsel %vm823, %v869, %v870
        %v872 = vrot.slane %v739, 1
        %v873 = vsel %vm823, %v870, %v872
        %v874 = vrot.slane %v801, 1
        %v875 = vrot.slane %v743, 1
        %v876 = vsel %vm823, %v874, %v875
        %v877 = vrot.slane %v742, 1
        %v878 = vsel %vm823, %v875, %v877
        %v879 = vrot.slane %v802, 1
        %v880 = vrot.slane %v746, 1
        %v881 = vsel %vm823, %v879, %v880
        %v882 = vrot.slane %v745, 1
        %v883 = vsel %vm823, %v880, %v882
        %v884 = vrot.slane %v803, 1
        %v885 = vrot.slane %v749, 1
        %v886 = vsel %vm823, %v884, %v885
        %v887 = vrot.slane %v748, 1
        %v888 = vsel %vm823, %v885, %v887
        %v889 = vrot.slane %v804, 1
        %v890 = vrot.slane %v752, 1
        %v891 = vsel %vm823, %v889, %v890
        %v892 = vrot.slane %v751, 1
        %v893 = vsel %vm823, %v890, %v892
        %v894 = vrot.slane %v805, 1
        %v895 = vrot.slane %v755, 1
        %v896 = vsel %vm823, %v894, %v895
        %v897 = vrot.slane %v754, 1
        %v898 = vsel %vm823, %v895, %v897
        %v899 = vrot.slane %v806, 1
        %v900 = vrot.slane %v758, 1
        %v901 = vsel %vm823, %v899, %v900
        %v902 = vrot.slane %v757, 1
        %v903 = vsel %vm823, %v900, %v902
        %v936 = vrot.slane %v791, 2
        %v937 = vrot.slane %v713, 2
        %v938 = vsel %vm512, %v936, %v937
        %v939 = vrot.slane %v712, 2
        %v940 = vsel %vm512, %v937, %v939
        %v941 = vrot.slane %v792, 2
        %v942 = vrot.slane %v716, 2
        %v943 = vsel %vm512, %v941, %v942
        %v944 = vrot.slane %v715, 2
        %v945 = vsel %vm512, %v942, %v944
        %v946 = vrot.slane %v793, 2
        %v947 = vrot.slane %v719, 2
        %v948 = vsel %vm512, %v946, %v947
        %v949 = vrot.slane %v718, 2
        %v950 = vsel %vm512, %v947, %v949
        %v951 = vrot.slane %v794, 2
        %v952 = vrot.slane %v722, 2
        %v953 = vsel %vm512, %v951, %v952
        %v954 = vrot.slane %v721, 2
        %v955 = vsel %vm512, %v952, %v954
        %v956 = vrot.slane %v795, 2
        %v957 = vrot.slane %v725, 2
        %v958 = vsel %vm512, %v956, %v957
        %v959 = vrot.slane %v724, 2
        %v960 = vsel %vm512, %v957, %v959
        %v961 = vrot.slane %v796, 2
        %v962 = vrot.slane %v728, 2
        %v963 = vsel %vm512, %v961, %v962
        %v964 = vrot.slane %v727, 2
        %v965 = vsel %vm512, %v962, %v964
        %v966 = vrot.slane %v797, 2
        %v967 = vrot.slane %v731, 2
        %v968 = vsel %vm512, %v966, %v967
        %v969 = vrot.slane %v730, 2
        %v970 = vsel %vm512, %v967, %v969
        %v971 = vrot.slane %v798, 2
        %v972 = vrot.slane %v734, 2
        %v973 = vsel %vm512, %v971, %v972
        %v974 = vrot.slane %v733, 2
        %v975 = vsel %vm512, %v972, %v974
        %v976 = vrot.slane %v799, 2
        %v977 = vrot.slane %v737, 2
        %v978 = vsel %vm512, %v976, %v977
        %v979 = vrot.slane %v736, 2
        %v980 = vsel %vm512, %v977, %v979
        %v981 = vrot.slane %v800, 2
        %v982 = vrot.slane %v740, 2
        %v983 = vsel %vm512, %v981, %v982
        %v984 = vrot.slane %v739, 2
        %v985 = vsel %vm512, %v982, %v984
        %v986 = vrot.slane %v801, 2
        %v987 = vrot.slane %v743, 2
        %v988 = vsel %vm512, %v986, %v987
        %v989 = vrot.slane %v742, 2
        %v990 = vsel %vm512, %v987, %v989
        %v991 = vrot.slane %v802, 2
        %v992 = vrot.slane %v746, 2
        %v993 = vsel %vm512, %v991, %v992
        %v994 = vrot.slane %v745, 2
        %v995 = vsel %vm512, %v992, %v994
        %v996 = vrot.slane %v803, 2
        %v997 = vrot.slane %v749, 2
        %v998 = vsel %vm512, %v996, %v997
        %v999 = vrot.slane %v748, 2
        %v1000 = vsel %vm512, %v997, %v999
        %v1001 = vrot.slane %v804, 2
        %v1002 = vrot.slane %v752, 2
        %v1003 = vsel %vm512, %v1001, %v1002
        %v1004 = vrot.slane %v751, 2
        %v1005 = vsel %vm512, %v1002, %v1004
        %v1006 = vrot.slane %v805, 2
        %v1007 = vrot.slane %v755, 2
        %v1008 = vsel %vm512, %v1006, %v1007
        %v1009 = vrot.slane %v754, 2
        %v1010 = vsel %vm512, %v1007, %v1009
        %v1011 = vrot.slane %v806, 2
        %v1012 = vrot.slane %v758, 2
        %v1013 = vsel %vm512, %v1011, %v1012
        %v1014 = vrot.slane %v757, 2
        %v1015 = vsel %vm512, %v1012, %v1014
        %v1048 = vpack.c.bf16 %v713, %v791
        %v1049 = vpack.c.bf16 %v828, %v826
        %v1050 = vpack.c.bf16 %v940, %v938
        %v1051 = vpack.c.bf16 %v716, %v792
        %v1052 = vpack.c.bf16 %v833, %v831
        %v1053 = vpack.c.bf16 %v945, %v943
        %v1054 = vpack.c.bf16 %v719, %v793
        %v1055 = vpack.c.bf16 %v838, %v836
        %v1056 = vpack.c.bf16 %v950, %v948
        %v1057 = vpack.c.bf16 %v722, %v794
        %v1058 = vpack.c.bf16 %v843, %v841
        %v1059 = vpack.c.bf16 %v955, %v953
        %v1060 = vpack.c.bf16 %v725, %v795
        %v1061 = vpack.c.bf16 %v848, %v846
        %v1062 = vpack.c.bf16 %v960, %v958
        %v1063 = vpack.c.bf16 %v728, %v796
        %v1064 = vpack.c.bf16 %v853, %v851
        %v1065 = vpack.c.bf16 %v965, %v963
        %v1066 = vpack.c.bf16 %v731, %v797
        %v1067 = vpack.c.bf16 %v858, %v856
        %v1068 = vpack.c.bf16 %v970, %v968
        %v1069 = vpack.c.bf16 %v734, %v798
        %v1070 = vpack.c.bf16 %v863, %v861
        %v1071 = vpack.c.bf16 %v975, %v973
        %v1072 = vpack.c.bf16 %v737, %v799
        %v1073 = vpack.c.bf16 %v868, %v866
        %v1074 = vpack.c.bf16 %v980, %v978
        %v1075 = vpack.c.bf16 %v740, %v800
        %v1076 = vpack.c.bf16 %v873, %v871
        %v1077 = vpack.c.bf16 %v985, %v983
        %v1078 = vpack.c.bf16 %v743, %v801
        %v1079 = vpack.c.bf16 %v878, %v876
        %v1080 = vpack.c.bf16 %v990, %v988
        %v1081 = vpack.c.bf16 %v746, %v802
        %v1082 = vpack.c.bf16 %v883, %v881
        %v1083 = vpack.c.bf16 %v995, %v993
        %v1084 = vpack.c.bf16 %v749, %v803
        %v1085 = vpack.c.bf16 %v888, %v886
        %v1086 = vpack.c.bf16 %v1000, %v998
        %v1087 = vpack.c.bf16 %v752, %v804
        %v1088 = vpack.c.bf16 %v893, %v891
        %v1089 = vpack.c.bf16 %v1005, %v1003
        %v1090 = vpack.c.bf16 %v755, %v805
        %v1091 = vpack.c.bf16 %v898, %v896
        %v1092 = vpack.c.bf16 %v1010, %v1008
        %v1093 = vpack.c.bf16 %v758, %v806
        %v1094 = vpack.c.bf16 %v903, %v901
        %v1095 = vpack.c.bf16 %v1015, %v1013
        %v1097 = vperm.slane %v677, 0
        %v1147 = vunpack.c.l.b16 %v629
        %v1148 = vunpack.c.l.b16 %v630
        %v1149 = vunpack.c.l.b16 %v631
        %v1150 = vunpack.c.l.b16 %v632
        %v1151 = vunpack.c.l.b16 %v633
        %v1152 = vunpack.c.l.b16 %v634
        %v1153 = vunpack.c.l.b16 %v635
        %v1154 = vunpack.c.l.b16 %v636
        %v1155 = vunpack.c.l.b16 %v637
        %v1156 = vunpack.c.l.b16 %v638
        %v1157 = vunpack.c.l.b16 %v639
        %v1158 = vunpack.c.l.b16 %v640
        %v1159 = vunpack.c.l.b16 %v641
        %v1160 = vunpack.c.l.b16 %v642
        %v1161 = vunpack.c.l.b16 %v643
        %v1162 = vunpack.c.l.b16 %v644
        %v1163 = vunpack.c.l.b16 %v645
        %v1164 = vunpack.c.l.b16 %v646
        %v1165 = vunpack.c.l.b16 %v647
        %v1166 = vunpack.c.l.b16 %v648
        %v1167 = vunpack.c.l.b16 %v649
        %v1168 = vunpack.c.l.b16 %v650
        %v1169 = vunpack.c.l.b16 %v651
        %v1170 = vunpack.c.l.b16 %v652
        %v1171 = vunpack.c.l.b16 %v653
        %v1172 = vunpack.c.l.b16 %v654
        %v1173 = vunpack.c.l.b16 %v655
        %v1174 = vunpack.c.l.b16 %v656
        %v1175 = vunpack.c.l.b16 %v657
        %v1176 = vunpack.c.l.b16 %v658
        %v1177 = vunpack.c.l.b16 %v659
        %v1178 = vunpack.c.l.b16 %v660
        %v1179 = vunpack.c.l.b16 %v661
        %v1180 = vunpack.c.l.b16 %v662
        %v1181 = vunpack.c.l.b16 %v663
        %v1182 = vunpack.c.l.b16 %v664
        %v1183 = vunpack.c.l.b16 %v665
        %v1184 = vunpack.c.l.b16 %v666
        %v1185 = vunpack.c.l.b16 %v667
        %v1186 = vunpack.c.l.b16 %v668
        %v1187 = vunpack.c.l.b16 %v669
        %v1188 = vunpack.c.l.b16 %v670
        %v1189 = vunpack.c.l.b16 %v671
        %v1190 = vunpack.c.l.b16 %v672
        %v1191 = vunpack.c.l.b16 %v673
        %v1192 = vunpack.c.l.b16 %v674
        %v1193 = vunpack.c.l.b16 %v675
        %v1194 = vunpack.c.l.b16 %v676
        %v1195 = vpack.c.b16 %v1148, %v1147
        %v1196 = vpack.c.b16 %v1150, %v1149
        %v1197 = vpack.c.b16 %v1152, %v1151
        %v1198 = vpack.c.b16 %v1154, %v1153
        %v1199 = vpack.c.b16 %v1156, %v1155
        %v1200 = vpack.c.b16 %v1158, %v1157
        %v1201 = vpack.c.b16 %v1160, %v1159
        %v1202 = vpack.c.b16 %v1162, %v1161
        %v1203 = vpack.c.b16 %v1164, %v1163
        %v1204 = vpack.c.b16 %v1166, %v1165
        %v1205 = vpack.c.b16 %v1168, %v1167
        %v1206 = vpack.c.b16 %v1170, %v1169
        %v1207 = vpack.c.b16 %v1172, %v1171
        %v1208 = vpack.c.b16 %v1174, %v1173
        %v1209 = vpack.c.b16 %v1176, %v1175
        %v1210 = vpack.c.b16 %v1178, %v1177
        %v1211 = vpack.c.b16 %v1180, %v1179
        %v1212 = vpack.c.b16 %v1182, %v1181
        %v1213 = vpack.c.b16 %v1184, %v1183
        %v1214 = vpack.c.b16 %v1186, %v1185
        %v1215 = vpack.c.b16 %v1188, %v1187
        %v1216 = vpack.c.b16 %v1190, %v1189
        %v1217 = vpack.c.b16 %v1192, %v1191
        %v1218 = vpack.c.b16 %v1194, %v1193
        %1243 = vmatpush.bf16.msra.mxu0 %v1202
        %1244 = vmatpush.bf16.msra.mxu0 %v1201
        %1245 = vmatpush.bf16.msra.mxu0 %v1200
        %1246 = vmatpush.bf16.msra.mxu0 %v1199
        %1247 = vmatpush.bf16.msra.mxu0 %v1198
        %1248 = vmatpush.bf16.msra.mxu0 %v1197
        %1249 = vmatpush.bf16.msra.mxu0 %v1196
        %1250 = vmatpush.bf16.msra.mxu0 %v1195
        %1251 = vmatmul.bf16.gmra.mxu0 %v1048
        %v1252 = vpop.f32.mrf.mxu0
        %v1253 = vadd.f32 %v1097, %v1252
        %v1254 = vpop.f32.mrf.mxu0
        %v1255 = vadd.f32 %v1097, %v1254
        %1256 = vmatmul.bf16.gmra.mxu0 %v1051
        %v1257 = vpop.f32.mrf.mxu0
        %v1258 = vadd.f32 %v1097, %v1257
        %v1259 = vpop.f32.mrf.mxu0
        %v1260 = vadd.f32 %v1097, %v1259
        %1261 = vmatmul.bf16.gmra.mxu0 %v1054
        %v1262 = vpop.f32.mrf.mxu0
        %v1263 = vadd.f32 %v1097, %v1262
        %v1264 = vpop.f32.mrf.mxu0
        %v1265 = vadd.f32 %v1097, %v1264
        %1266 = vmatmul.bf16.gmra.mxu0 %v1057
        %v1267 = vpop.f32.mrf.mxu0
        %v1268 = vadd.f32 %v1097, %v1267
        %v1269 = vpop.f32.mrf.mxu0
        %v1270 = vadd.f32 %v1097, %v1269
        %1271 = vmatmul.bf16.gmra.mxu0 %v1060
        %v1272 = vpop.f32.mrf.mxu0
        %v1273 = vadd.f32 %v1097, %v1272
        %v1274 = vpop.f32.mrf.mxu0
        %v1275 = vadd.f32 %v1097, %v1274
        %1276 = vmatmul.bf16.gmra.mxu0 %v1063
        %v1277 = vpop.f32.mrf.mxu0
        %v1278 = vadd.f32 %v1097, %v1277
        %v1279 = vpop.f32.mrf.mxu0
        %v1280 = vadd.f32 %v1097, %v1279
        %1281 = vmatmul.bf16.gmra.mxu0 %v1066
        %v1282 = vpop.f32.mrf.mxu0
        %v1283 = vadd.f32 %v1097, %v1282
        %v1284 = vpop.f32.mrf.mxu0
        %v1285 = vadd.f32 %v1097, %v1284
        %1286 = vmatmul.bf16.gmra.mxu0 %v1069
        %v1287 = vpop.f32.mrf.mxu0
        %v1288 = vadd.f32 %v1097, %v1287
        %v1289 = vpop.f32.mrf.mxu0
        %v1290 = vadd.f32 %v1097, %v1289
        %1291 = vmatmul.bf16.gmra.mxu0 %v1072
        %v1292 = vpop.f32.mrf.mxu0
        %v1293 = vadd.f32 %v1097, %v1292
        %v1294 = vpop.f32.mrf.mxu0
        %v1295 = vadd.f32 %v1097, %v1294
        %1296 = vmatmul.bf16.gmra.mxu0 %v1075
        %v1297 = vpop.f32.mrf.mxu0
        %v1298 = vadd.f32 %v1097, %v1297
        %v1299 = vpop.f32.mrf.mxu0
        %v1300 = vadd.f32 %v1097, %v1299
        %1301 = vmatmul.bf16.gmra.mxu0 %v1078
        %v1302 = vpop.f32.mrf.mxu0
        %v1303 = vadd.f32 %v1097, %v1302
        %v1304 = vpop.f32.mrf.mxu0
        %v1305 = vadd.f32 %v1097, %v1304
        %1306 = vmatmul.bf16.gmra.mxu0 %v1081
        %v1307 = vpop.f32.mrf.mxu0
        %v1308 = vadd.f32 %v1097, %v1307
        %v1309 = vpop.f32.mrf.mxu0
        %v1310 = vadd.f32 %v1097, %v1309
        %1311 = vmatmul.bf16.gmra.mxu0 %v1084
        %v1312 = vpop.f32.mrf.mxu0
        %v1313 = vadd.f32 %v1097, %v1312
        %v1314 = vpop.f32.mrf.mxu0
        %v1315 = vadd.f32 %v1097, %v1314
        %1316 = vmatmul.bf16.gmra.mxu0 %v1087
        %v1317 = vpop.f32.mrf.mxu0
        %v1318 = vadd.f32 %v1097, %v1317
        %v1319 = vpop.f32.mrf.mxu0
        %v1320 = vadd.f32 %v1097, %v1319
        %1321 = vmatmul.bf16.gmra.mxu0 %v1090
        %v1322 = vpop.f32.mrf.mxu0
        %v1323 = vadd.f32 %v1097, %v1322
        %v1324 = vpop.f32.mrf.mxu0
        %v1325 = vadd.f32 %v1097, %v1324
        %1326 = vmatmul.bf16.gmra.mxu0 %v1093
        %v1327 = vpop.f32.mrf.mxu0
        %v1328 = vadd.f32 %v1097, %v1327
        %v1329 = vpop.f32.mrf.mxu0
        %v1330 = vadd.f32 %v1097, %v1329
        %1331 = vdwg.mxu0
        %1332 = vmatpush.bf16.msra.mxu0 %v1210
        %1333 = vmatpush.bf16.msra.mxu0 %v1209
        %1334 = vmatpush.bf16.msra.mxu0 %v1208
        %1335 = vmatpush.bf16.msra.mxu0 %v1207
        %1336 = vmatpush.bf16.msra.mxu0 %v1206
        %1337 = vmatpush.bf16.msra.mxu0 %v1205
        %1338 = vmatpush.bf16.msra.mxu0 %v1204
        %1339 = vmatpush.bf16.msra.mxu0 %v1203
        %1340 = vmatmul.bf16.gmra.mxu0 %v1049
        %v1341 = vpop.f32.mrf.mxu0
        %v1342 = vadd.f32 %v1253, %v1341
        %v1343 = vpop.f32.mrf.mxu0
        %v1344 = vadd.f32 %v1255, %v1343
        %1345 = vmatmul.bf16.gmra.mxu0 %v1052
        %v1346 = vpop.f32.mrf.mxu0
        %v1347 = vadd.f32 %v1258, %v1346
        %v1348 = vpop.f32.mrf.mxu0
        %v1349 = vadd.f32 %v1260, %v1348
        %1350 = vmatmul.bf16.gmra.mxu0 %v1055
        %v1351 = vpop.f32.mrf.mxu0
        %v1352 = vadd.f32 %v1263, %v1351
        %v1353 = vpop.f32.mrf.mxu0
        %v1354 = vadd.f32 %v1265, %v1353
        %1355 = vmatmul.bf16.gmra.mxu0 %v1058
        %v1356 = vpop.f32.mrf.mxu0
        %v1357 = vadd.f32 %v1268, %v1356
        %v1358 = vpop.f32.mrf.mxu0
        %v1359 = vadd.f32 %v1270, %v1358
        %1360 = vmatmul.bf16.gmra.mxu0 %v1061
        %v1361 = vpop.f32.mrf.mxu0
        %v1362 = vadd.f32 %v1273, %v1361
        %v1363 = vpop.f32.mrf.mxu0
        %v1364 = vadd.f32 %v1275, %v1363
        %1365 = vmatmul.bf16.gmra.mxu0 %v1064
        %v1366 = vpop.f32.mrf.mxu0
        %v1367 = vadd.f32 %v1278, %v1366
        %v1368 = vpop.f32.mrf.mxu0
        %v1369 = vadd.f32 %v1280, %v1368
        %1370 = vmatmul.bf16.gmra.mxu0 %v1067
        %v1371 = vpop.f32.mrf.mxu0
        %v1372 = vadd.f32 %v1283, %v1371
        %v1373 = vpop.f32.mrf.mxu0
        %v1374 = vadd.f32 %v1285, %v1373
        %1375 = vmatmul.bf16.gmra.mxu0 %v1070
        %v1376 = vpop.f32.mrf.mxu0
        %v1377 = vadd.f32 %v1288, %v1376
        %v1378 = vpop.f32.mrf.mxu0
        %v1379 = vadd.f32 %v1290, %v1378
        %1380 = vmatmul.bf16.gmra.mxu0 %v1073
        %v1381 = vpop.f32.mrf.mxu0
        %v1382 = vadd.f32 %v1293, %v1381
        %v1383 = vpop.f32.mrf.mxu0
        %v1384 = vadd.f32 %v1295, %v1383
        %1385 = vmatmul.bf16.gmra.mxu0 %v1076
        %v1386 = vpop.f32.mrf.mxu0
        %v1387 = vadd.f32 %v1298, %v1386
        %v1388 = vpop.f32.mrf.mxu0
        %v1389 = vadd.f32 %v1300, %v1388
        %1390 = vmatmul.bf16.gmra.mxu0 %v1079
        %v1391 = vpop.f32.mrf.mxu0
        %v1392 = vadd.f32 %v1303, %v1391
        %v1393 = vpop.f32.mrf.mxu0
        %v1394 = vadd.f32 %v1305, %v1393
        %1395 = vmatmul.bf16.gmra.mxu0 %v1082
        %v1396 = vpop.f32.mrf.mxu0
        %v1397 = vadd.f32 %v1308, %v1396
        %v1398 = vpop.f32.mrf.mxu0
        %v1399 = vadd.f32 %v1310, %v1398
        %1400 = vmatmul.bf16.gmra.mxu0 %v1085
        %v1401 = vpop.f32.mrf.mxu0
        %v1402 = vadd.f32 %v1313, %v1401
        %v1403 = vpop.f32.mrf.mxu0
        %v1404 = vadd.f32 %v1315, %v1403
        %1405 = vmatmul.bf16.gmra.mxu0 %v1088
        %v1406 = vpop.f32.mrf.mxu0
        %v1407 = vadd.f32 %v1318, %v1406
        %v1408 = vpop.f32.mrf.mxu0
        %v1409 = vadd.f32 %v1320, %v1408
        %1410 = vmatmul.bf16.gmra.mxu0 %v1091
        %v1411 = vpop.f32.mrf.mxu0
        %v1412 = vadd.f32 %v1323, %v1411
        %v1413 = vpop.f32.mrf.mxu0
        %v1414 = vadd.f32 %v1325, %v1413
        %1415 = vmatmul.bf16.gmra.mxu0 %v1094
        %v1416 = vpop.f32.mrf.mxu0
        %v1417 = vadd.f32 %v1328, %v1416
        %v1418 = vpop.f32.mrf.mxu0
        %v1419 = vadd.f32 %v1330, %v1418
        %1420 = vdwg.mxu0
        %1421 = vmatpush.bf16.msra.mxu0 %v1218
        %1422 = vmatpush.bf16.msra.mxu0 %v1217
        %1423 = vmatpush.bf16.msra.mxu0 %v1216
        %1424 = vmatpush.bf16.msra.mxu0 %v1215
        %1425 = vmatpush.bf16.msra.mxu0 %v1214
        %1426 = vmatpush.bf16.msra.mxu0 %v1213
        %1427 = vmatpush.bf16.msra.mxu0 %v1212
        %1428 = vmatpush.bf16.msra.mxu0 %v1211
        %1429 = vmatmul.bf16.gmra.mxu0 %v1050
        %v1430 = vpop.f32.mrf.mxu0
        %v1431 = vadd.f32 %v1342, %v1430
        %v1432 = vpop.f32.mrf.mxu0
        %v1433 = vadd.f32 %v1344, %v1432
        %1434 = vmatmul.bf16.gmra.mxu0 %v1053
        %v1435 = vpop.f32.mrf.mxu0
        %v1436 = vadd.f32 %v1347, %v1435
        %v1437 = vpop.f32.mrf.mxu0
        %v1438 = vadd.f32 %v1349, %v1437
        %1439 = vmatmul.bf16.gmra.mxu0 %v1056
        %v1440 = vpop.f32.mrf.mxu0
        %v1441 = vadd.f32 %v1352, %v1440
        %v1442 = vpop.f32.mrf.mxu0
        %v1443 = vadd.f32 %v1354, %v1442
        %1444 = vmatmul.bf16.gmra.mxu0 %v1059
        %v1445 = vpop.f32.mrf.mxu0
        %v1446 = vadd.f32 %v1357, %v1445
        %v1447 = vpop.f32.mrf.mxu0
        %v1448 = vadd.f32 %v1359, %v1447
        %1449 = vmatmul.bf16.gmra.mxu0 %v1062
        %v1450 = vpop.f32.mrf.mxu0
        %v1451 = vadd.f32 %v1362, %v1450
        %v1452 = vpop.f32.mrf.mxu0
        %v1453 = vadd.f32 %v1364, %v1452
        %1454 = vmatmul.bf16.gmra.mxu0 %v1065
        %v1455 = vpop.f32.mrf.mxu0
        %v1456 = vadd.f32 %v1367, %v1455
        %v1457 = vpop.f32.mrf.mxu0
        %v1458 = vadd.f32 %v1369, %v1457
        %1459 = vmatmul.bf16.gmra.mxu0 %v1068
        %v1460 = vpop.f32.mrf.mxu0
        %v1461 = vadd.f32 %v1372, %v1460
        %v1462 = vpop.f32.mrf.mxu0
        %v1463 = vadd.f32 %v1374, %v1462
        %1464 = vmatmul.bf16.gmra.mxu0 %v1071
        %v1465 = vpop.f32.mrf.mxu0
        %v1466 = vadd.f32 %v1377, %v1465
        %v1467 = vpop.f32.mrf.mxu0
        %v1468 = vadd.f32 %v1379, %v1467
        %1469 = vmatmul.bf16.gmra.mxu0 %v1074
        %v1470 = vpop.f32.mrf.mxu0
        %v1471 = vadd.f32 %v1382, %v1470
        %v1472 = vpop.f32.mrf.mxu0
        %v1473 = vadd.f32 %v1384, %v1472
        %1474 = vmatmul.bf16.gmra.mxu0 %v1077
        %v1475 = vpop.f32.mrf.mxu0
        %v1476 = vadd.f32 %v1387, %v1475
        %v1477 = vpop.f32.mrf.mxu0
        %v1478 = vadd.f32 %v1389, %v1477
        %1479 = vmatmul.bf16.gmra.mxu0 %v1080
        %v1480 = vpop.f32.mrf.mxu0
        %v1481 = vadd.f32 %v1392, %v1480
        %v1482 = vpop.f32.mrf.mxu0
        %v1483 = vadd.f32 %v1394, %v1482
        %1484 = vmatmul.bf16.gmra.mxu0 %v1083
        %v1485 = vpop.f32.mrf.mxu0
        %v1486 = vadd.f32 %v1397, %v1485
        %v1487 = vpop.f32.mrf.mxu0
        %v1488 = vadd.f32 %v1399, %v1487
        %1489 = vmatmul.bf16.gmra.mxu0 %v1086
        %v1490 = vpop.f32.mrf.mxu0
        %v1491 = vadd.f32 %v1402, %v1490
        %v1492 = vpop.f32.mrf.mxu0
        %v1493 = vadd.f32 %v1404, %v1492
        %1494 = vmatmul.bf16.gmra.mxu0 %v1089
        %v1495 = vpop.f32.mrf.mxu0
        %v1496 = vadd.f32 %v1407, %v1495
        %v1497 = vpop.f32.mrf.mxu0
        %v1498 = vadd.f32 %v1409, %v1497
        %1499 = vmatmul.bf16.gmra.mxu0 %v1092
        %v1500 = vpop.f32.mrf.mxu0
        %v1501 = vadd.f32 %v1412, %v1500
        %v1502 = vpop.f32.mrf.mxu0
        %v1503 = vadd.f32 %v1414, %v1502
        %1504 = vmatmul.bf16.gmra.mxu0 %v1095
        %v1505 = vpop.f32.mrf.mxu0
        %v1506 = vadd.f32 %v1417, %v1505
        %v1507 = vpop.f32.mrf.mxu0
        %v1508 = vadd.f32 %v1419, %v1507
        %1509 = vdwg.mxu0
        %v1510 = vmax.f32 %v1431, 0.0
        %v1511 = vmax.f32 %v1433, 0.0
        %v1512 = vmax.f32 %v1436, 0.0
        %v1513 = vmax.f32 %v1438, 0.0
        %v1514 = vmax.f32 %v1441, 0.0
        %v1515 = vmax.f32 %v1443, 0.0
        %v1516 = vmax.f32 %v1446, 0.0
        %v1517 = vmax.f32 %v1448, 0.0
        %v1518 = vmax.f32 %v1451, 0.0
        %v1519 = vmax.f32 %v1453, 0.0
        %v1520 = vmax.f32 %v1456, 0.0
        %v1521 = vmax.f32 %v1458, 0.0
        %v1522 = vmax.f32 %v1461, 0.0
        %v1523 = vmax.f32 %v1463, 0.0
        %v1524 = vmax.f32 %v1466, 0.0
        %v1525 = vmax.f32 %v1468, 0.0
        %v1526 = vmax.f32 %v1471, 0.0
        %v1527 = vmax.f32 %v1473, 0.0
        %v1528 = vmax.f32 %v1476, 0.0
        %v1529 = vmax.f32 %v1478, 0.0
        %v1530 = vmax.f32 %v1481, 0.0
        %v1531 = vmax.f32 %v1483, 0.0
        %v1532 = vmax.f32 %v1486, 0.0
        %v1533 = vmax.f32 %v1488, 0.0
        %v1534 = vmax.f32 %v1491, 0.0
        %v1535 = vmax.f32 %v1493, 0.0
        %v1536 = vmax.f32 %v1496, 0.0
        %v1537 = vmax.f32 %v1498, 0.0
        %v1538 = vmax.f32 %v1501, 0.0
        %v1539 = vmax.f32 %v1503, 0.0
        %v1540 = vmax.f32 %v1506, 0.0
        %v1541 = vmax.f32 %v1508, 0.0
        %v1542 = vld [vmem:[#allocation2] sm:$0xf]
        %v1543 = vld [vmem:[#allocation2 + $0x4] sm:$0xf]
        %v1544 = vld [vmem:[#allocation2 + $0x8] sm:$0xf]
        %v1545 = vld [vmem:[#allocation2 + $0xc] sm:$0xf]
        %v1546 = vld [vmem:[#allocation2 + $0x10] sm:$0xf]
        %v1547 = vld [vmem:[#allocation2 + $0x14] sm:$0xf]
        %v1548 = vld [vmem:[#allocation2 + $0x18] sm:$0xf]
        %v1549 = vld [vmem:[#allocation2 + $0x1c] sm:$0xf]
        %v1550 = vld [vmem:[#allocation2 + $0x20] sm:$0xf]
        %v1551 = vld [vmem:[#allocation2 + $0x24] sm:$0xf]
        %v1552 = vld [vmem:[#allocation2 + $0x28] sm:$0xf]
        %v1553 = vld [vmem:[#allocation2 + $0x2c] sm:$0xf]
        %v1554 = vld [vmem:[#allocation2 + $0x30] sm:$0xf]
        %v1555 = vld [vmem:[#allocation2 + $0x34] sm:$0xf]
        %v1556 = vld [vmem:[#allocation2 + $0x38] sm:$0xf]
        %v1557 = vld [vmem:[#allocation2 + $0x3c] sm:$0xf]
        %v1558 = vld [vmem:[#allocation2 + $0x40] sm:$0xf]
        %v1559 = vld [vmem:[#allocation2 + $0x44] sm:$0xf]
        %v1560 = vld [vmem:[#allocation2 + $0x48] sm:$0xf]
        %v1561 = vld [vmem:[#allocation2 + $0x4c] sm:$0xf]
        %v1562 = vld [vmem:[#allocation2 + $0x50] sm:$0xf]
        %v1563 = vld [vmem:[#allocation2 + $0x54] sm:$0xf]
        %v1564 = vld [vmem:[#allocation2 + $0x58] sm:$0xf]
        %v1565 = vld [vmem:[#allocation2 + $0x5c] sm:$0xf]
        %v1566 = vld [vmem:[#allocation2 + $0x60] sm:$0xf]
        %v1567 = vld [vmem:[#allocation2 + $0x64] sm:$0xf]
        %v1568 = vld [vmem:[#allocation2 + $0x68] sm:$0xf]
        %v1569 = vld [vmem:[#allocation2 + $0x6c] sm:$0xf]
        %v1570 = vld [vmem:[#allocation2 + $0x70] sm:$0xf]
        %v1571 = vld [vmem:[#allocation2 + $0x74] sm:$0xf]
        %v1572 = vld [vmem:[#allocation2 + $0x78] sm:$0xf]
        %v1573 = vld [vmem:[#allocation2 + $0x7c] sm:$0xf]
        %v1574 = vld [vmem:[#allocation2 + $0x80] sm:$0xf]
        %v1575 = vld [vmem:[#allocation2 + $0x84] sm:$0xf]
        %v1576 = vld [vmem:[#allocation2 + $0x88] sm:$0xf]
        %v1577 = vld [vmem:[#allocation2 + $0x8c] sm:$0xf]
        %v1578 = vld [vmem:[#allocation2 + $0x90] sm:$0xf]
        %v1579 = vld [vmem:[#allocation2 + $0x94] sm:$0xf]
        %v1580 = vld [vmem:[#allocation2 + $0x98] sm:$0xf]
        %v1581 = vld [vmem:[#allocation2 + $0x9c] sm:$0xf]
        %v1582 = vld [vmem:[#allocation2 + $0xa0] sm:$0xf]
        %v1583 = vld [vmem:[#allocation2 + $0xa4] sm:$0xf]
        %v1584 = vld [vmem:[#allocation2 + $0xa8] sm:$0xf]
        %v1585 = vld [vmem:[#allocation2 + $0xac] sm:$0xf]
        %v1586 = vld [vmem:[#allocation2 + $0xb0] sm:$0xf]
        %v1587 = vld [vmem:[#allocation2 + $0xb4] sm:$0xf]
        %v1588 = vld [vmem:[#allocation2 + $0xb8] sm:$0xf]
        %v1589 = vld [vmem:[#allocation2 + $0xbc] sm:$0xf]
        %v1590 = vld [vmem:[%s7] sm:$0x1]
        %v1623 = vrot.slane %v1510, 6
        %v1624 = vrot.slane %v1511, 6
        %v1625 = vsel %vm710, %v1623, %v1624
        %v1626 = vrot.slane %v1512, 6
        %v1627 = vrot.slane %v1513, 6
        %v1628 = vsel %vm710, %v1626, %v1627
        %v1629 = vrot.slane %v1514, 6
        %v1630 = vrot.slane %v1515, 6
        %v1631 = vsel %vm710, %v1629, %v1630
        %v1632 = vrot.slane %v1516, 6
        %v1633 = vrot.slane %v1517, 6
        %v1634 = vsel %vm710, %v1632, %v1633
        %v1635 = vrot.slane %v1518, 6
        %v1636 = vrot.slane %v1519, 6
        %v1637 = vsel %vm710, %v1635, %v1636
        %v1638 = vrot.slane %v1520, 6
        %v1639 = vrot.slane %v1521, 6
        %v1640 = vsel %vm710, %v1638, %v1639
        %v1641 = vrot.slane %v1522, 6
        %v1642 = vrot.slane %v1523, 6
        %v1643 = vsel %vm710, %v1641, %v1642
        %v1644 = vrot.slane %v1524, 6
        %v1645 = vrot.slane %v1525, 6
        %v1646 = vsel %vm710, %v1644, %v1645
        %v1647 = vrot.slane %v1526, 6
        %v1648 = vrot.slane %v1527, 6
        %v1649 = vsel %vm710, %v1647, %v1648
        %v1650 = vrot.slane %v1528, 6
        %v1651 = vrot.slane %v1529, 6
        %v1652 = vsel %vm710, %v1650, %v1651
        %v1653 = vrot.slane %v1530, 6
        %v1654 = vrot.slane %v1531, 6
        %v1655 = vsel %vm710, %v1653, %v1654
        %v1656 = vrot.slane %v1532, 6
        %v1657 = vrot.slane %v1533, 6
        %v1658 = vsel %vm710, %v1656, %v1657
        %v1659 = vrot.slane %v1534, 6
        %v1660 = vrot.slane %v1535, 6
        %v1661 = vsel %vm710, %v1659, %v1660
        %v1662 = vrot.slane %v1536, 6
        %v1663 = vrot.slane %v1537, 6
        %v1664 = vsel %vm710, %v1662, %v1663
        %v1665 = vrot.slane %v1538, 6
        %v1666 = vrot.slane %v1539, 6
        %v1667 = vsel %vm710, %v1665, %v1666
        %v1668 = vrot.slane %v1540, 6
        %v1669 = vrot.slane %v1541, 6
        %v1670 = vsel %vm710, %v1668, %v1669
        %v1703 = vsel %vm710, 0.0, %v1623
        %v1704 = vsel %vm710, 0.0, %v1626
        %v1705 = vsel %vm710, 0.0, %v1629
        %v1706 = vsel %vm710, 0.0, %v1632
        %v1707 = vsel %vm710, 0.0, %v1635
        %v1708 = vsel %vm710, 0.0, %v1638
        %v1709 = vsel %vm710, 0.0, %v1641
        %v1710 = vsel %vm710, 0.0, %v1644
        %v1711 = vsel %vm710, 0.0, %v1647
        %v1712 = vsel %vm710, 0.0, %v1650
        %v1713 = vsel %vm710, 0.0, %v1653
        %v1714 = vsel %vm710, 0.0, %v1656
        %v1715 = vsel %vm710, 0.0, %v1659
        %v1716 = vsel %vm710, 0.0, %v1662
        %v1717 = vsel %vm710, 0.0, %v1665
        %v1718 = vsel %vm710, 0.0, %v1668
        %v1735 = vrot.slane %v1703, 1
        %v1736 = vrot.slane %v1625, 1
        %v1737 = vsel %vm823, %v1735, %v1736
        %v1738 = vrot.slane %v1624, 1
        %v1739 = vsel %vm823, %v1736, %v1738
        %v1740 = vrot.slane %v1704, 1
        %v1741 = vrot.slane %v1628, 1
        %v1742 = vsel %vm823, %v1740, %v1741
        %v1743 = vrot.slane %v1627, 1
        %v1744 = vsel %vm823, %v1741, %v1743
        %v1745 = vrot.slane %v1705, 1
        %v1746 = vrot.slane %v1631, 1
        %v1747 = vsel %vm823, %v1745, %v1746
        %v1748 = vrot.slane %v1630, 1
        %v1749 = vsel %vm823, %v1746, %v1748
        %v1750 = vrot.slane %v1706, 1
        %v1751 = vrot.slane %v1634, 1
        %v1752 = vsel %vm823, %v1750, %v1751
        %v1753 = vrot.slane %v1633, 1
        %v1754 = vsel %vm823, %v1751, %v1753
        %v1755 = vrot.slane %v1707, 1
        %v1756 = vrot.slane %v1637, 1
        %v1757 = vsel %vm823, %v1755, %v1756
        %v1758 = vrot.slane %v1636, 1
        %v1759 = vsel %vm823, %v1756, %v1758
        %v1760 = vrot.slane %v1708, 1
        %v1761 = vrot.slane %v1640, 1
        %v1762 = vsel %vm823, %v1760, %v1761
        %v1763 = vrot.slane %v1639, 1
        %v1764 = vsel %vm823, %v1761, %v1763
        %v1765 = vrot.slane %v1709, 1
        %v1766 = vrot.slane %v1643, 1
        %v1767 = vsel %vm823, %v1765, %v1766
        %v1768 = vrot.slane %v1642, 1
        %v1769 = vsel %vm823, %v1766, %v1768
        %v1770 = vrot.slane %v1710, 1
        %v1771 = vrot.slane %v1646, 1
        %v1772 = vsel %vm823, %v1770, %v1771
        %v1773 = vrot.slane %v1645, 1
        %v1774 = vsel %vm823, %v1771, %v1773
        %v1775 = vrot.slane %v1711, 1
        %v1776 = vrot.slane %v1649, 1
        %v1777 = vsel %vm823, %v1775, %v1776
        %v1778 = vrot.slane %v1648, 1
        %v1779 = vsel %vm823, %v1776, %v1778
        %v1780 = vrot.slane %v1712, 1
        %v1781 = vrot.slane %v1652, 1
        %v1782 = vsel %vm823, %v1780, %v1781
        %v1783 = vrot.slane %v1651, 1
        %v1784 = vsel %vm823, %v1781, %v1783
        %v1785 = vrot.slane %v1713, 1
        %v1786 = vrot.slane %v1655, 1
        %v1787 = vsel %vm823, %v1785, %v1786
        %v1788 = vrot.slane %v1654, 1
        %v1789 = vsel %vm823, %v1786, %v1788
        %v1790 = vrot.slane %v1714, 1
        %v1791 = vrot.slane %v1658, 1
        %v1792 = vsel %vm823, %v1790, %v1791
        %v1793 = vrot.slane %v1657, 1
        %v1794 = vsel %vm823, %v1791, %v1793
        %v1795 = vrot.slane %v1715, 1
        %v1796 = vrot.slane %v1661, 1
        %v1797 = vsel %vm823, %v1795, %v1796
        %v1798 = vrot.slane %v1660, 1
        %v1799 = vsel %vm823, %v1796, %v1798
        %v1800 = vrot.slane %v1716, 1
        %v1801 = vrot.slane %v1664, 1
        %v1802 = vsel %vm823, %v1800, %v1801
        %v1803 = vrot.slane %v1663, 1
        %v1804 = vsel %vm823, %v1801, %v1803
        %v1805 = vrot.slane %v1717, 1
        %v1806 = vrot.slane %v1667, 1
        %v1807 = vsel %vm823, %v1805, %v1806
        %v1808 = vrot.slane %v1666, 1
        %v1809 = vsel %vm823, %v1806, %v1808
        %v1810 = vrot.slane %v1718, 1
        %v1811 = vrot.slane %v1670, 1
        %v1812 = vsel %vm823, %v1810, %v1811
        %v1813 = vrot.slane %v1669, 1
        %v1814 = vsel %vm823, %v1811, %v1813
        %v1847 = vrot.slane %v1703, 2
        %v1848 = vrot.slane %v1625, 2
        %v1849 = vsel %vm512, %v1847, %v1848
        %v1850 = vrot.slane %v1624, 2
        %v1851 = vsel %vm512, %v1848, %v1850
        %v1852 = vrot.slane %v1704, 2
        %v1853 = vrot.slane %v1628, 2
        %v1854 = vsel %vm512, %v1852, %v1853
        %v1855 = vrot.slane %v1627, 2
        %v1856 = vsel %vm512, %v1853, %v1855
        %v1857 = vrot.slane %v1705, 2
        %v1858 = vrot.slane %v1631, 2
        %v1859 = vsel %vm512, %v1857, %v1858
        %v1860 = vrot.slane %v1630, 2
        %v1861 = vsel %vm512, %v1858, %v1860
        %v1862 = vrot.slane %v1706, 2
        %v1863 = vrot.slane %v1634, 2
        %v1864 = vsel %vm512, %v1862, %v1863
        %v1865 = vrot.slane %v1633, 2
        %v1866 = vsel %vm512, %v1863, %v1865
        %v1867 = vrot.slane %v1707, 2
        %v1868 = vrot.slane %v1637, 2
        %v1869 = vsel %vm512, %v1867, %v1868
        %v1870 = vrot.slane %v1636, 2
        %v1871 = vsel %vm512, %v1868, %v1870
        %v1872 = vrot.slane %v1708, 2
        %v1873 = vrot.slane %v1640, 2
        %v1874 = vsel %vm512, %v1872, %v1873
        %v1875 = vrot.slane %v1639, 2
        %v1876 = vsel %vm512, %v1873, %v1875
        %v1877 = vrot.slane %v1709, 2
        %v1878 = vrot.slane %v1643, 2
        %v1879 = vsel %vm512, %v1877, %v1878
        %v1880 = vrot.slane %v1642, 2
        %v1881 = vsel %vm512, %v1878, %v1880
        %v1882 = vrot.slane %v1710, 2
        %v1883 = vrot.slane %v1646, 2
        %v1884 = vsel %vm512, %v1882, %v1883
        %v1885 = vrot.slane %v1645, 2
        %v1886 = vsel %vm512, %v1883, %v1885
        %v1887 = vrot.slane %v1711, 2
        %v1888 = vrot.slane %v1649, 2
        %v1889 = vsel %vm512, %v1887, %v1888
        %v1890 = vrot.slane %v1648, 2
        %v1891 = vsel %vm512, %v1888, %v1890
        %v1892 = vrot.slane %v1712, 2
        %v1893 = vrot.slane %v1652, 2
        %v1894 = vsel %vm512, %v1892, %v1893
        %v1895 = vrot.slane %v1651, 2
        %v1896 = vsel %vm512, %v1893, %v1895
        %v1897 = vrot.slane %v1713, 2
        %v1898 = vrot.slane %v1655, 2
        %v1899 = vsel %vm512, %v1897, %v1898
        %v1900 = vrot.slane %v1654, 2
        %v1901 = vsel %vm512, %v1898, %v1900
        %v1902 = vrot.slane %v1714, 2
        %v1903 = vrot.slane %v1658, 2
        %v1904 = vsel %vm512, %v1902, %v1903
        %v1905 = vrot.slane %v1657, 2
        %v1906 = vsel %vm512, %v1903, %v1905
        %v1907 = vrot.slane %v1715, 2
        %v1908 = vrot.slane %v1661, 2
        %v1909 = vsel %vm512, %v1907, %v1908
        %v1910 = vrot.slane %v1660, 2
        %v1911 = vsel %vm512, %v1908, %v1910
        %v1912 = vrot.slane %v1716, 2
        %v1913 = vrot.slane %v1664, 2
        %v1914 = vsel %vm512, %v1912, %v1913
        %v1915 = vrot.slane %v1663, 2
        %v1916 = vsel %vm512, %v1913, %v1915
        %v1917 = vrot.slane %v1717, 2
        %v1918 = vrot.slane %v1667, 2
        %v1919 = vsel %vm512, %v1917, %v1918
        %v1920 = vrot.slane %v1666, 2
        %v1921 = vsel %vm512, %v1918, %v1920
        %v1922 = vrot.slane %v1718, 2
        %v1923 = vrot.slane %v1670, 2
        %v1924 = vsel %vm512, %v1922, %v1923
        %v1925 = vrot.slane %v1669, 2
        %v1926 = vsel %vm512, %v1923, %v1925
        %v1959 = vpack.c.bf16 %v1625, %v1703
        %v1960 = vpack.c.bf16 %v1739, %v1737
        %v1961 = vpack.c.bf16 %v1851, %v1849
        %v1962 = vpack.c.bf16 %v1628, %v1704
        %v1963 = vpack.c.bf16 %v1744, %v1742
        %v1964 = vpack.c.bf16 %v1856, %v1854
        %v1965 = vpack.c.bf16 %v1631, %v1705
        %v1966 = vpack.c.bf16 %v1749, %v1747
        %v1967 = vpack.c.bf16 %v1861, %v1859
        %v1968 = vpack.c.bf16 %v1634, %v1706
        %v1969 = vpack.c.bf16 %v1754, %v1752
        %v1970 = vpack.c.bf16 %v1866, %v1864
        %v1971 = vpack.c.bf16 %v1637, %v1707
        %v1972 = vpack.c.bf16 %v1759, %v1757
        %v1973 = vpack.c.bf16 %v1871, %v1869
        %v1974 = vpack.c.bf16 %v1640, %v1708
        %v1975 = vpack.c.bf16 %v1764, %v1762
        %v1976 = vpack.c.bf16 %v1876, %v1874
        %v1977 = vpack.c.bf16 %v1643, %v1709
        %v1978 = vpack.c.bf16 %v1769, %v1767
        %v1979 = vpack.c.bf16 %v1881, %v1879
        %v1980 = vpack.c.bf16 %v1646, %v1710
        %v1981 = vpack.c.bf16 %v1774, %v1772
        %v1982 = vpack.c.bf16 %v1886, %v1884
        %v1983 = vpack.c.bf16 %v1649, %v1711
        %v1984 = vpack.c.bf16 %v1779, %v1777
        %v1985 = vpack.c.bf16 %v1891, %v1889
        %v1986 = vpack.c.bf16 %v1652, %v1712
        %v1987 = vpack.c.bf16 %v1784, %v1782
        %v1988 = vpack.c.bf16 %v1896, %v1894
        %v1989 = vpack.c.bf16 %v1655, %v1713
        %v1990 = vpack.c.bf16 %v1789, %v1787
        %v1991 = vpack.c.bf16 %v1901, %v1899
        %v1992 = vpack.c.bf16 %v1658, %v1714
        %v1993 = vpack.c.bf16 %v1794, %v1792
        %v1994 = vpack.c.bf16 %v1906, %v1904
        %v1995 = vpack.c.bf16 %v1661, %v1715
        %v1996 = vpack.c.bf16 %v1799, %v1797
        %v1997 = vpack.c.bf16 %v1911, %v1909
        %v1998 = vpack.c.bf16 %v1664, %v1716
        %v1999 = vpack.c.bf16 %v1804, %v1802
        %v2000 = vpack.c.bf16 %v1916, %v1914
        %v2001 = vpack.c.bf16 %v1667, %v1717
        %v2002 = vpack.c.bf16 %v1809, %v1807
        %v2003 = vpack.c.bf16 %v1921, %v1919
        %v2004 = vpack.c.bf16 %v1670, %v1718
        %v2005 = vpack.c.bf16 %v1814, %v1812
        %v2006 = vpack.c.bf16 %v1926, %v1924
        %v2008 = vperm.slane %v1590, 0
        %v2058 = vunpack.c.l.b16 %v1542
        %v2059 = vunpack.c.l.b16 %v1543
        %v2060 = vunpack.c.l.b16 %v1544
        %v2061 = vunpack.c.l.b16 %v1545
        %v2062 = vunpack.c.l.b16 %v1546
        %v2063 = vunpack.c.l.b16 %v1547
        %v2064 = vunpack.c.l.b16 %v1548
        %v2065 = vunpack.c.l.b16 %v1549
        %v2066 = vunpack.c.l.b16 %v1550
        %v2067 = vunpack.c.l.b16 %v1551
        %v2068 = vunpack.c.l.b16 %v1552
        %v2069 = vunpack.c.l.b16 %v1553
        %v2070 = vunpack.c.l.b16 %v1554
        %v2071 = vunpack.c.l.b16 %v1555
        %v2072 = vunpack.c.l.b16 %v1556
        %v2073 = vunpack.c.l.b16 %v1557
        %v2074 = vunpack.c.l.b16 %v1558
        %v2075 = vunpack.c.l.b16 %v1559
        %v2076 = vunpack.c.l.b16 %v1560
        %v2077 = vunpack.c.l.b16 %v1561
        %v2078 = vunpack.c.l.b16 %v1562
        %v2079 = vunpack.c.l.b16 %v1563
        %v2080 = vunpack.c.l.b16 %v1564
        %v2081 = vunpack.c.l.b16 %v1565
        %v2082 = vunpack.c.l.b16 %v1566
        %v2083 = vunpack.c.l.b16 %v1567
        %v2084 = vunpack.c.l.b16 %v1568
        %v2085 = vunpack.c.l.b16 %v1569
        %v2086 = vunpack.c.l.b16 %v1570
        %v2087 = vunpack.c.l.b16 %v1571
        %v2088 = vunpack.c.l.b16 %v1572
        %v2089 = vunpack.c.l.b16 %v1573
        %v2090 = vunpack.c.l.b16 %v1574
        %v2091 = vunpack.c.l.b16 %v1575
        %v2092 = vunpack.c.l.b16 %v1576
        %v2093 = vunpack.c.l.b16 %v1577
        %v2094 = vunpack.c.l.b16 %v1578
        %v2095 = vunpack.c.l.b16 %v1579
        %v2096 = vunpack.c.l.b16 %v1580
        %v2097 = vunpack.c.l.b16 %v1581
        %v2098 = vunpack.c.l.b16 %v1582
        %v2099 = vunpack.c.l.b16 %v1583
        %v2100 = vunpack.c.l.b16 %v1584
        %v2101 = vunpack.c.l.b16 %v1585
        %v2102 = vunpack.c.l.b16 %v1586
        %v2103 = vunpack.c.l.b16 %v1587
        %v2104 = vunpack.c.l.b16 %v1588
        %v2105 = vunpack.c.l.b16 %v1589
        %v2106 = vpack.c.b16 %v2059, %v2058
        %v2107 = vpack.c.b16 %v2061, %v2060
        %v2108 = vpack.c.b16 %v2063, %v2062
        %v2109 = vpack.c.b16 %v2065, %v2064
        %v2110 = vpack.c.b16 %v2067, %v2066
        %v2111 = vpack.c.b16 %v2069, %v2068
        %v2112 = vpack.c.b16 %v2071, %v2070
        %v2113 = vpack.c.b16 %v2073, %v2072
        %v2114 = vpack.c.b16 %v2075, %v2074
        %v2115 = vpack.c.b16 %v2077, %v2076
        %v2116 = vpack.c.b16 %v2079, %v2078
        %v2117 = vpack.c.b16 %v2081, %v2080
        %v2118 = vpack.c.b16 %v2083, %v2082
        %v2119 = vpack.c.b16 %v2085, %v2084
        %v2120 = vpack.c.b16 %v2087, %v2086
        %v2121 = vpack.c.b16 %v2089, %v2088
        %v2122 = vpack.c.b16 %v2091, %v2090
        %v2123 = vpack.c.b16 %v2093, %v2092
        %v2124 = vpack.c.b16 %v2095, %v2094
        %v2125 = vpack.c.b16 %v2097, %v2096
        %v2126 = vpack.c.b16 %v2099, %v2098
        %v2127 = vpack.c.b16 %v2101, %v2100
        %v2128 = vpack.c.b16 %v2103, %v2102
        %v2129 = vpack.c.b16 %v2105, %v2104
        %2154 = vmatpush.bf16.msra.mxu0 %v2113
        %2155 = vmatpush.bf16.msra.mxu0 %v2112
        %2156 = vmatpush.bf16.msra.mxu0 %v2111
        %2157 = vmatpush.bf16.msra.mxu0 %v2110
        %2158 = vmatpush.bf16.msra.mxu0 %v2109
        %2159 = vmatpush.bf16.msra.mxu0 %v2108
        %2160 = vmatpush.bf16.msra.mxu0 %v2107
        %2161 = vmatpush.bf16.msra.mxu0 %v2106
        %2162 = vmatmul.bf16.gmra.mxu0 %v1959
        %v2163 = vpop.f32.mrf.mxu0
        %v2164 = vadd.f32 %v2008, %v2163
        %v2165 = vpop.f32.mrf.mxu0
        %v2166 = vadd.f32 %v2008, %v2165
        %2167 = vmatmul.bf16.gmra.mxu0 %v1962
        %v2168 = vpop.f32.mrf.mxu0
        %v2169 = vadd.f32 %v2008, %v2168
        %v2170 = vpop.f32.mrf.mxu0
        %v2171 = vadd.f32 %v2008, %v2170
        %2172 = vmatmul.bf16.gmra.mxu0 %v1965
        %v2173 = vpop.f32.mrf.mxu0
        %v2174 = vadd.f32 %v2008, %v2173
        %v2175 = vpop.f32.mrf.mxu0
        %v2176 = vadd.f32 %v2008, %v2175
        %2177 = vmatmul.bf16.gmra.mxu0 %v1968
        %v2178 = vpop.f32.mrf.mxu0
        %v2179 = vadd.f32 %v2008, %v2178
        %v2180 = vpop.f32.mrf.mxu0
        %v2181 = vadd.f32 %v2008, %v2180
        %2182 = vmatmul.bf16.gmra.mxu0 %v1971
        %v2183 = vpop.f32.mrf.mxu0
        %v2184 = vadd.f32 %v2008, %v2183
        %v2185 = vpop.f32.mrf.mxu0
        %v2186 = vadd.f32 %v2008, %v2185
        %2187 = vmatmul.bf16.gmra.mxu0 %v1974
        %v2188 = vpop.f32.mrf.mxu0
        %v2189 = vadd.f32 %v2008, %v2188
        %v2190 = vpop.f32.mrf.mxu0
        %v2191 = vadd.f32 %v2008, %v2190
        %2192 = vmatmul.bf16.gmra.mxu0 %v1977
        %v2193 = vpop.f32.mrf.mxu0
        %v2194 = vadd.f32 %v2008, %v2193
        %v2195 = vpop.f32.mrf.mxu0
        %v2196 = vadd.f32 %v2008, %v2195
        %2197 = vmatmul.bf16.gmra.mxu0 %v1980
        %v2198 = vpop.f32.mrf.mxu0
        %v2199 = vadd.f32 %v2008, %v2198
        %v2200 = vpop.f32.mrf.mxu0
        %v2201 = vadd.f32 %v2008, %v2200
        %2202 = vmatmul.bf16.gmra.mxu0 %v1983
        %v2203 = vpop.f32.mrf.mxu0
        %v2204 = vadd.f32 %v2008, %v2203
        %v2205 = vpop.f32.mrf.mxu0
        %v2206 = vadd.f32 %v2008, %v2205
        %2207 = vmatmul.bf16.gmra.mxu0 %v1986
        %v2208 = vpop.f32.mrf.mxu0
        %v2209 = vadd.f32 %v2008, %v2208
        %v2210 = vpop.f32.mrf.mxu0
        %v2211 = vadd.f32 %v2008, %v2210
        %2212 = vmatmul.bf16.gmra.mxu0 %v1989
        %v2213 = vpop.f32.mrf.mxu0
        %v2214 = vadd.f32 %v2008, %v2213
        %v2215 = vpop.f32.mrf.mxu0
        %v2216 = vadd.f32 %v2008, %v2215
        %2217 = vmatmul.bf16.gmra.mxu0 %v1992
        %v2218 = vpop.f32.mrf.mxu0
        %v2219 = vadd.f32 %v2008, %v2218
        %v2220 = vpop.f32.mrf.mxu0
        %v2221 = vadd.f32 %v2008, %v2220
        %2222 = vmatmul.bf16.gmra.mxu0 %v1995
        %v2223 = vpop.f32.mrf.mxu0
        %v2224 = vadd.f32 %v2008, %v2223
        %v2225 = vpop.f32.mrf.mxu0
        %v2226 = vadd.f32 %v2008, %v2225
        %2227 = vmatmul.bf16.gmra.mxu0 %v1998
        %v2228 = vpop.f32.mrf.mxu0
        %v2229 = vadd.f32 %v2008, %v2228
        %v2230 = vpop.f32.mrf.mxu0
        %v2231 = vadd.f32 %v2008, %v2230
        %2232 = vmatmul.bf16.gmra.mxu0 %v2001
        %v2233 = vpop.f32.mrf.mxu0
        %v2234 = vadd.f32 %v2008, %v2233
        %v2235 = vpop.f32.mrf.mxu0
        %v2236 = vadd.f32 %v2008, %v2235
        %2237 = vmatmul.bf16.gmra.mxu0 %v2004
        %v2238 = vpop.f32.mrf.mxu0
        %v2239 = vadd.f32 %v2008, %v2238
        %v2240 = vpop.f32.mrf.mxu0
        %v2241 = vadd.f32 %v2008, %v2240
        %2242 = vdwg.mxu0
        %2243 = vmatpush.bf16.msra.mxu0 %v2121
        %2244 = vmatpush.bf16.msra.mxu0 %v2120
        %2245 = vmatpush.bf16.msra.mxu0 %v2119
        %2246 = vmatpush.bf16.msra.mxu0 %v2118
        %2247 = vmatpush.bf16.msra.mxu0 %v2117
        %2248 = vmatpush.bf16.msra.mxu0 %v2116
        %2249 = vmatpush.bf16.msra.mxu0 %v2115
        %2250 = vmatpush.bf16.msra.mxu0 %v2114
        %2251 = vmatmul.bf16.gmra.mxu0 %v1960
        %v2252 = vpop.f32.mrf.mxu0
        %v2253 = vadd.f32 %v2164, %v2252
        %v2254 = vpop.f32.mrf.mxu0
        %v2255 = vadd.f32 %v2166, %v2254
        %2256 = vmatmul.bf16.gmra.mxu0 %v1963
        %v2257 = vpop.f32.mrf.mxu0
        %v2258 = vadd.f32 %v2169, %v2257
        %v2259 = vpop.f32.mrf.mxu0
        %v2260 = vadd.f32 %v2171, %v2259
        %2261 = vmatmul.bf16.gmra.mxu0 %v1966
        %v2262 = vpop.f32.mrf.mxu0
        %v2263 = vadd.f32 %v2174, %v2262
        %v2264 = vpop.f32.mrf.mxu0
        %v2265 = vadd.f32 %v2176, %v2264
        %2266 = vmatmul.bf16.gmra.mxu0 %v1969
        %v2267 = vpop.f32.mrf.mxu0
        %v2268 = vadd.f32 %v2179, %v2267
        %v2269 = vpop.f32.mrf.mxu0
        %v2270 = vadd.f32 %v2181, %v2269
        %2271 = vmatmul.bf16.gmra.mxu0 %v1972
        %v2272 = vpop.f32.mrf.mxu0
        %v2273 = vadd.f32 %v2184, %v2272
        %v2274 = vpop.f32.mrf.mxu0
        %v2275 = vadd.f32 %v2186, %v2274
        %2276 = vmatmul.bf16.gmra.mxu0 %v1975
        %v2277 = vpop.f32.mrf.mxu0
        %v2278 = vadd.f32 %v2189, %v2277
        %v2279 = vpop.f32.mrf.mxu0
        %v2280 = vadd.f32 %v2191, %v2279
        %2281 = vmatmul.bf16.gmra.mxu0 %v1978
        %v2282 = vpop.f32.mrf.mxu0
        %v2283 = vadd.f32 %v2194, %v2282
        %v2284 = vpop.f32.mrf.mxu0
        %v2285 = vadd.f32 %v2196, %v2284
        %2286 = vmatmul.bf16.gmra.mxu0 %v1981
        %v2287 = vpop.f32.mrf.mxu0
        %v2288 = vadd.f32 %v2199, %v2287
        %v2289 = vpop.f32.mrf.mxu0
        %v2290 = vadd.f32 %v2201, %v2289
        %2291 = vmatmul.bf16.gmra.mxu0 %v1984
        %v2292 = vpop.f32.mrf.mxu0
        %v2293 = vadd.f32 %v2204, %v2292
        %v2294 = vpop.f32.mrf.mxu0
        %v2295 = vadd.f32 %v2206, %v2294
        %2296 = vmatmul.bf16.gmra.mxu0 %v1987
        %v2297 = vpop.f32.mrf.mxu0
        %v2298 = vadd.f32 %v2209, %v2297
        %v2299 = vpop.f32.mrf.mxu0
        %v2300 = vadd.f32 %v2211, %v2299
        %2301 = vmatmul.bf16.gmra.mxu0 %v1990
        %v2302 = vpop.f32.mrf.mxu0
        %v2303 = vadd.f32 %v2214, %v2302
        %v2304 = vpop.f32.mrf.mxu0
        %v2305 = vadd.f32 %v2216, %v2304
        %2306 = vmatmul.bf16.gmra.mxu0 %v1993
        %v2307 = vpop.f32.mrf.mxu0
        %v2308 = vadd.f32 %v2219, %v2307
        %v2309 = vpop.f32.mrf.mxu0
        %v2310 = vadd.f32 %v2221, %v2309
        %2311 = vmatmul.bf16.gmra.mxu0 %v1996
        %v2312 = vpop.f32.mrf.mxu0
        %v2313 = vadd.f32 %v2224, %v2312
        %v2314 = vpop.f32.mrf.mxu0
        %v2315 = vadd.f32 %v2226, %v2314
        %2316 = vmatmul.bf16.gmra.mxu0 %v1999
        %v2317 = vpop.f32.mrf.mxu0
        %v2318 = vadd.f32 %v2229, %v2317
        %v2319 = vpop.f32.mrf.mxu0
        %v2320 = vadd.f32 %v2231, %v2319
        %2321 = vmatmul.bf16.gmra.mxu0 %v2002
        %v2322 = vpop.f32.mrf.mxu0
        %v2323 = vadd.f32 %v2234, %v2322
        %v2324 = vpop.f32.mrf.mxu0
        %v2325 = vadd.f32 %v2236, %v2324
        %2326 = vmatmul.bf16.gmra.mxu0 %v2005
        %v2327 = vpop.f32.mrf.mxu0
        %v2328 = vadd.f32 %v2239, %v2327
        %v2329 = vpop.f32.mrf.mxu0
        %v2330 = vadd.f32 %v2241, %v2329
        %2331 = vdwg.mxu0
        %2332 = vmatpush.bf16.msra.mxu0 %v2129
        %2333 = vmatpush.bf16.msra.mxu0 %v2128
        %2334 = vmatpush.bf16.msra.mxu0 %v2127
        %2335 = vmatpush.bf16.msra.mxu0 %v2126
        %2336 = vmatpush.bf16.msra.mxu0 %v2125
        %2337 = vmatpush.bf16.msra.mxu0 %v2124
        %2338 = vmatpush.bf16.msra.mxu0 %v2123
        %2339 = vmatpush.bf16.msra.mxu0 %v2122
        %2340 = vmatmul.bf16.gmra.mxu0 %v1961
        %v2341 = vpop.f32.mrf.mxu0
        %v2342 = vadd.f32 %v2253, %v2341
        %v2343 = vpop.f32.mrf.mxu0
        %v2344 = vadd.f32 %v2255, %v2343
        %2345 = vmatmul.bf16.gmra.mxu0 %v1964
        %v2346 = vpop.f32.mrf.mxu0
        %v2347 = vadd.f32 %v2258, %v2346
        %v2348 = vpop.f32.mrf.mxu0
        %v2349 = vadd.f32 %v2260, %v2348
        %2350 = vmatmul.bf16.gmra.mxu0 %v1967
        %v2351 = vpop.f32.mrf.mxu0
        %v2352 = vadd.f32 %v2263, %v2351
        %v2353 = vpop.f32.mrf.mxu0
        %v2354 = vadd.f32 %v2265, %v2353
        %2355 = vmatmul.bf16.gmra.mxu0 %v1970
        %v2356 = vpop.f32.mrf.mxu0
        %v2357 = vadd.f32 %v2268, %v2356
        %v2358 = vpop.f32.mrf.mxu0
        %v2359 = vadd.f32 %v2270, %v2358
        %2360 = vmatmul.bf16.gmra.mxu0 %v1973
        %v2361 = vpop.f32.mrf.mxu0
        %v2362 = vadd.f32 %v2273, %v2361
        %v2363 = vpop.f32.mrf.mxu0
        %v2364 = vadd.f32 %v2275, %v2363
        %2365 = vmatmul.bf16.gmra.mxu0 %v1976
        %v2366 = vpop.f32.mrf.mxu0
        %v2367 = vadd.f32 %v2278, %v2366
        %v2368 = vpop.f32.mrf.mxu0
        %v2369 = vadd.f32 %v2280, %v2368
        %2370 = vmatmul.bf16.gmra.mxu0 %v1979
        %v2371 = vpop.f32.mrf.mxu0
        %v2372 = vadd.f32 %v2283, %v2371
        %v2373 = vpop.f32.mrf.mxu0
        %v2374 = vadd.f32 %v2285, %v2373
        %2375 = vmatmul.bf16.gmra.mxu0 %v1982
        %v2376 = vpop.f32.mrf.mxu0
        %v2377 = vadd.f32 %v2288, %v2376
        %v2378 = vpop.f32.mrf.mxu0
        %v2379 = vadd.f32 %v2290, %v2378
        %2380 = vmatmul.bf16.gmra.mxu0 %v1985
        %v2381 = vpop.f32.mrf.mxu0
        %v2382 = vadd.f32 %v2293, %v2381
        %v2383 = vpop.f32.mrf.mxu0
        %v2384 = vadd.f32 %v2295, %v2383
        %2385 = vmatmul.bf16.gmra.mxu0 %v1988
        %v2386 = vpop.f32.mrf.mxu0
        %v2387 = vadd.f32 %v2298, %v2386
        %v2388 = vpop.f32.mrf.mxu0
        %v2389 = vadd.f32 %v2300, %v2388
        %2390 = vmatmul.bf16.gmra.mxu0 %v1991
        %v2391 = vpop.f32.mrf.mxu0
        %v2392 = vadd.f32 %v2303, %v2391
        %v2393 = vpop.f32.mrf.mxu0
        %v2394 = vadd.f32 %v2305, %v2393
        %2395 = vmatmul.bf16.gmra.mxu0 %v1994
        %v2396 = vpop.f32.mrf.mxu0
        %v2397 = vadd.f32 %v2308, %v2396
        %v2398 = vpop.f32.mrf.mxu0
        %v2399 = vadd.f32 %v2310, %v2398
        %2400 = vmatmul.bf16.gmra.mxu0 %v1997
        %v2401 = vpop.f32.mrf.mxu0
        %v2402 = vadd.f32 %v2313, %v2401
        %v2403 = vpop.f32.mrf.mxu0
        %v2404 = vadd.f32 %v2315, %v2403
        %2405 = vmatmul.bf16.gmra.mxu0 %v2000
        %v2406 = vpop.f32.mrf.mxu0
        %v2407 = vadd.f32 %v2318, %v2406
        %v2408 = vpop.f32.mrf.mxu0
        %v2409 = vadd.f32 %v2320, %v2408
        %2410 = vmatmul.bf16.gmra.mxu0 %v2003
        %v2411 = vpop.f32.mrf.mxu0
        %v2412 = vadd.f32 %v2323, %v2411
        %v2413 = vpop.f32.mrf.mxu0
        %v2414 = vadd.f32 %v2325, %v2413
        %2415 = vmatmul.bf16.gmra.mxu0 %v2006
        %v2416 = vpop.f32.mrf.mxu0
        %v2417 = vadd.f32 %v2328, %v2416
        %v2418 = vpop.f32.mrf.mxu0
        %v2419 = vadd.f32 %v2330, %v2418
        %2420 = vdwg.mxu0
        %v2421 = vmax.f32 %v2342, 0.0
        %v2422 = vmax.f32 %v2344, 0.0
        %v2423 = vmax.f32 %v2347, 0.0
        %v2424 = vmax.f32 %v2349, 0.0
        %v2425 = vmax.f32 %v2352, 0.0
        %v2426 = vmax.f32 %v2354, 0.0
        %v2427 = vmax.f32 %v2357, 0.0
        %v2428 = vmax.f32 %v2359, 0.0
        %v2429 = vmax.f32 %v2362, 0.0
        %v2430 = vmax.f32 %v2364, 0.0
        %v2431 = vmax.f32 %v2367, 0.0
        %v2432 = vmax.f32 %v2369, 0.0
        %v2433 = vmax.f32 %v2372, 0.0
        %v2434 = vmax.f32 %v2374, 0.0
        %v2435 = vmax.f32 %v2377, 0.0
        %v2436 = vmax.f32 %v2379, 0.0
        %v2437 = vmax.f32 %v2382, 0.0
        %v2438 = vmax.f32 %v2384, 0.0
        %v2439 = vmax.f32 %v2387, 0.0
        %v2440 = vmax.f32 %v2389, 0.0
        %v2441 = vmax.f32 %v2392, 0.0
        %v2442 = vmax.f32 %v2394, 0.0
        %v2443 = vmax.f32 %v2397, 0.0
        %v2444 = vmax.f32 %v2399, 0.0
        %v2445 = vmax.f32 %v2402, 0.0
        %v2446 = vmax.f32 %v2404, 0.0
        %v2447 = vmax.f32 %v2407, 0.0
        %v2448 = vmax.f32 %v2409, 0.0
        %v2449 = vmax.f32 %v2412, 0.0
        %v2450 = vmax.f32 %v2414, 0.0
        %v2451 = vmax.f32 %v2417, 0.0
        %v2452 = vmax.f32 %v2419, 0.0
        %v2453 = vadd.f32 %v2421, %v534
        %v2454 = vadd.f32 %v2422, %v537
        %v2455 = vadd.f32 %v2423, %v540
        %v2456 = vadd.f32 %v2424, %v543
        %v2457 = vadd.f32 %v2425, %v546
        %v2458 = vadd.f32 %v2426, %v549
        %v2459 = vadd.f32 %v2427, %v552
        %v2460 = vadd.f32 %v2428, %v555
        %v2461 = vadd.f32 %v2429, %v558
        %v2462 = vadd.f32 %v2430, %v561
        %v2463 = vadd.f32 %v2431, %v564
        %v2464 = vadd.f32 %v2432, %v567
        %v2465 = vadd.f32 %v2433, %v570
        %v2466 = vadd.f32 %v2434, %v573
        %v2467 = vadd.f32 %v2435, %v576
        %v2468 = vadd.f32 %v2436, %v579
        %v2469 = vadd.f32 %v2437, %v582
        %v2470 = vadd.f32 %v2438, %v585
        %v2471 = vadd.f32 %v2439, %v588
        %v2472 = vadd.f32 %v2440, %v591
        %v2473 = vadd.f32 %v2441, %v594
        %v2474 = vadd.f32 %v2442, %v597
        %v2475 = vadd.f32 %v2443, %v600
        %v2476 = vadd.f32 %v2444, %v603
        %v2477 = vadd.f32 %v2445, %v606
        %v2478 = vadd.f32 %v2446, %v609
        %v2479 = vadd.f32 %v2447, %v612
        %v2480 = vadd.f32 %v2448, %v615
        %v2481 = vadd.f32 %v2449, %v618
        %v2482 = vadd.f32 %v2450, %v621
        %v2483 = vadd.f32 %v2451, %v624
        %v2484 = vadd.f32 %v2452, %v627
        %s2485 = scalar_lea.vmem %s4, 192
        %v2486 = vld [vmem:[%s2485] sm:$0xf]
        %v2487 = vld [vmem:[%s2485 + $0x4] sm:$0xf]
        %v2488 = vld [vmem:[%s2485 + $0x8] sm:$0xf]
        %v2489 = vld [vmem:[%s2485 + $0xc] sm:$0xf]
        %v2490 = vld [vmem:[%s2485 + $0x10] sm:$0xf]
        %v2491 = vld [vmem:[%s2485 + $0x14] sm:$0xf]
        %v2492 = vld [vmem:[%s2485 + $0x18] sm:$0xf]
        %v2493 = vld [vmem:[%s2485 + $0x1c] sm:$0xf]
        %v2494 = vld [vmem:[%s2485 + $0x20] sm:$0xf]
        %v2495 = vld [vmem:[%s2485 + $0x24] sm:$0xf]
        %v2496 = vld [vmem:[%s2485 + $0x28] sm:$0xf]
        %v2497 = vld [vmem:[%s2485 + $0x2c] sm:$0xf]
        %v2498 = vld [vmem:[%s2485 + $0x30] sm:$0xf]
        %v2499 = vld [vmem:[%s2485 + $0x34] sm:$0xf]
        %v2500 = vld [vmem:[%s2485 + $0x38] sm:$0xf]
        %v2501 = vld [vmem:[%s2485 + $0x3c] sm:$0xf]
        %v2502 = vld [vmem:[%s2485 + $0x40] sm:$0xf]
        %v2503 = vld [vmem:[%s2485 + $0x44] sm:$0xf]
        %v2504 = vld [vmem:[%s2485 + $0x48] sm:$0xf]
        %v2505 = vld [vmem:[%s2485 + $0x4c] sm:$0xf]
        %v2506 = vld [vmem:[%s2485 + $0x50] sm:$0xf]
        %v2507 = vld [vmem:[%s2485 + $0x54] sm:$0xf]
        %v2508 = vld [vmem:[%s2485 + $0x58] sm:$0xf]
        %v2509 = vld [vmem:[%s2485 + $0x5c] sm:$0xf]
        %v2510 = vld [vmem:[%s2485 + $0x60] sm:$0xf]
        %v2511 = vld [vmem:[%s2485 + $0x64] sm:$0xf]
        %v2512 = vld [vmem:[%s2485 + $0x68] sm:$0xf]
        %v2513 = vld [vmem:[%s2485 + $0x6c] sm:$0xf]
        %v2514 = vld [vmem:[%s2485 + $0x70] sm:$0xf]
        %v2515 = vld [vmem:[%s2485 + $0x74] sm:$0xf]
        %v2516 = vld [vmem:[%s2485 + $0x78] sm:$0xf]
        %v2517 = vld [vmem:[%s2485 + $0x7c] sm:$0xf]
        %v2518 = vld [vmem:[%s2485 + $0x80] sm:$0xf]
        %v2519 = vld [vmem:[%s2485 + $0x84] sm:$0xf]
        %v2520 = vld [vmem:[%s2485 + $0x88] sm:$0xf]
        %v2521 = vld [vmem:[%s2485 + $0x8c] sm:$0xf]
        %v2522 = vld [vmem:[%s2485 + $0x90] sm:$0xf]
        %v2523 = vld [vmem:[%s2485 + $0x94] sm:$0xf]
        %v2524 = vld [vmem:[%s2485 + $0x98] sm:$0xf]
        %v2525 = vld [vmem:[%s2485 + $0x9c] sm:$0xf]
        %v2526 = vld [vmem:[%s2485 + $0xa0] sm:$0xf]
        %v2527 = vld [vmem:[%s2485 + $0xa4] sm:$0xf]
        %v2528 = vld [vmem:[%s2485 + $0xa8] sm:$0xf]
        %v2529 = vld [vmem:[%s2485 + $0xac] sm:$0xf]
        %v2530 = vld [vmem:[%s2485 + $0xb0] sm:$0xf]
        %v2531 = vld [vmem:[%s2485 + $0xb4] sm:$0xf]
        %v2532 = vld [vmem:[%s2485 + $0xb8] sm:$0xf]
        %v2533 = vld [vmem:[%s2485 + $0xbc] sm:$0xf]
        %s2534 = scalar_lea.vmem %s5, 1
        %v2535 = vld [vmem:[%s2534] sm:$0x1]
        %vm2568 = vcmask 1043456
        %v2569 = vrot.slane %v2453, 4
        %v2570 = vrot.slane %v2454, 4
        %v2571 = vsel %vm2568, %v2569, %v2570
        %v2572 = vrot.slane %v2455, 4
        %v2573 = vrot.slane %v2456, 4
        %v2574 = vsel %vm2568, %v2572, %v2573
        %v2575 = vrot.slane %v2457, 4
        %v2576 = vrot.slane %v2458, 4
        %v2577 = vsel %vm2568, %v2575, %v2576
        %v2578 = vrot.slane %v2459, 4
        %v2579 = vrot.slane %v2460, 4
        %v2580 = vsel %vm2568, %v2578, %v2579
        %v2581 = vrot.slane %v2461, 4
        %v2582 = vrot.slane %v2462, 4
        %v2583 = vsel %vm2568, %v2581, %v2582
        %v2584 = vrot.slane %v2463, 4
        %v2585 = vrot.slane %v2464, 4
        %v2586 = vsel %vm2568, %v2584, %v2585
        %v2587 = vrot.slane %v2465, 4
        %v2588 = vrot.slane %v2466, 4
        %v2589 = vsel %vm2568, %v2587, %v2588
        %v2590 = vrot.slane %v2467, 4
        %v2591 = vrot.slane %v2468, 4
        %v2592 = vsel %vm2568, %v2590, %v2591
        %v2593 = vrot.slane %v2469, 4
        %v2594 = vrot.slane %v2470, 4
        %v2595 = vsel %vm2568, %v2593, %v2594
        %v2596 = vrot.slane %v2471, 4
        %v2597 = vrot.slane %v2472, 4
        %v2598 = vsel %vm2568, %v2596, %v2597
        %v2599 = vrot.slane %v2473, 4
        %v2600 = vrot.slane %v2474, 4
        %v2601 = vsel %vm2568, %v2599, %v2600
        %v2602 = vrot.slane %v2475, 4
        %v2603 = vrot.slane %v2476, 4
        %v2604 = vsel %vm2568, %v2602, %v2603
        %v2605 = vrot.slane %v2477, 4
        %v2606 = vrot.slane %v2478, 4
        %v2607 = vsel %vm2568, %v2605, %v2606
        %v2608 = vrot.slane %v2479, 4
        %v2609 = vrot.slane %v2480, 4
        %v2610 = vsel %vm2568, %v2608, %v2609
        %v2611 = vrot.slane %v2481, 4
        %v2612 = vrot.slane %v2482, 4
        %v2613 = vsel %vm2568, %v2611, %v2612
        %v2614 = vrot.slane %v2483, 4
        %v2615 = vrot.slane %v2484, 4
        %v2616 = vsel %vm2568, %v2614, %v2615
        %v2649 = vsel %vm2568, 0.0, %v2569
        %v2650 = vsel %vm2568, 0.0, %v2572
        %v2651 = vsel %vm2568, 0.0, %v2575
        %v2652 = vsel %vm2568, 0.0, %v2578
        %v2653 = vsel %vm2568, 0.0, %v2581
        %v2654 = vsel %vm2568, 0.0, %v2584
        %v2655 = vsel %vm2568, 0.0, %v2587
        %v2656 = vsel %vm2568, 0.0, %v2590
        %v2657 = vsel %vm2568, 0.0, %v2593
        %v2658 = vsel %vm2568, 0.0, %v2596
        %v2659 = vsel %vm2568, 0.0, %v2599
        %v2660 = vsel %vm2568, 0.0, %v2602
        %v2661 = vsel %vm2568, 0.0, %v2605
        %v2662 = vsel %vm2568, 0.0, %v2608
        %v2663 = vsel %vm2568, 0.0, %v2611
        %v2664 = vsel %vm2568, 0.0, %v2614
        %v2681 = vrot.slane %v2649, 2
        %v2682 = vrot.slane %v2571, 2
        %v2683 = vsel %vm512, %v2681, %v2682
        %v2684 = vrot.slane %v2570, 2
        %v2685 = vsel %vm512, %v2682, %v2684
        %v2686 = vrot.slane %v2650, 2
        %v2687 = vrot.slane %v2574, 2
        %v2688 = vsel %vm512, %v2686, %v2687
        %v2689 = vrot.slane %v2573, 2
        %v2690 = vsel %vm512, %v2687, %v2689
        %v2691 = vrot.slane %v2651, 2
        %v2692 = vrot.slane %v2577, 2
        %v2693 = vsel %vm512, %v2691, %v2692
        %v2694 = vrot.slane %v2576, 2
        %v2695 = vsel %vm512, %v2692, %v2694
        %v2696 = vrot.slane %v2652, 2
        %v2697 = vrot.slane %v2580, 2
        %v2698 = vsel %vm512, %v2696, %v2697
        %v2699 = vrot.slane %v2579, 2
        %v2700 = vsel %vm512, %v2697, %v2699
        %v2701 = vrot.slane %v2653, 2
        %v2702 = vrot.slane %v2583, 2
        %v2703 = vsel %vm512, %v2701, %v2702
        %v2704 = vrot.slane %v2582, 2
        %v2705 = vsel %vm512, %v2702, %v2704
        %v2706 = vrot.slane %v2654, 2
        %v2707 = vrot.slane %v2586, 2
        %v2708 = vsel %vm512, %v2706, %v2707
        %v2709 = vrot.slane %v2585, 2
        %v2710 = vsel %vm512, %v2707, %v2709
        %v2711 = vrot.slane %v2655, 2
        %v2712 = vrot.slane %v2589, 2
        %v2713 = vsel %vm512, %v2711, %v2712
        %v2714 = vrot.slane %v2588, 2
        %v2715 = vsel %vm512, %v2712, %v2714
        %v2716 = vrot.slane %v2656, 2
        %v2717 = vrot.slane %v2592, 2
        %v2718 = vsel %vm512, %v2716, %v2717
        %v2719 = vrot.slane %v2591, 2
        %v2720 = vsel %vm512, %v2717, %v2719
        %v2721 = vrot.slane %v2657, 2
        %v2722 = vrot.slane %v2595, 2
        %v2723 = vsel %vm512, %v2721, %v2722
        %v2724 = vrot.slane %v2594, 2
        %v2725 = vsel %vm512, %v2722, %v2724
        %v2726 = vrot.slane %v2658, 2
        %v2727 = vrot.slane %v2598, 2
        %v2728 = vsel %vm512, %v2726, %v2727
        %v2729 = vrot.slane %v2597, 2
        %v2730 = vsel %vm512, %v2727, %v2729
        %v2731 = vrot.slane %v2659, 2
        %v2732 = vrot.slane %v2601, 2
        %v2733 = vsel %vm512, %v2731, %v2732
        %v2734 = vrot.slane %v2600, 2
        %v2735 = vsel %vm512, %v2732, %v2734
        %v2736 = vrot.slane %v2660, 2
        %v2737 = vrot.slane %v2604, 2
        %v2738 = vsel %vm512, %v2736, %v2737
        %v2739 = vrot.slane %v2603, 2
        %v2740 = vsel %vm512, %v2737, %v2739
        %v2741 = vrot.slane %v2661, 2
        %v2742 = vrot.slane %v2607, 2
        %v2743 = vsel %vm512, %v2741, %v2742
        %v2744 = vrot.slane %v2606, 2
        %v2745 = vsel %vm512, %v2742, %v2744
        %v2746 = vrot.slane %v2662, 2
        %v2747 = vrot.slane %v2610, 2
        %v2748 = vsel %vm512, %v2746, %v2747
        %v2749 = vrot.slane %v2609, 2
        %v2750 = vsel %vm512, %v2747, %v2749
        %v2751 = vrot.slane %v2663, 2
        %v2752 = vrot.slane %v2613, 2
        %v2753 = vsel %vm512, %v2751, %v2752
        %v2754 = vrot.slane %v2612, 2
        %v2755 = vsel %vm512, %v2752, %v2754
        %v2756 = vrot.slane %v2664, 2
        %v2757 = vrot.slane %v2616, 2
        %v2758 = vsel %vm512, %v2756, %v2757
        %v2759 = vrot.slane %v2615, 2
        %v2760 = vsel %vm512, %v2757, %v2759
        %v2793 = vrot.slane %v2649, 4
        %v2794 = vrot.slane %v2571, 4
        %v2795 = vsel %vm2568, %v2793, %v2794
        %v2796 = vrot.slane %v2570, 4
        %v2797 = vsel %vm2568, %v2794, %v2796
        %v2798 = vrot.slane %v2650, 4
        %v2799 = vrot.slane %v2574, 4
        %v2800 = vsel %vm2568, %v2798, %v2799
        %v2801 = vrot.slane %v2573, 4
        %v2802 = vsel %vm2568, %v2799, %v2801
        %v2803 = vrot.slane %v2651, 4
        %v2804 = vrot.slane %v2577, 4
        %v2805 = vsel %vm2568, %v2803, %v2804
        %v2806 = vrot.slane %v2576, 4
        %v2807 = vsel %vm2568, %v2804, %v2806
        %v2808 = vrot.slane %v2652, 4
        %v2809 = vrot.slane %v2580, 4
        %v2810 = vsel %vm2568, %v2808, %v2809
        %v2811 = vrot.slane %v2579, 4
        %v2812 = vsel %vm2568, %v2809, %v2811
        %v2813 = vrot.slane %v2653, 4
        %v2814 = vrot.slane %v2583, 4
        %v2815 = vsel %vm2568, %v2813, %v2814
        %v2816 = vrot.slane %v2582, 4
        %v2817 = vsel %vm2568, %v2814, %v2816
        %v2818 = vrot.slane %v2654, 4
        %v2819 = vrot.slane %v2586, 4
        %v2820 = vsel %vm2568, %v2818, %v2819
        %v2821 = vrot.slane %v2585, 4
        %v2822 = vsel %vm2568, %v2819, %v2821
        %v2823 = vrot.slane %v2655, 4
        %v2824 = vrot.slane %v2589, 4
        %v2825 = vsel %vm2568, %v2823, %v2824
        %v2826 = vrot.slane %v2588, 4
        %v2827 = vsel %vm2568, %v2824, %v2826
        %v2828 = vrot.slane %v2656, 4
        %v2829 = vrot.slane %v2592, 4
        %v2830 = vsel %vm2568, %v2828, %v2829
        %v2831 = vrot.slane %v2591, 4
        %v2832 = vsel %vm2568, %v2829, %v2831
        %v2833 = vrot.slane %v2657, 4
        %v2834 = vrot.slane %v2595, 4
        %v2835 = vsel %vm2568, %v2833, %v2834
        %v2836 = vrot.slane %v2594, 4
        %v2837 = vsel %vm2568, %v2834, %v2836
        %v2838 = vrot.slane %v2658, 4
        %v2839 = vrot.slane %v2598, 4
        %v2840 = vsel %vm2568, %v2838, %v2839
        %v2841 = vrot.slane %v2597, 4
        %v2842 = vsel %vm2568, %v2839, %v2841
        %v2843 = vrot.slane %v2659, 4
        %v2844 = vrot.slane %v2601, 4
        %v2845 = vsel %vm2568, %v2843, %v2844
        %v2846 = vrot.slane %v2600, 4
        %v2847 = vsel %vm2568, %v2844, %v2846
        %v2848 = vrot.slane %v2660, 4
        %v2849 = vrot.slane %v2604, 4
        %v2850 = vsel %vm2568, %v2848, %v2849
        %v2851 = vrot.slane %v2603, 4
        %v2852 = vsel %vm2568, %v2849, %v2851
        %v2853 = vrot.slane %v2661, 4
        %v2854 = vrot.slane %v2607, 4
        %v2855 = vsel %vm2568, %v2853, %v2854
        %v2856 = vrot.slane %v2606, 4
        %v2857 = vsel %vm2568, %v2854, %v2856
        %v2858 = vrot.slane %v2662, 4
        %v2859 = vrot.slane %v2610, 4
        %v2860 = vsel %vm2568, %v2858, %v2859
        %v2861 = vrot.slane %v2609, 4
        %v2862 = vsel %vm2568, %v2859, %v2861
        %v2863 = vrot.slane %v2663, 4
        %v2864 = vrot.slane %v2613, 4
        %v2865 = vsel %vm2568, %v2863, %v2864
        %v2866 = vrot.slane %v2612, 4
        %v2867 = vsel %vm2568, %v2864, %v2866
        %v2868 = vrot.slane %v2664, 4
        %v2869 = vrot.slane %v2616, 4
        %v2870 = vsel %vm2568, %v2868, %v2869
        %v2871 = vrot.slane %v2615, 4
        %v2872 = vsel %vm2568, %v2869, %v2871
        %v2905 = vpack.c.bf16 %v2571, %v2649
        %v2906 = vpack.c.bf16 %v2685, %v2683
        %v2907 = vpack.c.bf16 %v2797, %v2795
        %v2908 = vpack.c.bf16 %v2574, %v2650
        %v2909 = vpack.c.bf16 %v2690, %v2688
        %v2910 = vpack.c.bf16 %v2802, %v2800
        %v2911 = vpack.c.bf16 %v2577, %v2651
        %v2912 = vpack.c.bf16 %v2695, %v2693
        %v2913 = vpack.c.bf16 %v2807, %v2805
        %v2914 = vpack.c.bf16 %v2580, %v2652
        %v2915 = vpack.c.bf16 %v2700, %v2698
        %v2916 = vpack.c.bf16 %v2812, %v2810
        %v2917 = vpack.c.bf16 %v2583, %v2653
        %v2918 = vpack.c.bf16 %v2705, %v2703
        %v2919 = vpack.c.bf16 %v2817, %v2815
        %v2920 = vpack.c.bf16 %v2586, %v2654
        %v2921 = vpack.c.bf16 %v2710, %v2708
        %v2922 = vpack.c.bf16 %v2822, %v2820
        %v2923 = vpack.c.bf16 %v2589, %v2655
        %v2924 = vpack.c.bf16 %v2715, %v2713
        %v2925 = vpack.c.bf16 %v2827, %v2825
        %v2926 = vpack.c.bf16 %v2592, %v2656
        %v2927 = vpack.c.bf16 %v2720, %v2718
        %v2928 = vpack.c.bf16 %v2832, %v2830
        %v2929 = vpack.c.bf16 %v2595, %v2657
        %v2930 = vpack.c.bf16 %v2725, %v2723
        %v2931 = vpack.c.bf16 %v2837, %v2835
        %v2932 = vpack.c.bf16 %v2598, %v2658
        %v2933 = vpack.c.bf16 %v2730, %v2728
        %v2934 = vpack.c.bf16 %v2842, %v2840
        %v2935 = vpack.c.bf16 %v2601, %v2659
        %v2936 = vpack.c.bf16 %v2735, %v2733
        %v2937 = vpack.c.bf16 %v2847, %v2845
        %v2938 = vpack.c.bf16 %v2604, %v2660
        %v2939 = vpack.c.bf16 %v2740, %v2738
        %v2940 = vpack.c.bf16 %v2852, %v2850
        %v2941 = vpack.c.bf16 %v2607, %v2661
        %v2942 = vpack.c.bf16 %v2745, %v2743
        %v2943 = vpack.c.bf16 %v2857, %v2855
        %v2944 = vpack.c.bf16 %v2610, %v2662
        %v2945 = vpack.c.bf16 %v2750, %v2748
        %v2946 = vpack.c.bf16 %v2862, %v2860
        %v2947 = vpack.c.bf16 %v2613, %v2663
        %v2948 = vpack.c.bf16 %v2755, %v2753
        %v2949 = vpack.c.bf16 %v2867, %v2865
        %v2950 = vpack.c.bf16 %v2616, %v2664
        %v2951 = vpack.c.bf16 %v2760, %v2758
        %v2952 = vpack.c.bf16 %v2872, %v2870
        %v2954 = vperm.slane %v2535, 0
        %v3004 = vunpack.c.l.b16 %v2486
        %v3005 = vunpack.c.l.b16 %v2487
        %v3006 = vunpack.c.l.b16 %v2488
        %v3007 = vunpack.c.l.b16 %v2489
        %v3008 = vunpack.c.l.b16 %v2490
        %v3009 = vunpack.c.l.b16 %v2491
        %v3010 = vunpack.c.l.b16 %v2492
        %v3011 = vunpack.c.l.b16 %v2493
        %v3012 = vunpack.c.l.b16 %v2494
        %v3013 = vunpack.c.l.b16 %v2495
        %v3014 = vunpack.c.l.b16 %v2496
        %v3015 = vunpack.c.l.b16 %v2497
        %v3016 = vunpack.c.l.b16 %v2498
        %v3017 = vunpack.c.l.b16 %v2499
        %v3018 = vunpack.c.l.b16 %v2500
        %v3019 = vunpack.c.l.b16 %v2501
        %v3020 = vunpack.c.l.b16 %v2502
        %v3021 = vunpack.c.l.b16 %v2503
        %v3022 = vunpack.c.l.b16 %v2504
        %v3023 = vunpack.c.l.b16 %v2505
        %v3024 = vunpack.c.l.b16 %v2506
        %v3025 = vunpack.c.l.b16 %v2507
        %v3026 = vunpack.c.l.b16 %v2508
        %v3027 = vunpack.c.l.b16 %v2509
        %v3028 = vunpack.c.l.b16 %v2510
        %v3029 = vunpack.c.l.b16 %v2511
        %v3030 = vunpack.c.l.b16 %v2512
        %v3031 = vunpack.c.l.b16 %v2513
        %v3032 = vunpack.c.l.b16 %v2514
        %v3033 = vunpack.c.l.b16 %v2515
        %v3034 = vunpack.c.l.b16 %v2516
        %v3035 = vunpack.c.l.b16 %v2517
        %v3036 = vunpack.c.l.b16 %v2518
        %v3037 = vunpack.c.l.b16 %v2519
        %v3038 = vunpack.c.l.b16 %v2520
        %v3039 = vunpack.c.l.b16 %v2521
        %v3040 = vunpack.c.l.b16 %v2522
        %v3041 = vunpack.c.l.b16 %v2523
        %v3042 = vunpack.c.l.b16 %v2524
        %v3043 = vunpack.c.l.b16 %v2525
        %v3044 = vunpack.c.l.b16 %v2526
        %v3045 = vunpack.c.l.b16 %v2527
        %v3046 = vunpack.c.l.b16 %v2528
        %v3047 = vunpack.c.l.b16 %v2529
        %v3048 = vunpack.c.l.b16 %v2530
        %v3049 = vunpack.c.l.b16 %v2531
        %v3050 = vunpack.c.l.b16 %v2532
        %v3051 = vunpack.c.l.b16 %v2533
        %v3052 = vpack.c.b16 %v3005, %v3004
        %v3053 = vpack.c.b16 %v3007, %v3006
        %v3054 = vpack.c.b16 %v3009, %v3008
        %v3055 = vpack.c.b16 %v3011, %v3010
        %v3056 = vpack.c.b16 %v3013, %v3012
        %v3057 = vpack.c.b16 %v3015, %v3014
        %v3058 = vpack.c.b16 %v3017, %v3016
        %v3059 = vpack.c.b16 %v3019, %v3018
        %v3060 = vpack.c.b16 %v3021, %v3020
        %v3061 = vpack.c.b16 %v3023, %v3022
        %v3062 = vpack.c.b16 %v3025, %v3024
        %v3063 = vpack.c.b16 %v3027, %v3026
        %v3064 = vpack.c.b16 %v3029, %v3028
        %v3065 = vpack.c.b16 %v3031, %v3030
        %v3066 = vpack.c.b16 %v3033, %v3032
        %v3067 = vpack.c.b16 %v3035, %v3034
        %v3068 = vpack.c.b16 %v3037, %v3036
        %v3069 = vpack.c.b16 %v3039, %v3038
        %v3070 = vpack.c.b16 %v3041, %v3040
        %v3071 = vpack.c.b16 %v3043, %v3042
        %v3072 = vpack.c.b16 %v3045, %v3044
        %v3073 = vpack.c.b16 %v3047, %v3046
        %v3074 = vpack.c.b16 %v3049, %v3048
        %v3075 = vpack.c.b16 %v3051, %v3050
        %3100 = vmatpush.bf16.msra.mxu0 %v3059
        %3101 = vmatpush.bf16.msra.mxu0 %v3058
        %3102 = vmatpush.bf16.msra.mxu0 %v3057
        %3103 = vmatpush.bf16.msra.mxu0 %v3056
        %3104 = vmatpush.bf16.msra.mxu0 %v3055
        %3105 = vmatpush.bf16.msra.mxu0 %v3054
        %3106 = vmatpush.bf16.msra.mxu0 %v3053
        %3107 = vmatpush.bf16.msra.mxu0 %v3052
        %3108 = vmatmul.bf16.gmra.mxu0 %v2905
        %v3109 = vpop.f32.mrf.mxu0
        %v3110 = vadd.f32 %v2954, %v3109
        %v3111 = vpop.f32.mrf.mxu0
        %v3112 = vadd.f32 %v2954, %v3111
        %3113 = vmatmul.bf16.gmra.mxu0 %v2908
        %v3114 = vpop.f32.mrf.mxu0
        %v3115 = vadd.f32 %v2954, %v3114
        %v3116 = vpop.f32.mrf.mxu0
        %v3117 = vadd.f32 %v2954, %v3116
        %3118 = vmatmul.bf16.gmra.mxu0 %v2911
        %v3119 = vpop.f32.mrf.mxu0
        %v3120 = vadd.f32 %v2954, %v3119
        %v3121 = vpop.f32.mrf.mxu0
        %v3122 = vadd.f32 %v2954, %v3121
        %3123 = vmatmul.bf16.gmra.mxu0 %v2914
        %v3124 = vpop.f32.mrf.mxu0
        %v3125 = vadd.f32 %v2954, %v3124
        %v3126 = vpop.f32.mrf.mxu0
        %v3127 = vadd.f32 %v2954, %v3126
        %3128 = vmatmul.bf16.gmra.mxu0 %v2917
        %v3129 = vpop.f32.mrf.mxu0
        %v3130 = vadd.f32 %v2954, %v3129
        %v3131 = vpop.f32.mrf.mxu0
        %v3132 = vadd.f32 %v2954, %v3131
        %3133 = vmatmul.bf16.gmra.mxu0 %v2920
        %v3134 = vpop.f32.mrf.mxu0
        %v3135 = vadd.f32 %v2954, %v3134
        %v3136 = vpop.f32.mrf.mxu0
        %v3137 = vadd.f32 %v2954, %v3136
        %3138 = vmatmul.bf16.gmra.mxu0 %v2923
        %v3139 = vpop.f32.mrf.mxu0
        %v3140 = vadd.f32 %v2954, %v3139
        %v3141 = vpop.f32.mrf.mxu0
        %v3142 = vadd.f32 %v2954, %v3141
        %3143 = vmatmul.bf16.gmra.mxu0 %v2926
        %v3144 = vpop.f32.mrf.mxu0
        %v3145 = vadd.f32 %v2954, %v3144
        %v3146 = vpop.f32.mrf.mxu0
        %v3147 = vadd.f32 %v2954, %v3146
        %3148 = vmatmul.bf16.gmra.mxu0 %v2929
        %v3149 = vpop.f32.mrf.mxu0
        %v3150 = vadd.f32 %v2954, %v3149
        %v3151 = vpop.f32.mrf.mxu0
        %v3152 = vadd.f32 %v2954, %v3151
        %3153 = vmatmul.bf16.gmra.mxu0 %v2932
        %v3154 = vpop.f32.mrf.mxu0
        %v3155 = vadd.f32 %v2954, %v3154
        %v3156 = vpop.f32.mrf.mxu0
        %v3157 = vadd.f32 %v2954, %v3156
        %3158 = vmatmul.bf16.gmra.mxu0 %v2935
        %v3159 = vpop.f32.mrf.mxu0
        %v3160 = vadd.f32 %v2954, %v3159
        %v3161 = vpop.f32.mrf.mxu0
        %v3162 = vadd.f32 %v2954, %v3161
        %3163 = vmatmul.bf16.gmra.mxu0 %v2938
        %v3164 = vpop.f32.mrf.mxu0
        %v3165 = vadd.f32 %v2954, %v3164
        %v3166 = vpop.f32.mrf.mxu0
        %v3167 = vadd.f32 %v2954, %v3166
        %3168 = vmatmul.bf16.gmra.mxu0 %v2941
        %v3169 = vpop.f32.mrf.mxu0
        %v3170 = vadd.f32 %v2954, %v3169
        %v3171 = vpop.f32.mrf.mxu0
        %v3172 = vadd.f32 %v2954, %v3171
        %3173 = vmatmul.bf16.gmra.mxu0 %v2944
        %v3174 = vpop.f32.mrf.mxu0
        %v3175 = vadd.f32 %v2954, %v3174
        %v3176 = vpop.f32.mrf.mxu0
        %v3177 = vadd.f32 %v2954, %v3176
        %3178 = vmatmul.bf16.gmra.mxu0 %v2947
        %v3179 = vpop.f32.mrf.mxu0
        %v3180 = vadd.f32 %v2954, %v3179
        %v3181 = vpop.f32.mrf.mxu0
        %v3182 = vadd.f32 %v2954, %v3181
        %3183 = vmatmul.bf16.gmra.mxu0 %v2950
        %v3184 = vpop.f32.mrf.mxu0
        %v3185 = vadd.f32 %v2954, %v3184
        %v3186 = vpop.f32.mrf.mxu0
        %v3187 = vadd.f32 %v2954, %v3186
        %3188 = vdwg.mxu0
        %3189 = vmatpush.bf16.msra.mxu0 %v3067
        %3190 = vmatpush.bf16.msra.mxu0 %v3066
        %3191 = vmatpush.bf16.msra.mxu0 %v3065
        %3192 = vmatpush.bf16.msra.mxu0 %v3064
        %3193 = vmatpush.bf16.msra.mxu0 %v3063
        %3194 = vmatpush.bf16.msra.mxu0 %v3062
        %3195 = vmatpush.bf16.msra.mxu0 %v3061
        %3196 = vmatpush.bf16.msra.mxu0 %v3060
        %3197 = vmatmul.bf16.gmra.mxu0 %v2906
        %v3198 = vpop.f32.mrf.mxu0
        %v3199 = vadd.f32 %v3110, %v3198
        %v3200 = vpop.f32.mrf.mxu0
        %v3201 = vadd.f32 %v3112, %v3200
        %3202 = vmatmul.bf16.gmra.mxu0 %v2909
        %v3203 = vpop.f32.mrf.mxu0
        %v3204 = vadd.f32 %v3115, %v3203
        %v3205 = vpop.f32.mrf.mxu0
        %v3206 = vadd.f32 %v3117, %v3205
        %3207 = vmatmul.bf16.gmra.mxu0 %v2912
        %v3208 = vpop.f32.mrf.mxu0
        %v3209 = vadd.f32 %v3120, %v3208
        %v3210 = vpop.f32.mrf.mxu0
        %v3211 = vadd.f32 %v3122, %v3210
        %3212 = vmatmul.bf16.gmra.mxu0 %v2915
        %v3213 = vpop.f32.mrf.mxu0
        %v3214 = vadd.f32 %v3125, %v3213
        %v3215 = vpop.f32.mrf.mxu0
        %v3216 = vadd.f32 %v3127, %v3215
        %3217 = vmatmul.bf16.gmra.mxu0 %v2918
        %v3218 = vpop.f32.mrf.mxu0
        %v3219 = vadd.f32 %v3130, %v3218
        %v3220 = vpop.f32.mrf.mxu0
        %v3221 = vadd.f32 %v3132, %v3220
        %3222 = vmatmul.bf16.gmra.mxu0 %v2921
        %v3223 = vpop.f32.mrf.mxu0
        %v3224 = vadd.f32 %v3135, %v3223
        %v3225 = vpop.f32.mrf.mxu0
        %v3226 = vadd.f32 %v3137, %v3225
        %3227 = vmatmul.bf16.gmra.mxu0 %v2924
        %v3228 = vpop.f32.mrf.mxu0
        %v3229 = vadd.f32 %v3140, %v3228
        %v3230 = vpop.f32.mrf.mxu0
        %v3231 = vadd.f32 %v3142, %v3230
        %3232 = vmatmul.bf16.gmra.mxu0 %v2927
        %v3233 = vpop.f32.mrf.mxu0
        %v3234 = vadd.f32 %v3145, %v3233
        %v3235 = vpop.f32.mrf.mxu0
        %v3236 = vadd.f32 %v3147, %v3235
        %3237 = vmatmul.bf16.gmra.mxu0 %v2930
        %v3238 = vpop.f32.mrf.mxu0
        %v3239 = vadd.f32 %v3150, %v3238
        %v3240 = vpop.f32.mrf.mxu0
        %v3241 = vadd.f32 %v3152, %v3240
        %3242 = vmatmul.bf16.gmra.mxu0 %v2933
        %v3243 = vpop.f32.mrf.mxu0
        %v3244 = vadd.f32 %v3155, %v3243
        %v3245 = vpop.f32.mrf.mxu0
        %v3246 = vadd.f32 %v3157, %v3245
        %3247 = vmatmul.bf16.gmra.mxu0 %v2936
        %v3248 = vpop.f32.mrf.mxu0
        %v3249 = vadd.f32 %v3160, %v3248
        %v3250 = vpop.f32.mrf.mxu0
        %v3251 = vadd.f32 %v3162, %v3250
        %3252 = vmatmul.bf16.gmra.mxu0 %v2939
        %v3253 = vpop.f32.mrf.mxu0
        %v3254 = vadd.f32 %v3165, %v3253
        %v3255 = vpop.f32.mrf.mxu0
        %v3256 = vadd.f32 %v3167, %v3255
        %3257 = vmatmul.bf16.gmra.mxu0 %v2942
        %v3258 = vpop.f32.mrf.mxu0
        %v3259 = vadd.f32 %v3170, %v3258
        %v3260 = vpop.f32.mrf.mxu0
        %v3261 = vadd.f32 %v3172, %v3260
        %3262 = vmatmul.bf16.gmra.mxu0 %v2945
        %v3263 = vpop.f32.mrf.mxu0
        %v3264 = vadd.f32 %v3175, %v3263
        %v3265 = vpop.f32.mrf.mxu0
        %v3266 = vadd.f32 %v3177, %v3265
        %3267 = vmatmul.bf16.gmra.mxu0 %v2948
        %v3268 = vpop.f32.mrf.mxu0
        %v3269 = vadd.f32 %v3180, %v3268
        %v3270 = vpop.f32.mrf.mxu0
        %v3271 = vadd.f32 %v3182, %v3270
        %3272 = vmatmul.bf16.gmra.mxu0 %v2951
        %v3273 = vpop.f32.mrf.mxu0
        %v3274 = vadd.f32 %v3185, %v3273
        %v3275 = vpop.f32.mrf.mxu0
        %v3276 = vadd.f32 %v3187, %v3275
        %3277 = vdwg.mxu0
        %3278 = vmatpush.bf16.msra.mxu0 %v3075
        %3279 = vmatpush.bf16.msra.mxu0 %v3074
        %3280 = vmatpush.bf16.msra.mxu0 %v3073
        %3281 = vmatpush.bf16.msra.mxu0 %v3072
        %3282 = vmatpush.bf16.msra.mxu0 %v3071
        %3283 = vmatpush.bf16.msra.mxu0 %v3070
        %3284 = vmatpush.bf16.msra.mxu0 %v3069
        %3285 = vmatpush.bf16.msra.mxu0 %v3068
        %3286 = vmatmul.bf16.gmra.mxu0 %v2907
        %v3287 = vpop.f32.mrf.mxu0
        %v3288 = vadd.f32 %v3199, %v3287
        %v3289 = vpop.f32.mrf.mxu0
        %v3290 = vadd.f32 %v3201, %v3289
        %3291 = vmatmul.bf16.gmra.mxu0 %v2910
        %v3292 = vpop.f32.mrf.mxu0
        %v3293 = vadd.f32 %v3204, %v3292
        %v3294 = vpop.f32.mrf.mxu0
        %v3295 = vadd.f32 %v3206, %v3294
        %3296 = vmatmul.bf16.gmra.mxu0 %v2913
        %v3297 = vpop.f32.mrf.mxu0
        %v3298 = vadd.f32 %v3209, %v3297
        %v3299 = vpop.f32.mrf.mxu0
        %v3300 = vadd.f32 %v3211, %v3299
        %3301 = vmatmul.bf16.gmra.mxu0 %v2916
        %v3302 = vpop.f32.mrf.mxu0
        %v3303 = vadd.f32 %v3214, %v3302
        %v3304 = vpop.f32.mrf.mxu0
        %v3305 = vadd.f32 %v3216, %v3304
        %3306 = vmatmul.bf16.gmra.mxu0 %v2919
        %v3307 = vpop.f32.mrf.mxu0
        %v3308 = vadd.f32 %v3219, %v3307
        %v3309 = vpop.f32.mrf.mxu0
        %v3310 = vadd.f32 %v3221, %v3309
        %3311 = vmatmul.bf16.gmra.mxu0 %v2922
        %v3312 = vpop.f32.mrf.mxu0
        %v3313 = vadd.f32 %v3224, %v3312
        %v3314 = vpop.f32.mrf.mxu0
        %v3315 = vadd.f32 %v3226, %v3314
        %3316 = vmatmul.bf16.gmra.mxu0 %v2925
        %v3317 = vpop.f32.mrf.mxu0
        %v3318 = vadd.f32 %v3229, %v3317
        %v3319 = vpop.f32.mrf.mxu0
        %v3320 = vadd.f32 %v3231, %v3319
        %3321 = vmatmul.bf16.gmra.mxu0 %v2928
        %v3322 = vpop.f32.mrf.mxu0
        %v3323 = vadd.f32 %v3234, %v3322
        %v3324 = vpop.f32.mrf.mxu0
        %v3325 = vadd.f32 %v3236, %v3324
        %3326 = vmatmul.bf16.gmra.mxu0 %v2931
        %v3327 = vpop.f32.mrf.mxu0
        %v3328 = vadd.f32 %v3239, %v3327
        %v3329 = vpop.f32.mrf.mxu0
        %v3330 = vadd.f32 %v3241, %v3329
        %3331 = vmatmul.bf16.gmra.mxu0 %v2934
        %v3332 = vpop.f32.mrf.mxu0
        %v3333 = vadd.f32 %v3244, %v3332
        %v3334 = vpop.f32.mrf.mxu0
        %v3335 = vadd.f32 %v3246, %v3334
        %3336 = vmatmul.bf16.gmra.mxu0 %v2937
        %v3337 = vpop.f32.mrf.mxu0
        %v3338 = vadd.f32 %v3249, %v3337
        %v3339 = vpop.f32.mrf.mxu0
        %v3340 = vadd.f32 %v3251, %v3339
        %3341 = vmatmul.bf16.gmra.mxu0 %v2940
        %v3342 = vpop.f32.mrf.mxu0
        %v3343 = vadd.f32 %v3254, %v3342
        %v3344 = vpop.f32.mrf.mxu0
        %v3345 = vadd.f32 %v3256, %v3344
        %3346 = vmatmul.bf16.gmra.mxu0 %v2943
        %v3347 = vpop.f32.mrf.mxu0
        %v3348 = vadd.f32 %v3259, %v3347
        %v3349 = vpop.f32.mrf.mxu0
        %v3350 = vadd.f32 %v3261, %v3349
        %3351 = vmatmul.bf16.gmra.mxu0 %v2946
        %v3352 = vpop.f32.mrf.mxu0
        %v3353 = vadd.f32 %v3264, %v3352
        %v3354 = vpop.f32.mrf.mxu0
        %v3355 = vadd.f32 %v3266, %v3354
        %3356 = vmatmul.bf16.gmra.mxu0 %v2949
        %v3357 = vpop.f32.mrf.mxu0
        %v3358 = vadd.f32 %v3269, %v3357
        %v3359 = vpop.f32.mrf.mxu0
        %v3360 = vadd.f32 %v3271, %v3359
        %3361 = vmatmul.bf16.gmra.mxu0 %v2952
        %v3362 = vpop.f32.mrf.mxu0
        %v3363 = vadd.f32 %v3274, %v3362
        %v3364 = vpop.f32.mrf.mxu0
        %v3365 = vadd.f32 %v3276, %v3364
        %3366 = vdwg.mxu0
        %v3367 = vmax.f32 %v3288, 0.0
        %v3368 = vmax.f32 %v3290, 0.0
        %v3369 = vmax.f32 %v3293, 0.0
        %v3370 = vmax.f32 %v3295, 0.0
        %v3371 = vmax.f32 %v3298, 0.0
        %v3372 = vmax.f32 %v3300, 0.0
        %v3373 = vmax.f32 %v3303, 0.0
        %v3374 = vmax.f32 %v3305, 0.0
        %v3375 = vmax.f32 %v3308, 0.0
        %v3376 = vmax.f32 %v3310, 0.0
        %v3377 = vmax.f32 %v3313, 0.0
        %v3378 = vmax.f32 %v3315, 0.0
        %v3379 = vmax.f32 %v3318, 0.0
        %v3380 = vmax.f32 %v3320, 0.0
        %v3381 = vmax.f32 %v3323, 0.0
        %v3382 = vmax.f32 %v3325, 0.0
        %v3383 = vmax.f32 %v3328, 0.0
        %v3384 = vmax.f32 %v3330, 0.0
        %v3385 = vmax.f32 %v3333, 0.0
        %v3386 = vmax.f32 %v3335, 0.0
        %v3387 = vmax.f32 %v3338, 0.0
        %v3388 = vmax.f32 %v3340, 0.0
        %v3389 = vmax.f32 %v3343, 0.0
        %v3390 = vmax.f32 %v3345, 0.0
        %v3391 = vmax.f32 %v3348, 0.0
        %v3392 = vmax.f32 %v3350, 0.0
        %v3393 = vmax.f32 %v3353, 0.0
        %v3394 = vmax.f32 %v3355, 0.0
        %v3395 = vmax.f32 %v3358, 0.0
        %v3396 = vmax.f32 %v3360, 0.0
        %v3397 = vmax.f32 %v3363, 0.0
        %v3398 = vmax.f32 %v3365, 0.0
        %s3399 = scalar_lea.vmem [#allocation2], 192
        %v3400 = vld [vmem:[%s3399] sm:$0xf]
        %v3401 = vld [vmem:[%s3399 + $0x4] sm:$0xf]
        %v3402 = vld [vmem:[%s3399 + $0x8] sm:$0xf]
        %v3403 = vld [vmem:[%s3399 + $0xc] sm:$0xf]
        %v3404 = vld [vmem:[%s3399 + $0x10] sm:$0xf]
        %v3405 = vld [vmem:[%s3399 + $0x14] sm:$0xf]
        %v3406 = vld [vmem:[%s3399 + $0x18] sm:$0xf]
        %v3407 = vld [vmem:[%s3399 + $0x1c] sm:$0xf]
        %v3408 = vld [vmem:[%s3399 + $0x20] sm:$0xf]
        %v3409 = vld [vmem:[%s3399 + $0x24] sm:$0xf]
        %v3410 = vld [vmem:[%s3399 + $0x28] sm:$0xf]
        %v3411 = vld [vmem:[%s3399 + $0x2c] sm:$0xf]
        %v3412 = vld [vmem:[%s3399 + $0x30] sm:$0xf]
        %v3413 = vld [vmem:[%s3399 + $0x34] sm:$0xf]
        %v3414 = vld [vmem:[%s3399 + $0x38] sm:$0xf]
        %v3415 = vld [vmem:[%s3399 + $0x3c] sm:$0xf]
        %v3416 = vld [vmem:[%s3399 + $0x40] sm:$0xf]
        %v3417 = vld [vmem:[%s3399 + $0x44] sm:$0xf]
        %v3418 = vld [vmem:[%s3399 + $0x48] sm:$0xf]
        %v3419 = vld [vmem:[%s3399 + $0x4c] sm:$0xf]
        %v3420 = vld [vmem:[%s3399 + $0x50] sm:$0xf]
        %v3421 = vld [vmem:[%s3399 + $0x54] sm:$0xf]
        %v3422 = vld [vmem:[%s3399 + $0x58] sm:$0xf]
        %v3423 = vld [vmem:[%s3399 + $0x5c] sm:$0xf]
        %v3424 = vld [vmem:[%s3399 + $0x60] sm:$0xf]
        %v3425 = vld [vmem:[%s3399 + $0x64] sm:$0xf]
        %v3426 = vld [vmem:[%s3399 + $0x68] sm:$0xf]
        %v3427 = vld [vmem:[%s3399 + $0x6c] sm:$0xf]
        %v3428 = vld [vmem:[%s3399 + $0x70] sm:$0xf]
        %v3429 = vld [vmem:[%s3399 + $0x74] sm:$0xf]
        %v3430 = vld [vmem:[%s3399 + $0x78] sm:$0xf]
        %v3431 = vld [vmem:[%s3399 + $0x7c] sm:$0xf]
        %v3432 = vld [vmem:[%s3399 + $0x80] sm:$0xf]
        %v3433 = vld [vmem:[%s3399 + $0x84] sm:$0xf]
        %v3434 = vld [vmem:[%s3399 + $0x88] sm:$0xf]
        %v3435 = vld [vmem:[%s3399 + $0x8c] sm:$0xf]
        %v3436 = vld [vmem:[%s3399 + $0x90] sm:$0xf]
        %v3437 = vld [vmem:[%s3399 + $0x94] sm:$0xf]
        %v3438 = vld [vmem:[%s3399 + $0x98] sm:$0xf]
        %v3439 = vld [vmem:[%s3399 + $0x9c] sm:$0xf]
        %v3440 = vld [vmem:[%s3399 + $0xa0] sm:$0xf]
        %v3441 = vld [vmem:[%s3399 + $0xa4] sm:$0xf]
        %v3442 = vld [vmem:[%s3399 + $0xa8] sm:$0xf]
        %v3443 = vld [vmem:[%s3399 + $0xac] sm:$0xf]
        %v3444 = vld [vmem:[%s3399 + $0xb0] sm:$0xf]
        %v3445 = vld [vmem:[%s3399 + $0xb4] sm:$0xf]
        %v3446 = vld [vmem:[%s3399 + $0xb8] sm:$0xf]
        %v3447 = vld [vmem:[%s3399 + $0xbc] sm:$0xf]
        %s3448 = scalar_lea.vmem %s7, 1
        %v3449 = vld [vmem:[%s3448] sm:$0x1]
        %v3482 = vrot.slane %v3367, 4
        %v3483 = vrot.slane %v3368, 4
        %v3484 = vsel %vm2568, %v3482, %v3483
        %v3485 = vrot.slane %v3369, 4
        %v3486 = vrot.slane %v3370, 4
        %v3487 = vsel %vm2568, %v3485, %v3486
        %v3488 = vrot.slane %v3371, 4
        %v3489 = vrot.slane %v3372, 4
        %v3490 = vsel %vm2568, %v3488, %v3489
        %v3491 = vrot.slane %v3373, 4
        %v3492 = vrot.slane %v3374, 4
        %v3493 = vsel %vm2568, %v3491, %v3492
        %v3494 = vrot.slane %v3375, 4
        %v3495 = vrot.slane %v3376, 4
        %v3496 = vsel %vm2568, %v3494, %v3495
        %v3497 = vrot.slane %v3377, 4
        %v3498 = vrot.slane %v3378, 4
        %v3499 = vsel %vm2568, %v3497, %v3498
        %v3500 = vrot.slane %v3379, 4
        %v3501 = vrot.slane %v3380, 4
        %v3502 = vsel %vm2568, %v3500, %v3501
        %v3503 = vrot.slane %v3381, 4
        %v3504 = vrot.slane %v3382, 4
        %v3505 = vsel %vm2568, %v3503, %v3504
        %v3506 = vrot.slane %v3383, 4
        %v3507 = vrot.slane %v3384, 4
        %v3508 = vsel %vm2568, %v3506, %v3507
        %v3509 = vrot.slane %v3385, 4
        %v3510 = vrot.slane %v3386, 4
        %v3511 = vsel %vm2568, %v3509, %v3510
        %v3512 = vrot.slane %v3387, 4
        %v3513 = vrot.slane %v3388, 4
        %v3514 = vsel %vm2568, %v3512, %v3513
        %v3515 = vrot.slane %v3389, 4
        %v3516 = vrot.slane %v3390, 4
        %v3517 = vsel %vm2568, %v3515, %v3516
        %v3518 = vrot.slane %v3391, 4
        %v3519 = vrot.slane %v3392, 4
        %v3520 = vsel %vm2568, %v3518, %v3519
        %v3521 = vrot.slane %v3393, 4
        %v3522 = vrot.slane %v3394, 4
        %v3523 = vsel %vm2568, %v3521, %v3522
        %v3524 = vrot.slane %v3395, 4
        %v3525 = vrot.slane %v3396, 4
        %v3526 = vsel %vm2568, %v3524, %v3525
        %v3527 = vrot.slane %v3397, 4
        %v3528 = vrot.slane %v3398, 4
        %v3529 = vsel %vm2568, %v3527, %v3528
        %v3562 = vsel %vm2568, 0.0, %v3482
        %v3563 = vsel %vm2568, 0.0, %v3485
        %v3564 = vsel %vm2568, 0.0, %v3488
        %v3565 = vsel %vm2568, 0.0, %v3491
        %v3566 = vsel %vm2568, 0.0, %v3494
        %v3567 = vsel %vm2568, 0.0, %v3497
        %v3568 = vsel %vm2568, 0.0, %v3500
        %v3569 = vsel %vm2568, 0.0, %v3503
        %v3570 = vsel %vm2568, 0.0, %v3506
        %v3571 = vsel %vm2568, 0.0, %v3509
        %v3572 = vsel %vm2568, 0.0, %v3512
        %v3573 = vsel %vm2568, 0.0, %v3515
        %v3574 = vsel %vm2568, 0.0, %v3518
        %v3575 = vsel %vm2568, 0.0, %v3521
        %v3576 = vsel %vm2568, 0.0, %v3524
        %v3577 = vsel %vm2568, 0.0, %v3527
        %v3594 = vrot.slane %v3562, 2
        %v3595 = vrot.slane %v3484, 2
        %v3596 = vsel %vm512, %v3594, %v3595
        %v3597 = vrot.slane %v3483, 2
        %v3598 = vsel %vm512, %v3595, %v3597
        %v3599 = vrot.slane %v3563, 2
        %v3600 = vrot.slane %v3487, 2
        %v3601 = vsel %vm512, %v3599, %v3600
        %v3602 = vrot.slane %v3486, 2
        %v3603 = vsel %vm512, %v3600, %v3602
        %v3604 = vrot.slane %v3564, 2
        %v3605 = vrot.slane %v3490, 2
        %v3606 = vsel %vm512, %v3604, %v3605
        %v3607 = vrot.slane %v3489, 2
        %v3608 = vsel %vm512, %v3605, %v3607
        %v3609 = vrot.slane %v3565, 2
        %v3610 = vrot.slane %v3493, 2
        %v3611 = vsel %vm512, %v3609, %v3610
        %v3612 = vrot.slane %v3492, 2
        %v3613 = vsel %vm512, %v3610, %v3612
        %v3614 = vrot.slane %v3566, 2
        %v3615 = vrot.slane %v3496, 2
        %v3616 = vsel %vm512, %v3614, %v3615
        %v3617 = vrot.slane %v3495, 2
        %v3618 = vsel %vm512, %v3615, %v3617
        %v3619 = vrot.slane %v3567, 2
        %v3620 = vrot.slane %v3499, 2
        %v3621 = vsel %vm512, %v3619, %v3620
        %v3622 = vrot.slane %v3498, 2
        %v3623 = vsel %vm512, %v3620, %v3622
        %v3624 = vrot.slane %v3568, 2
        %v3625 = vrot.slane %v3502, 2
        %v3626 = vsel %vm512, %v3624, %v3625
        %v3627 = vrot.slane %v3501, 2
        %v3628 = vsel %vm512, %v3625, %v3627
        %v3629 = vrot.slane %v3569, 2
        %v3630 = vrot.slane %v3505, 2
        %v3631 = vsel %vm512, %v3629, %v3630
        %v3632 = vrot.slane %v3504, 2
        %v3633 = vsel %vm512, %v3630, %v3632
        %v3634 = vrot.slane %v3570, 2
        %v3635 = vrot.slane %v3508, 2
        %v3636 = vsel %vm512, %v3634, %v3635
        %v3637 = vrot.slane %v3507, 2
        %v3638 = vsel %vm512, %v3635, %v3637
        %v3639 = vrot.slane %v3571, 2
        %v3640 = vrot.slane %v3511, 2
        %v3641 = vsel %vm512, %v3639, %v3640
        %v3642 = vrot.slane %v3510, 2
        %v3643 = vsel %vm512, %v3640, %v3642
        %v3644 = vrot.slane %v3572, 2
        %v3645 = vrot.slane %v3514, 2
        %v3646 = vsel %vm512, %v3644, %v3645
        %v3647 = vrot.slane %v3513, 2
        %v3648 = vsel %vm512, %v3645, %v3647
        %v3649 = vrot.slane %v3573, 2
        %v3650 = vrot.slane %v3517, 2
        %v3651 = vsel %vm512, %v3649, %v3650
        %v3652 = vrot.slane %v3516, 2
        %v3653 = vsel %vm512, %v3650, %v3652
        %v3654 = vrot.slane %v3574, 2
        %v3655 = vrot.slane %v3520, 2
        %v3656 = vsel %vm512, %v3654, %v3655
        %v3657 = vrot.slane %v3519, 2
        %v3658 = vsel %vm512, %v3655, %v3657
        %v3659 = vrot.slane %v3575, 2
        %v3660 = vrot.slane %v3523, 2
        %v3661 = vsel %vm512, %v3659, %v3660
        %v3662 = vrot.slane %v3522, 2
        %v3663 = vsel %vm512, %v3660, %v3662
        %v3664 = vrot.slane %v3576, 2
        %v3665 = vrot.slane %v3526, 2
        %v3666 = vsel %vm512, %v3664, %v3665
        %v3667 = vrot.slane %v3525, 2
        %v3668 = vsel %vm512, %v3665, %v3667
        %v3669 = vrot.slane %v3577, 2
        %v3670 = vrot.slane %v3529, 2
        %v3671 = vsel %vm512, %v3669, %v3670
        %v3672 = vrot.slane %v3528, 2
        %v3673 = vsel %vm512, %v3670, %v3672
        %v3706 = vrot.slane %v3562, 4
        %v3707 = vrot.slane %v3484, 4
        %v3708 = vsel %vm2568, %v3706, %v3707
        %v3709 = vrot.slane %v3483, 4
        %v3710 = vsel %vm2568, %v3707, %v3709
        %v3711 = vrot.slane %v3563, 4
        %v3712 = vrot.slane %v3487, 4
        %v3713 = vsel %vm2568, %v3711, %v3712
        %v3714 = vrot.slane %v3486, 4
        %v3715 = vsel %vm2568, %v3712, %v3714
        %v3716 = vrot.slane %v3564, 4
        %v3717 = vrot.slane %v3490, 4
        %v3718 = vsel %vm2568, %v3716, %v3717
        %v3719 = vrot.slane %v3489, 4
        %v3720 = vsel %vm2568, %v3717, %v3719
        %v3721 = vrot.slane %v3565, 4
        %v3722 = vrot.slane %v3493, 4
        %v3723 = vsel %vm2568, %v3721, %v3722
        %v3724 = vrot.slane %v3492, 4
        %v3725 = vsel %vm2568, %v3722, %v3724
        %v3726 = vrot.slane %v3566, 4
        %v3727 = vrot.slane %v3496, 4
        %v3728 = vsel %vm2568, %v3726, %v3727
        %v3729 = vrot.slane %v3495, 4
        %v3730 = vsel %vm2568, %v3727, %v3729
        %v3731 = vrot.slane %v3567, 4
        %v3732 = vrot.slane %v3499, 4
        %v3733 = vsel %vm2568, %v3731, %v3732
        %v3734 = vrot.slane %v3498, 4
        %v3735 = vsel %vm2568, %v3732, %v3734
        %v3736 = vrot.slane %v3568, 4
        %v3737 = vrot.slane %v3502, 4
        %v3738 = vsel %vm2568, %v3736, %v3737
        %v3739 = vrot.slane %v3501, 4
        %v3740 = vsel %vm2568, %v3737, %v3739
        %v3741 = vrot.slane %v3569, 4
        %v3742 = vrot.slane %v3505, 4
        %v3743 = vsel %vm2568, %v3741, %v3742
        %v3744 = vrot.slane %v3504, 4
        %v3745 = vsel %vm2568, %v3742, %v3744
        %v3746 = vrot.slane %v3570, 4
        %v3747 = vrot.slane %v3508, 4
        %v3748 = vsel %vm2568, %v3746, %v3747
        %v3749 = vrot.slane %v3507, 4
        %v3750 = vsel %vm2568, %v3747, %v3749
        %v3751 = vrot.slane %v3571, 4
        %v3752 = vrot.slane %v3511, 4
        %v3753 = vsel %vm2568, %v3751, %v3752
        %v3754 = vrot.slane %v3510, 4
        %v3755 = vsel %vm2568, %v3752, %v3754
        %v3756 = vrot.slane %v3572, 4
        %v3757 = vrot.slane %v3514, 4
        %v3758 = vsel %vm2568, %v3756, %v3757
        %v3759 = vrot.slane %v3513, 4
        %v3760 = vsel %vm2568, %v3757, %v3759
        %v3761 = vrot.slane %v3573, 4
        %v3762 = vrot.slane %v3517, 4
        %v3763 = vsel %vm2568, %v3761, %v3762
        %v3764 = vrot.slane %v3516, 4
        %v3765 = vsel %vm2568, %v3762, %v3764
        %v3766 = vrot.slane %v3574, 4
        %v3767 = vrot.slane %v3520, 4
        %v3768 = vsel %vm2568, %v3766, %v3767
        %v3769 = vrot.slane %v3519, 4
        %v3770 = vsel %vm2568, %v3767, %v3769
        %v3771 = vrot.slane %v3575, 4
        %v3772 = vrot.slane %v3523, 4
        %v3773 = vsel %vm2568, %v3771, %v3772
        %v3774 = vrot.slane %v3522, 4
        %v3775 = vsel %vm2568, %v3772, %v3774
        %v3776 = vrot.slane %v3576, 4
        %v3777 = vrot.slane %v3526, 4
        %v3778 = vsel %vm2568, %v3776, %v3777
        %v3779 = vrot.slane %v3525, 4
        %v3780 = vsel %vm2568, %v3777, %v3779
        %v3781 = vrot.slane %v3577, 4
        %v3782 = vrot.slane %v3529, 4
        %v3783 = vsel %vm2568, %v3781, %v3782
        %v3784 = vrot.slane %v3528, 4
        %v3785 = vsel %vm2568, %v3782, %v3784
        %v3818 = vpack.c.bf16 %v3484, %v3562
        %v3819 = vpack.c.bf16 %v3598, %v3596
        %v3820 = vpack.c.bf16 %v3710, %v3708
        %v3821 = vpack.c.bf16 %v3487, %v3563
        %v3822 = vpack.c.bf16 %v3603, %v3601
        %v3823 = vpack.c.bf16 %v3715, %v3713
        %v3824 = vpack.c.bf16 %v3490, %v3564
        %v3825 = vpack.c.bf16 %v3608, %v3606
        %v3826 = vpack.c.bf16 %v3720, %v3718
        %v3827 = vpack.c.bf16 %v3493, %v3565
        %v3828 = vpack.c.bf16 %v3613, %v3611
        %v3829 = vpack.c.bf16 %v3725, %v3723
        %v3830 = vpack.c.bf16 %v3496, %v3566
        %v3831 = vpack.c.bf16 %v3618, %v3616
        %v3832 = vpack.c.bf16 %v3730, %v3728
        %v3833 = vpack.c.bf16 %v3499, %v3567
        %v3834 = vpack.c.bf16 %v3623, %v3621
        %v3835 = vpack.c.bf16 %v3735, %v3733
        %v3836 = vpack.c.bf16 %v3502, %v3568
        %v3837 = vpack.c.bf16 %v3628, %v3626
        %v3838 = vpack.c.bf16 %v3740, %v3738
        %v3839 = vpack.c.bf16 %v3505, %v3569
        %v3840 = vpack.c.bf16 %v3633, %v3631
        %v3841 = vpack.c.bf16 %v3745, %v3743
        %v3842 = vpack.c.bf16 %v3508, %v3570
        %v3843 = vpack.c.bf16 %v3638, %v3636
        %v3844 = vpack.c.bf16 %v3750, %v3748
        %v3845 = vpack.c.bf16 %v3511, %v3571
        %v3846 = vpack.c.bf16 %v3643, %v3641
        %v3847 = vpack.c.bf16 %v3755, %v3753
        %v3848 = vpack.c.bf16 %v3514, %v3572
        %v3849 = vpack.c.bf16 %v3648, %v3646
        %v3850 = vpack.c.bf16 %v3760, %v3758
        %v3851 = vpack.c.bf16 %v3517, %v3573
        %v3852 = vpack.c.bf16 %v3653, %v3651
        %v3853 = vpack.c.bf16 %v3765, %v3763
        %v3854 = vpack.c.bf16 %v3520, %v3574
        %v3855 = vpack.c.bf16 %v3658, %v3656
        %v3856 = vpack.c.bf16 %v3770, %v3768
        %v3857 = vpack.c.bf16 %v3523, %v3575
        %v3858 = vpack.c.bf16 %v3663, %v3661
        %v3859 = vpack.c.bf16 %v3775, %v3773
        %v3860 = vpack.c.bf16 %v3526, %v3576
        %v3861 = vpack.c.bf16 %v3668, %v3666
        %v3862 = vpack.c.bf16 %v3780, %v3778
        %v3863 = vpack.c.bf16 %v3529, %v3577
        %v3864 = vpack.c.bf16 %v3673, %v3671
        %v3865 = vpack.c.bf16 %v3785, %v3783
        %v3867 = vperm.slane %v3449, 0
        %v3917 = vunpack.c.l.b16 %v3400
        %v3918 = vunpack.c.l.b16 %v3401
        %v3919 = vunpack.c.l.b16 %v3402
        %v3920 = vunpack.c.l.b16 %v3403
        %v3921 = vunpack.c.l.b16 %v3404
        %v3922 = vunpack.c.l.b16 %v3405
        %v3923 = vunpack.c.l.b16 %v3406
        %v3924 = vunpack.c.l.b16 %v3407
        %v3925 = vunpack.c.l.b16 %v3408
        %v3926 = vunpack.c.l.b16 %v3409
        %v3927 = vunpack.c.l.b16 %v3410
        %v3928 = vunpack.c.l.b16 %v3411
        %v3929 = vunpack.c.l.b16 %v3412
        %v3930 = vunpack.c.l.b16 %v3413
        %v3931 = vunpack.c.l.b16 %v3414
        %v3932 = vunpack.c.l.b16 %v3415
        %v3933 = vunpack.c.l.b16 %v3416
        %v3934 = vunpack.c.l.b16 %v3417
        %v3935 = vunpack.c.l.b16 %v3418
        %v3936 = vunpack.c.l.b16 %v3419
        %v3937 = vunpack.c.l.b16 %v3420
        %v3938 = vunpack.c.l.b16 %v3421
        %v3939 = vunpack.c.l.b16 %v3422
        %v3940 = vunpack.c.l.b16 %v3423
        %v3941 = vunpack.c.l.b16 %v3424
        %v3942 = vunpack.c.l.b16 %v3425
        %v3943 = vunpack.c.l.b16 %v3426
        %v3944 = vunpack.c.l.b16 %v3427
        %v3945 = vunpack.c.l.b16 %v3428
        %v3946 = vunpack.c.l.b16 %v3429
        %v3947 = vunpack.c.l.b16 %v3430
        %v3948 = vunpack.c.l.b16 %v3431
        %v3949 = vunpack.c.l.b16 %v3432
        %v3950 = vunpack.c.l.b16 %v3433
        %v3951 = vunpack.c.l.b16 %v3434
        %v3952 = vunpack.c.l.b16 %v3435
        %v3953 = vunpack.c.l.b16 %v3436
        %v3954 = vunpack.c.l.b16 %v3437
        %v3955 = vunpack.c.l.b16 %v3438
        %v3956 = vunpack.c.l.b16 %v3439
        %v3957 = vunpack.c.l.b16 %v3440
        %v3958 = vunpack.c.l.b16 %v3441
        %v3959 = vunpack.c.l.b16 %v3442
        %v3960 = vunpack.c.l.b16 %v3443
        %v3961 = vunpack.c.l.b16 %v3444
        %v3962 = vunpack.c.l.b16 %v3445
        %v3963 = vunpack.c.l.b16 %v3446
        %v3964 = vunpack.c.l.b16 %v3447
        %v3965 = vpack.c.b16 %v3918, %v3917
        %v3966 = vpack.c.b16 %v3920, %v3919
        %v3967 = vpack.c.b16 %v3922, %v3921
        %v3968 = vpack.c.b16 %v3924, %v3923
        %v3969 = vpack.c.b16 %v3926, %v3925
        %v3970 = vpack.c.b16 %v3928, %v3927
        %v3971 = vpack.c.b16 %v3930, %v3929
        %v3972 = vpack.c.b16 %v3932, %v3931
        %v3973 = vpack.c.b16 %v3934, %v3933
        %v3974 = vpack.c.b16 %v3936, %v3935
        %v3975 = vpack.c.b16 %v3938, %v3937
        %v3976 = vpack.c.b16 %v3940, %v3939
        %v3977 = vpack.c.b16 %v3942, %v3941
        %v3978 = vpack.c.b16 %v3944, %v3943
        %v3979 = vpack.c.b16 %v3946, %v3945
        %v3980 = vpack.c.b16 %v3948, %v3947
        %v3981 = vpack.c.b16 %v3950, %v3949
        %v3982 = vpack.c.b16 %v3952, %v3951
        %v3983 = vpack.c.b16 %v3954, %v3953
        %v3984 = vpack.c.b16 %v3956, %v3955
        %v3985 = vpack.c.b16 %v3958, %v3957
        %v3986 = vpack.c.b16 %v3960, %v3959
        %v3987 = vpack.c.b16 %v3962, %v3961
        %v3988 = vpack.c.b16 %v3964, %v3963
        %4013 = vmatpush.bf16.msra.mxu0 %v3972
        %4014 = vmatpush.bf16.msra.mxu0 %v3971
        %4015 = vmatpush.bf16.msra.mxu0 %v3970
        %4016 = vmatpush.bf16.msra.mxu0 %v3969
        %4017 = vmatpush.bf16.msra.mxu0 %v3968
        %4018 = vmatpush.bf16.msra.mxu0 %v3967
        %4019 = vmatpush.bf16.msra.mxu0 %v3966
        %4020 = vmatpush.bf16.msra.mxu0 %v3965
        %4021 = vmatmul.bf16.gmra.mxu0 %v3818
        %v4022 = vpop.f32.mrf.mxu0
        %v4023 = vadd.f32 %v3867, %v4022
        %v4024 = vpop.f32.mrf.mxu0
        %v4025 = vadd.f32 %v3867, %v4024
        %4026 = vmatmul.bf16.gmra.mxu0 %v3821
        %v4027 = vpop.f32.mrf.mxu0
        %v4028 = vadd.f32 %v3867, %v4027
        %v4029 = vpop.f32.mrf.mxu0
        %v4030 = vadd.f32 %v3867, %v4029
        %4031 = vmatmul.bf16.gmra.mxu0 %v3824
        %v4032 = vpop.f32.mrf.mxu0
        %v4033 = vadd.f32 %v3867, %v4032
        %v4034 = vpop.f32.mrf.mxu0
        %v4035 = vadd.f32 %v3867, %v4034
        %4036 = vmatmul.bf16.gmra.mxu0 %v3827
        %v4037 = vpop.f32.mrf.mxu0
        %v4038 = vadd.f32 %v3867, %v4037
        %v4039 = vpop.f32.mrf.mxu0
        %v4040 = vadd.f32 %v3867, %v4039
        %4041 = vmatmul.bf16.gmra.mxu0 %v3830
        %v4042 = vpop.f32.mrf.mxu0
        %v4043 = vadd.f32 %v3867, %v4042
        %v4044 = vpop.f32.mrf.mxu0
        %v4045 = vadd.f32 %v3867, %v4044
        %4046 = vmatmul.bf16.gmra.mxu0 %v3833
        %v4047 = vpop.f32.mrf.mxu0
        %v4048 = vadd.f32 %v3867, %v4047
        %v4049 = vpop.f32.mrf.mxu0
        %v4050 = vadd.f32 %v3867, %v4049
        %4051 = vmatmul.bf16.gmra.mxu0 %v3836
        %v4052 = vpop.f32.mrf.mxu0
        %v4053 = vadd.f32 %v3867, %v4052
        %v4054 = vpop.f32.mrf.mxu0
        %v4055 = vadd.f32 %v3867, %v4054
        %4056 = vmatmul.bf16.gmra.mxu0 %v3839
        %v4057 = vpop.f32.mrf.mxu0
        %v4058 = vadd.f32 %v3867, %v4057
        %v4059 = vpop.f32.mrf.mxu0
        %v4060 = vadd.f32 %v3867, %v4059
        %4061 = vmatmul.bf16.gmra.mxu0 %v3842
        %v4062 = vpop.f32.mrf.mxu0
        %v4063 = vadd.f32 %v3867, %v4062
        %v4064 = vpop.f32.mrf.mxu0
        %v4065 = vadd.f32 %v3867, %v4064
        %4066 = vmatmul.bf16.gmra.mxu0 %v3845
        %v4067 = vpop.f32.mrf.mxu0
        %v4068 = vadd.f32 %v3867, %v4067
        %v4069 = vpop.f32.mrf.mxu0
        %v4070 = vadd.f32 %v3867, %v4069
        %4071 = vmatmul.bf16.gmra.mxu0 %v3848
        %v4072 = vpop.f32.mrf.mxu0
        %v4073 = vadd.f32 %v3867, %v4072
        %v4074 = vpop.f32.mrf.mxu0
        %v4075 = vadd.f32 %v3867, %v4074
        %4076 = vmatmul.bf16.gmra.mxu0 %v3851
        %v4077 = vpop.f32.mrf.mxu0
        %v4078 = vadd.f32 %v3867, %v4077
        %v4079 = vpop.f32.mrf.mxu0
        %v4080 = vadd.f32 %v3867, %v4079
        %4081 = vmatmul.bf16.gmra.mxu0 %v3854
        %v4082 = vpop.f32.mrf.mxu0
        %v4083 = vadd.f32 %v3867, %v4082
        %v4084 = vpop.f32.mrf.mxu0
        %v4085 = vadd.f32 %v3867, %v4084
        %4086 = vmatmul.bf16.gmra.mxu0 %v3857
        %v4087 = vpop.f32.mrf.mxu0
        %v4088 = vadd.f32 %v3867, %v4087
        %v4089 = vpop.f32.mrf.mxu0
        %v4090 = vadd.f32 %v3867, %v4089
        %4091 = vmatmul.bf16.gmra.mxu0 %v3860
        %v4092 = vpop.f32.mrf.mxu0
        %v4093 = vadd.f32 %v3867, %v4092
        %v4094 = vpop.f32.mrf.mxu0
        %v4095 = vadd.f32 %v3867, %v4094
        %4096 = vmatmul.bf16.gmra.mxu0 %v3863
        %v4097 = vpop.f32.mrf.mxu0
        %v4098 = vadd.f32 %v3867, %v4097
        %v4099 = vpop.f32.mrf.mxu0
        %v4100 = vadd.f32 %v3867, %v4099
        %4101 = vdwg.mxu0
        %4102 = vmatpush.bf16.msra.mxu0 %v3980
        %4103 = vmatpush.bf16.msra.mxu0 %v3979
        %4104 = vmatpush.bf16.msra.mxu0 %v3978
        %4105 = vmatpush.bf16.msra.mxu0 %v3977
        %4106 = vmatpush.bf16.msra.mxu0 %v3976
        %4107 = vmatpush.bf16.msra.mxu0 %v3975
        %4108 = vmatpush.bf16.msra.mxu0 %v3974
        %4109 = vmatpush.bf16.msra.mxu0 %v3973
        %4110 = vmatmul.bf16.gmra.mxu0 %v3819
        %v4111 = vpop.f32.mrf.mxu0
        %v4112 = vadd.f32 %v4023, %v4111
        %v4113 = vpop.f32.mrf.mxu0
        %v4114 = vadd.f32 %v4025, %v4113
        %4115 = vmatmul.bf16.gmra.mxu0 %v3822
        %v4116 = vpop.f32.mrf.mxu0
        %v4117 = vadd.f32 %v4028, %v4116
        %v4118 = vpop.f32.mrf.mxu0
        %v4119 = vadd.f32 %v4030, %v4118
        %4120 = vmatmul.bf16.gmra.mxu0 %v3825
        %v4121 = vpop.f32.mrf.mxu0
        %v4122 = vadd.f32 %v4033, %v4121
        %v4123 = vpop.f32.mrf.mxu0
        %v4124 = vadd.f32 %v4035, %v4123
        %4125 = vmatmul.bf16.gmra.mxu0 %v3828
        %v4126 = vpop.f32.mrf.mxu0
        %v4127 = vadd.f32 %v4038, %v4126
        %v4128 = vpop.f32.mrf.mxu0
        %v4129 = vadd.f32 %v4040, %v4128
        %4130 = vmatmul.bf16.gmra.mxu0 %v3831
        %v4131 = vpop.f32.mrf.mxu0
        %v4132 = vadd.f32 %v4043, %v4131
        %v4133 = vpop.f32.mrf.mxu0
        %v4134 = vadd.f32 %v4045, %v4133
        %4135 = vmatmul.bf16.gmra.mxu0 %v3834
        %v4136 = vpop.f32.mrf.mxu0
        %v4137 = vadd.f32 %v4048, %v4136
        %v4138 = vpop.f32.mrf.mxu0
        %v4139 = vadd.f32 %v4050, %v4138
        %4140 = vmatmul.bf16.gmra.mxu0 %v3837
        %v4141 = vpop.f32.mrf.mxu0
        %v4142 = vadd.f32 %v4053, %v4141
        %v4143 = vpop.f32.mrf.mxu0
        %v4144 = vadd.f32 %v4055, %v4143
        %4145 = vmatmul.bf16.gmra.mxu0 %v3840
        %v4146 = vpop.f32.mrf.mxu0
        %v4147 = vadd.f32 %v4058, %v4146
        %v4148 = vpop.f32.mrf.mxu0
        %v4149 = vadd.f32 %v4060, %v4148
        %4150 = vmatmul.bf16.gmra.mxu0 %v3843
        %v4151 = vpop.f32.mrf.mxu0
        %v4152 = vadd.f32 %v4063, %v4151
        %v4153 = vpop.f32.mrf.mxu0
        %v4154 = vadd.f32 %v4065, %v4153
        %4155 = vmatmul.bf16.gmra.mxu0 %v3846
        %v4156 = vpop.f32.mrf.mxu0
        %v4157 = vadd.f32 %v4068, %v4156
        %v4158 = vpop.f32.mrf.mxu0
        %v4159 = vadd.f32 %v4070, %v4158
        %4160 = vmatmul.bf16.gmra.mxu0 %v3849
        %v4161 = vpop.f32.mrf.mxu0
        %v4162 = vadd.f32 %v4073, %v4161
        %v4163 = vpop.f32.mrf.mxu0
        %v4164 = vadd.f32 %v4075, %v4163
        %4165 = vmatmul.bf16.gmra.mxu0 %v3852
        %v4166 = vpop.f32.mrf.mxu0
        %v4167 = vadd.f32 %v4078, %v4166
        %v4168 = vpop.f32.mrf.mxu0
        %v4169 = vadd.f32 %v4080, %v4168
        %4170 = vmatmul.bf16.gmra.mxu0 %v3855
        %v4171 = vpop.f32.mrf.mxu0
        %v4172 = vadd.f32 %v4083, %v4171
        %v4173 = vpop.f32.mrf.mxu0
        %v4174 = vadd.f32 %v4085, %v4173
        %4175 = vmatmul.bf16.gmra.mxu0 %v3858
        %v4176 = vpop.f32.mrf.mxu0
        %v4177 = vadd.f32 %v4088, %v4176
        %v4178 = vpop.f32.mrf.mxu0
        %v4179 = vadd.f32 %v4090, %v4178
        %4180 = vmatmul.bf16.gmra.mxu0 %v3861
        %v4181 = vpop.f32.mrf.mxu0
        %v4182 = vadd.f32 %v4093, %v4181
        %v4183 = vpop.f32.mrf.mxu0
        %v4184 = vadd.f32 %v4095, %v4183
        %4185 = vmatmul.bf16.gmra.mxu0 %v3864
        %v4186 = vpop.f32.mrf.mxu0
        %v4187 = vadd.f32 %v4098, %v4186
        %v4188 = vpop.f32.mrf.mxu0
        %v4189 = vadd.f32 %v4100, %v4188
        %4190 = vdwg.mxu0
        %4191 = vmatpush.bf16.msra.mxu0 %v3988
        %4192 = vmatpush.bf16.msra.mxu0 %v3987
        %4193 = vmatpush.bf16.msra.mxu0 %v3986
        %4194 = vmatpush.bf16.msra.mxu0 %v3985
        %4195 = vmatpush.bf16.msra.mxu0 %v3984
        %4196 = vmatpush.bf16.msra.mxu0 %v3983
        %4197 = vmatpush.bf16.msra.mxu0 %v3982
        %4198 = vmatpush.bf16.msra.mxu0 %v3981
        %4199 = vmatmul.bf16.gmra.mxu0 %v3820
        %v4200 = vpop.f32.mrf.mxu0
        %v4201 = vadd.f32 %v4112, %v4200
        %v4202 = vpop.f32.mrf.mxu0
        %v4203 = vadd.f32 %v4114, %v4202
        %4204 = vmatmul.bf16.gmra.mxu0 %v3823
        %v4205 = vpop.f32.mrf.mxu0
        %v4206 = vadd.f32 %v4117, %v4205
        %v4207 = vpop.f32.mrf.mxu0
        %v4208 = vadd.f32 %v4119, %v4207
        %4209 = vmatmul.bf16.gmra.mxu0 %v3826
        %v4210 = vpop.f32.mrf.mxu0
        %v4211 = vadd.f32 %v4122, %v4210
        %v4212 = vpop.f32.mrf.mxu0
        %v4213 = vadd.f32 %v4124, %v4212
        %4214 = vmatmul.bf16.gmra.mxu0 %v3829
        %v4215 = vpop.f32.mrf.mxu0
        %v4216 = vadd.f32 %v4127, %v4215
        %v4217 = vpop.f32.mrf.mxu0
        %v4218 = vadd.f32 %v4129, %v4217
        %4219 = vmatmul.bf16.gmra.mxu0 %v3832
        %v4220 = vpop.f32.mrf.mxu0
        %v4221 = vadd.f32 %v4132, %v4220
        %v4222 = vpop.f32.mrf.mxu0
        %v4223 = vadd.f32 %v4134, %v4222
        %4224 = vmatmul.bf16.gmra.mxu0 %v3835
        %v4225 = vpop.f32.mrf.mxu0
        %v4226 = vadd.f32 %v4137, %v4225
        %v4227 = vpop.f32.mrf.mxu0
        %v4228 = vadd.f32 %v4139, %v4227
        %4229 = vmatmul.bf16.gmra.mxu0 %v3838
        %v4230 = vpop.f32.mrf.mxu0
        %v4231 = vadd.f32 %v4142, %v4230
        %v4232 = vpop.f32.mrf.mxu0
        %v4233 = vadd.f32 %v4144, %v4232
        %4234 = vmatmul.bf16.gmra.mxu0 %v3841
        %v4235 = vpop.f32.mrf.mxu0
        %v4236 = vadd.f32 %v4147, %v4235
        %v4237 = vpop.f32.mrf.mxu0
        %v4238 = vadd.f32 %v4149, %v4237
        %4239 = vmatmul.bf16.gmra.mxu0 %v3844
        %v4240 = vpop.f32.mrf.mxu0
        %v4241 = vadd.f32 %v4152, %v4240
        %v4242 = vpop.f32.mrf.mxu0
        %v4243 = vadd.f32 %v4154, %v4242
        %4244 = vmatmul.bf16.gmra.mxu0 %v3847
        %v4245 = vpop.f32.mrf.mxu0
        %v4246 = vadd.f32 %v4157, %v4245
        %v4247 = vpop.f32.mrf.mxu0
        %v4248 = vadd.f32 %v4159, %v4247
        %4249 = vmatmul.bf16.gmra.mxu0 %v3850
        %v4250 = vpop.f32.mrf.mxu0
        %v4251 = vadd.f32 %v4162, %v4250
        %v4252 = vpop.f32.mrf.mxu0
        %v4253 = vadd.f32 %v4164, %v4252
        %4254 = vmatmul.bf16.gmra.mxu0 %v3853
        %v4255 = vpop.f32.mrf.mxu0
        %v4256 = vadd.f32 %v4167, %v4255
        %v4257 = vpop.f32.mrf.mxu0
        %v4258 = vadd.f32 %v4169, %v4257
        %4259 = vmatmul.bf16.gmra.mxu0 %v3856
        %v4260 = vpop.f32.mrf.mxu0
        %v4261 = vadd.f32 %v4172, %v4260
        %v4262 = vpop.f32.mrf.mxu0
        %v4263 = vadd.f32 %v4174, %v4262
        %4264 = vmatmul.bf16.gmra.mxu0 %v3859
        %v4265 = vpop.f32.mrf.mxu0
        %v4266 = vadd.f32 %v4177, %v4265
        %v4267 = vpop.f32.mrf.mxu0
        %v4268 = vadd.f32 %v4179, %v4267
        %4269 = vmatmul.bf16.gmra.mxu0 %v3862
        %v4270 = vpop.f32.mrf.mxu0
        %v4271 = vadd.f32 %v4182, %v4270
        %v4272 = vpop.f32.mrf.mxu0
        %v4273 = vadd.f32 %v4184, %v4272
        %4274 = vmatmul.bf16.gmra.mxu0 %v3865
        %v4275 = vpop.f32.mrf.mxu0
        %v4276 = vadd.f32 %v4187, %v4275
        %v4277 = vpop.f32.mrf.mxu0
        %v4278 = vadd.f32 %v4189, %v4277
        %4279 = vdwg.mxu0
        %v4280 = vmax.f32 %v4201, 0.0
        %v4281 = vmax.f32 %v4203, 0.0
        %v4282 = vmax.f32 %v4206, 0.0
        %v4283 = vmax.f32 %v4208, 0.0
        %v4284 = vmax.f32 %v4211, 0.0
        %v4285 = vmax.f32 %v4213, 0.0
        %v4286 = vmax.f32 %v4216, 0.0
        %v4287 = vmax.f32 %v4218, 0.0
        %v4288 = vmax.f32 %v4221, 0.0
        %v4289 = vmax.f32 %v4223, 0.0
        %v4290 = vmax.f32 %v4226, 0.0
        %v4291 = vmax.f32 %v4228, 0.0
        %v4292 = vmax.f32 %v4231, 0.0
        %v4293 = vmax.f32 %v4233, 0.0
        %v4294 = vmax.f32 %v4236, 0.0
        %v4295 = vmax.f32 %v4238, 0.0
        %v4296 = vmax.f32 %v4241, 0.0
        %v4297 = vmax.f32 %v4243, 0.0
        %v4298 = vmax.f32 %v4246, 0.0
        %v4299 = vmax.f32 %v4248, 0.0
        %v4300 = vmax.f32 %v4251, 0.0
        %v4301 = vmax.f32 %v4253, 0.0
        %v4302 = vmax.f32 %v4256, 0.0
        %v4303 = vmax.f32 %v4258, 0.0
        %v4304 = vmax.f32 %v4261, 0.0
        %v4305 = vmax.f32 %v4263, 0.0
        %v4306 = vmax.f32 %v4266, 0.0
        %v4307 = vmax.f32 %v4268, 0.0
        %v4308 = vmax.f32 %v4271, 0.0
        %v4309 = vmax.f32 %v4273, 0.0
        %v4310 = vmax.f32 %v4276, 0.0
        %v4311 = vmax.f32 %v4278, 0.0
        %v4312 = vadd.f32 %v4280, %v2453
        %v4313 = vadd.f32 %v4281, %v2454
        %v4314 = vadd.f32 %v4282, %v2455
        %v4315 = vadd.f32 %v4283, %v2456
        %v4316 = vadd.f32 %v4284, %v2457
        %v4317 = vadd.f32 %v4285, %v2458
        %v4318 = vadd.f32 %v4286, %v2459
        %v4319 = vadd.f32 %v4287, %v2460
        %v4320 = vadd.f32 %v4288, %v2461
        %v4321 = vadd.f32 %v4289, %v2462
        %v4322 = vadd.f32 %v4290, %v2463
        %v4323 = vadd.f32 %v4291, %v2464
        %v4324 = vadd.f32 %v4292, %v2465
        %v4325 = vadd.f32 %v4293, %v2466
        %v4326 = vadd.f32 %v4294, %v2467
        %v4327 = vadd.f32 %v4295, %v2468
        %v4328 = vadd.f32 %v4296, %v2469
        %v4329 = vadd.f32 %v4297, %v2470
        %v4330 = vadd.f32 %v4298, %v2471
        %v4331 = vadd.f32 %v4299, %v2472
        %v4332 = vadd.f32 %v4300, %v2473
        %v4333 = vadd.f32 %v4301, %v2474
        %v4334 = vadd.f32 %v4302, %v2475
        %v4335 = vadd.f32 %v4303, %v2476
        %v4336 = vadd.f32 %v4304, %v2477
        %v4337 = vadd.f32 %v4305, %v2478
        %v4338 = vadd.f32 %v4306, %v2479
        %v4339 = vadd.f32 %v4307, %v2480
        %v4340 = vadd.f32 %v4308, %v2481
        %v4341 = vadd.f32 %v4309, %v2482
        %v4342 = vadd.f32 %v4310, %v2483
        %v4343 = vadd.f32 %v4311, %v2484
        %s4344 = scalar_lea.vmem %s4, 384
        %v4345 = vld [vmem:[%s4344] sm:$0xf]
        %v4346 = vld [vmem:[%s4344 + $0x4] sm:$0xf]
        %v4347 = vld [vmem:[%s4344 + $0x8] sm:$0xf]
        %v4348 = vld [vmem:[%s4344 + $0xc] sm:$0xf]
        %v4349 = vld [vmem:[%s4344 + $0x10] sm:$0xf]
        %v4350 = vld [vmem:[%s4344 + $0x14] sm:$0xf]
        %v4351 = vld [vmem:[%s4344 + $0x18] sm:$0xf]
        %v4352 = vld [vmem:[%s4344 + $0x1c] sm:$0xf]
        %v4353 = vld [vmem:[%s4344 + $0x20] sm:$0xf]
        %v4354 = vld [vmem:[%s4344 + $0x24] sm:$0xf]
        %v4355 = vld [vmem:[%s4344 + $0x28] sm:$0xf]
        %v4356 = vld [vmem:[%s4344 + $0x2c] sm:$0xf]
        %v4357 = vld [vmem:[%s4344 + $0x30] sm:$0xf]
        %v4358 = vld [vmem:[%s4344 + $0x34] sm:$0xf]
        %v4359 = vld [vmem:[%s4344 + $0x38] sm:$0xf]
        %v4360 = vld [vmem:[%s4344 + $0x3c] sm:$0xf]
        %v4361 = vld [vmem:[%s4344 + $0x40] sm:$0xf]
        %v4362 = vld [vmem:[%s4344 + $0x44] sm:$0xf]
        %v4363 = vld [vmem:[%s4344 + $0x48] sm:$0xf]
        %v4364 = vld [vmem:[%s4344 + $0x4c] sm:$0xf]
        %v4365 = vld [vmem:[%s4344 + $0x50] sm:$0xf]
        %v4366 = vld [vmem:[%s4344 + $0x54] sm:$0xf]
        %v4367 = vld [vmem:[%s4344 + $0x58] sm:$0xf]
        %v4368 = vld [vmem:[%s4344 + $0x5c] sm:$0xf]
        %v4369 = vld [vmem:[%s4344 + $0x60] sm:$0xf]
        %v4370 = vld [vmem:[%s4344 + $0x64] sm:$0xf]
        %v4371 = vld [vmem:[%s4344 + $0x68] sm:$0xf]
        %v4372 = vld [vmem:[%s4344 + $0x6c] sm:$0xf]
        %v4373 = vld [vmem:[%s4344 + $0x70] sm:$0xf]
        %v4374 = vld [vmem:[%s4344 + $0x74] sm:$0xf]
        %v4375 = vld [vmem:[%s4344 + $0x78] sm:$0xf]
        %v4376 = vld [vmem:[%s4344 + $0x7c] sm:$0xf]
        %v4377 = vld [vmem:[%s4344 + $0x80] sm:$0xf]
        %v4378 = vld [vmem:[%s4344 + $0x84] sm:$0xf]
        %v4379 = vld [vmem:[%s4344 + $0x88] sm:$0xf]
        %v4380 = vld [vmem:[%s4344 + $0x8c] sm:$0xf]
        %v4381 = vld [vmem:[%s4344 + $0x90] sm:$0xf]
        %v4382 = vld [vmem:[%s4344 + $0x94] sm:$0xf]
        %v4383 = vld [vmem:[%s4344 + $0x98] sm:$0xf]
        %v4384 = vld [vmem:[%s4344 + $0x9c] sm:$0xf]
        %v4385 = vld [vmem:[%s4344 + $0xa0] sm:$0xf]
        %v4386 = vld [vmem:[%s4344 + $0xa4] sm:$0xf]
        %v4387 = vld [vmem:[%s4344 + $0xa8] sm:$0xf]
        %v4388 = vld [vmem:[%s4344 + $0xac] sm:$0xf]
        %v4389 = vld [vmem:[%s4344 + $0xb0] sm:$0xf]
        %v4390 = vld [vmem:[%s4344 + $0xb4] sm:$0xf]
        %v4391 = vld [vmem:[%s4344 + $0xb8] sm:$0xf]
        %v4392 = vld [vmem:[%s4344 + $0xbc] sm:$0xf]
        %s4393 = scalar_lea.vmem %s5, 2
        %v4394 = vld [vmem:[%s4393] sm:$0x1]
        %v4428 = vrot.slane 0.0, 4
        %v4429 = vrot.slane %v4312, 4
        %v4430 = vsel %vm2568, %v4428, %v4429
        %v4431 = vrot.slane %v4313, 4
        %v4432 = vsel %vm2568, %v4429, %v4431
        %v4433 = vrot.slane %v4314, 4
        %v4434 = vsel %vm2568, %v4428, %v4433
        %v4435 = vrot.slane %v4315, 4
        %v4436 = vsel %vm2568, %v4433, %v4435
        %v4437 = vrot.slane %v4316, 4
        %v4438 = vsel %vm2568, %v4428, %v4437
        %v4439 = vrot.slane %v4317, 4
        %v4440 = vsel %vm2568, %v4437, %v4439
        %v4441 = vrot.slane %v4318, 4
        %v4442 = vsel %vm2568, %v4428, %v4441
        %v4443 = vrot.slane %v4319, 4
        %v4444 = vsel %vm2568, %v4441, %v4443
        %v4445 = vrot.slane %v4320, 4
        %v4446 = vsel %vm2568, %v4428, %v4445
        %v4447 = vrot.slane %v4321, 4
        %v4448 = vsel %vm2568, %v4445, %v4447
        %v4449 = vrot.slane %v4322, 4
        %v4450 = vsel %vm2568, %v4428, %v4449
        %v4451 = vrot.slane %v4323, 4
        %v4452 = vsel %vm2568, %v4449, %v4451
        %v4453 = vrot.slane %v4324, 4
        %v4454 = vsel %vm2568, %v4428, %v4453
        %v4455 = vrot.slane %v4325, 4
        %v4456 = vsel %vm2568, %v4453, %v4455
        %v4457 = vrot.slane %v4326, 4
        %v4458 = vsel %vm2568, %v4428, %v4457
        %v4459 = vrot.slane %v4327, 4
        %v4460 = vsel %vm2568, %v4457, %v4459
        %v4461 = vrot.slane %v4328, 4
        %v4462 = vsel %vm2568, %v4428, %v4461
        %v4463 = vrot.slane %v4329, 4
        %v4464 = vsel %vm2568, %v4461, %v4463
        %v4465 = vrot.slane %v4330, 4
        %v4466 = vsel %vm2568, %v4428, %v4465
        %v4467 = vrot.slane %v4331, 4
        %v4468 = vsel %vm2568, %v4465, %v4467
        %v4469 = vrot.slane %v4332, 4
        %v4470 = vsel %vm2568, %v4428, %v4469
        %v4471 = vrot.slane %v4333, 4
        %v4472 = vsel %vm2568, %v4469, %v4471
        %v4473 = vrot.slane %v4334, 4
        %v4474 = vsel %vm2568, %v4428, %v4473
        %v4475 = vrot.slane %v4335, 4
        %v4476 = vsel %vm2568, %v4473, %v4475
        %v4477 = vrot.slane %v4336, 4
        %v4478 = vsel %vm2568, %v4428, %v4477
        %v4479 = vrot.slane %v4337, 4
        %v4480 = vsel %vm2568, %v4477, %v4479
        %v4481 = vrot.slane %v4338, 4
        %v4482 = vsel %vm2568, %v4428, %v4481
        %v4483 = vrot.slane %v4339, 4
        %v4484 = vsel %vm2568, %v4481, %v4483
        %v4485 = vrot.slane %v4340, 4
        %v4486 = vsel %vm2568, %v4428, %v4485
        %v4487 = vrot.slane %v4341, 4
        %v4488 = vsel %vm2568, %v4485, %v4487
        %v4489 = vrot.slane %v4342, 4
        %v4490 = vsel %vm2568, %v4428, %v4489
        %v4491 = vrot.slane %v4343, 4
        %v4492 = vsel %vm2568, %v4489, %v4491
        %v4525 = vpack.c.bf16 %v4312, 0.0
        %v4526 = vpack.c.bf16 %v4432, %v4430
        %v4527 = vpack.c.bf16 %v4313, %v4312
        %v4528 = vpack.c.bf16 %v4314, 0.0
        %v4529 = vpack.c.bf16 %v4436, %v4434
        %v4530 = vpack.c.bf16 %v4315, %v4314
        %v4531 = vpack.c.bf16 %v4316, 0.0
        %v4532 = vpack.c.bf16 %v4440, %v4438
        %v4533 = vpack.c.bf16 %v4317, %v4316
        %v4534 = vpack.c.bf16 %v4318, 0.0
        %v4535 = vpack.c.bf16 %v4444, %v4442
        %v4536 = vpack.c.bf16 %v4319, %v4318
        %v4537 = vpack.c.bf16 %v4320, 0.0
        %v4538 = vpack.c.bf16 %v4448, %v4446
        %v4539 = vpack.c.bf16 %v4321, %v4320
        %v4540 = vpack.c.bf16 %v4322, 0.0
        %v4541 = vpack.c.bf16 %v4452, %v4450
        %v4542 = vpack.c.bf16 %v4323, %v4322
        %v4543 = vpack.c.bf16 %v4324, 0.0
        %v4544 = vpack.c.bf16 %v4456, %v4454
        %v4545 = vpack.c.bf16 %v4325, %v4324
        %v4546 = vpack.c.bf16 %v4326, 0.0
        %v4547 = vpack.c.bf16 %v4460, %v4458
        %v4548 = vpack.c.bf16 %v4327, %v4326
        %v4549 = vpack.c.bf16 %v4328, 0.0
        %v4550 = vpack.c.bf16 %v4464, %v4462
        %v4551 = vpack.c.bf16 %v4329, %v4328
        %v4552 = vpack.c.bf16 %v4330, 0.0
        %v4553 = vpack.c.bf16 %v4468, %v4466
        %v4554 = vpack.c.bf16 %v4331, %v4330
        %v4555 = vpack.c.bf16 %v4332, 0.0
        %v4556 = vpack.c.bf16 %v4472, %v4470
        %v4557 = vpack.c.bf16 %v4333, %v4332
        %v4558 = vpack.c.bf16 %v4334, 0.0
        %v4559 = vpack.c.bf16 %v4476, %v4474
        %v4560 = vpack.c.bf16 %v4335, %v4334
        %v4561 = vpack.c.bf16 %v4336, 0.0
        %v4562 = vpack.c.bf16 %v4480, %v4478
        %v4563 = vpack.c.bf16 %v4337, %v4336
        %v4564 = vpack.c.bf16 %v4338, 0.0
        %v4565 = vpack.c.bf16 %v4484, %v4482
        %v4566 = vpack.c.bf16 %v4339, %v4338
        %v4567 = vpack.c.bf16 %v4340, 0.0
        %v4568 = vpack.c.bf16 %v4488, %v4486
        %v4569 = vpack.c.bf16 %v4341, %v4340
        %v4570 = vpack.c.bf16 %v4342, 0.0
        %v4571 = vpack.c.bf16 %v4492, %v4490
        %v4572 = vpack.c.bf16 %v4343, %v4342
        %v4574 = vperm.slane %v4394, 0
        %v4624 = vunpack.c.l.b16 %v4345
        %v4625 = vunpack.c.l.b16 %v4346
        %v4626 = vunpack.c.l.b16 %v4347
        %v4627 = vunpack.c.l.b16 %v4348
        %v4628 = vunpack.c.l.b16 %v4349
        %v4629 = vunpack.c.l.b16 %v4350
        %v4630 = vunpack.c.l.b16 %v4351
        %v4631 = vunpack.c.l.b16 %v4352
        %v4632 = vunpack.c.l.b16 %v4353
        %v4633 = vunpack.c.l.b16 %v4354
        %v4634 = vunpack.c.l.b16 %v4355
        %v4635 = vunpack.c.l.b16 %v4356
        %v4636 = vunpack.c.l.b16 %v4357
        %v4637 = vunpack.c.l.b16 %v4358
        %v4638 = vunpack.c.l.b16 %v4359
        %v4639 = vunpack.c.l.b16 %v4360
        %v4640 = vunpack.c.l.b16 %v4361
        %v4641 = vunpack.c.l.b16 %v4362
        %v4642 = vunpack.c.l.b16 %v4363
        %v4643 = vunpack.c.l.b16 %v4364
        %v4644 = vunpack.c.l.b16 %v4365
        %v4645 = vunpack.c.l.b16 %v4366
        %v4646 = vunpack.c.l.b16 %v4367
        %v4647 = vunpack.c.l.b16 %v4368
        %v4648 = vunpack.c.l.b16 %v4369
        %v4649 = vunpack.c.l.b16 %v4370
        %v4650 = vunpack.c.l.b16 %v4371
        %v4651 = vunpack.c.l.b16 %v4372
        %v4652 = vunpack.c.l.b16 %v4373
        %v4653 = vunpack.c.l.b16 %v4374
        %v4654 = vunpack.c.l.b16 %v4375
        %v4655 = vunpack.c.l.b16 %v4376
        %v4656 = vunpack.c.l.b16 %v4377
        %v4657 = vunpack.c.l.b16 %v4378
        %v4658 = vunpack.c.l.b16 %v4379
        %v4659 = vunpack.c.l.b16 %v4380
        %v4660 = vunpack.c.l.b16 %v4381
        %v4661 = vunpack.c.l.b16 %v4382
        %v4662 = vunpack.c.l.b16 %v4383
        %v4663 = vunpack.c.l.b16 %v4384
        %v4664 = vunpack.c.l.b16 %v4385
        %v4665 = vunpack.c.l.b16 %v4386
        %v4666 = vunpack.c.l.b16 %v4387
        %v4667 = vunpack.c.l.b16 %v4388
        %v4668 = vunpack.c.l.b16 %v4389
        %v4669 = vunpack.c.l.b16 %v4390
        %v4670 = vunpack.c.l.b16 %v4391
        %v4671 = vunpack.c.l.b16 %v4392
        %v4672 = vpack.c.b16 %v4625, %v4624
        %v4673 = vpack.c.b16 %v4627, %v4626
        %v4674 = vpack.c.b16 %v4629, %v4628
        %v4675 = vpack.c.b16 %v4631, %v4630
        %v4676 = vpack.c.b16 %v4633, %v4632
        %v4677 = vpack.c.b16 %v4635, %v4634
        %v4678 = vpack.c.b16 %v4637, %v4636
        %v4679 = vpack.c.b16 %v4639, %v4638
        %v4680 = vpack.c.b16 %v4641, %v4640
        %v4681 = vpack.c.b16 %v4643, %v4642
        %v4682 = vpack.c.b16 %v4645, %v4644
        %v4683 = vpack.c.b16 %v4647, %v4646
        %v4684 = vpack.c.b16 %v4649, %v4648
        %v4685 = vpack.c.b16 %v4651, %v4650
        %v4686 = vpack.c.b16 %v4653, %v4652
        %v4687 = vpack.c.b16 %v4655, %v4654
        %v4688 = vpack.c.b16 %v4657, %v4656
        %v4689 = vpack.c.b16 %v4659, %v4658
        %v4690 = vpack.c.b16 %v4661, %v4660
        %v4691 = vpack.c.b16 %v4663, %v4662
        %v4692 = vpack.c.b16 %v4665, %v4664
        %v4693 = vpack.c.b16 %v4667, %v4666
        %v4694 = vpack.c.b16 %v4669, %v4668
        %v4695 = vpack.c.b16 %v4671, %v4670
        %4720 = vmatpush.bf16.msra.mxu0 %v4679
        %4721 = vmatpush.bf16.msra.mxu0 %v4678
        %4722 = vmatpush.bf16.msra.mxu0 %v4677
        %4723 = vmatpush.bf16.msra.mxu0 %v4676
        %4724 = vmatpush.bf16.msra.mxu0 %v4675
        %4725 = vmatpush.bf16.msra.mxu0 %v4674
        %4726 = vmatpush.bf16.msra.mxu0 %v4673
        %4727 = vmatpush.bf16.msra.mxu0 %v4672
        %4728 = vmatmul.bf16.gmra.mxu0 %v4525
        %v4729 = vpop.f32.mrf.mxu0
        %v4730 = vadd.f32 %v4574, %v4729
        %v4731 = vpop.f32.mrf.mxu0
        %v4732 = vadd.f32 %v4574, %v4731
        %4733 = vmatmul.bf16.gmra.mxu0 %v4528
        %v4734 = vpop.f32.mrf.mxu0
        %v4735 = vadd.f32 %v4574, %v4734
        %v4736 = vpop.f32.mrf.mxu0
        %v4737 = vadd.f32 %v4574, %v4736
        %4738 = vmatmul.bf16.gmra.mxu0 %v4531
        %v4739 = vpop.f32.mrf.mxu0
        %v4740 = vadd.f32 %v4574, %v4739
        %v4741 = vpop.f32.mrf.mxu0
        %v4742 = vadd.f32 %v4574, %v4741
        %4743 = vmatmul.bf16.gmra.mxu0 %v4534
        %v4744 = vpop.f32.mrf.mxu0
        %v4745 = vadd.f32 %v4574, %v4744
        %v4746 = vpop.f32.mrf.mxu0
        %v4747 = vadd.f32 %v4574, %v4746
        %4748 = vmatmul.bf16.gmra.mxu0 %v4537
        %v4749 = vpop.f32.mrf.mxu0
        %v4750 = vadd.f32 %v4574, %v4749
        %v4751 = vpop.f32.mrf.mxu0
        %v4752 = vadd.f32 %v4574, %v4751
        %4753 = vmatmul.bf16.gmra.mxu0 %v4540
        %v4754 = vpop.f32.mrf.mxu0
        %v4755 = vadd.f32 %v4574, %v4754
        %v4756 = vpop.f32.mrf.mxu0
        %v4757 = vadd.f32 %v4574, %v4756
        %4758 = vmatmul.bf16.gmra.mxu0 %v4543
        %v4759 = vpop.f32.mrf.mxu0
        %v4760 = vadd.f32 %v4574, %v4759
        %v4761 = vpop.f32.mrf.mxu0
        %v4762 = vadd.f32 %v4574, %v4761
        %4763 = vmatmul.bf16.gmra.mxu0 %v4546
        %v4764 = vpop.f32.mrf.mxu0
        %v4765 = vadd.f32 %v4574, %v4764
        %v4766 = vpop.f32.mrf.mxu0
        %v4767 = vadd.f32 %v4574, %v4766
        %4768 = vmatmul.bf16.gmra.mxu0 %v4549
        %v4769 = vpop.f32.mrf.mxu0
        %v4770 = vadd.f32 %v4574, %v4769
        %v4771 = vpop.f32.mrf.mxu0
        %v4772 = vadd.f32 %v4574, %v4771
        %4773 = vmatmul.bf16.gmra.mxu0 %v4552
        %v4774 = vpop.f32.mrf.mxu0
        %v4775 = vadd.f32 %v4574, %v4774
        %v4776 = vpop.f32.mrf.mxu0
        %v4777 = vadd.f32 %v4574, %v4776
        %4778 = vmatmul.bf16.gmra.mxu0 %v4555
        %v4779 = vpop.f32.mrf.mxu0
        %v4780 = vadd.f32 %v4574, %v4779
        %v4781 = vpop.f32.mrf.mxu0
        %v4782 = vadd.f32 %v4574, %v4781
        %4783 = vmatmul.bf16.gmra.mxu0 %v4558
        %v4784 = vpop.f32.mrf.mxu0
        %v4785 = vadd.f32 %v4574, %v4784
        %v4786 = vpop.f32.mrf.mxu0
        %v4787 = vadd.f32 %v4574, %v4786
        %4788 = vmatmul.bf16.gmra.mxu0 %v4561
        %v4789 = vpop.f32.mrf.mxu0
        %v4790 = vadd.f32 %v4574, %v4789
        %v4791 = vpop.f32.mrf.mxu0
        %v4792 = vadd.f32 %v4574, %v4791
        %4793 = vmatmul.bf16.gmra.mxu0 %v4564
        %v4794 = vpop.f32.mrf.mxu0
        %v4795 = vadd.f32 %v4574, %v4794
        %v4796 = vpop.f32.mrf.mxu0
        %v4797 = vadd.f32 %v4574, %v4796
        %4798 = vmatmul.bf16.gmra.mxu0 %v4567
        %v4799 = vpop.f32.mrf.mxu0
        %v4800 = vadd.f32 %v4574, %v4799
        %v4801 = vpop.f32.mrf.mxu0
        %v4802 = vadd.f32 %v4574, %v4801
        %4803 = vmatmul.bf16.gmra.mxu0 %v4570
        %v4804 = vpop.f32.mrf.mxu0
        %v4805 = vadd.f32 %v4574, %v4804
        %v4806 = vpop.f32.mrf.mxu0
        %v4807 = vadd.f32 %v4574, %v4806
        %4808 = vdwg.mxu0
        %4809 = vmatpush.bf16.msra.mxu0 %v4687
        %4810 = vmatpush.bf16.msra.mxu0 %v4686
        %4811 = vmatpush.bf16.msra.mxu0 %v4685
        %4812 = vmatpush.bf16.msra.mxu0 %v4684
        %4813 = vmatpush.bf16.msra.mxu0 %v4683
        %4814 = vmatpush.bf16.msra.mxu0 %v4682
        %4815 = vmatpush.bf16.msra.mxu0 %v4681
        %4816 = vmatpush.bf16.msra.mxu0 %v4680
        %4817 = vmatmul.bf16.gmra.mxu0 %v4526
        %v4818 = vpop.f32.mrf.mxu0
        %v4819 = vadd.f32 %v4730, %v4818
        %v4820 = vpop.f32.mrf.mxu0
        %v4821 = vadd.f32 %v4732, %v4820
        %4822 = vmatmul.bf16.gmra.mxu0 %v4529
        %v4823 = vpop.f32.mrf.mxu0
        %v4824 = vadd.f32 %v4735, %v4823
        %v4825 = vpop.f32.mrf.mxu0
        %v4826 = vadd.f32 %v4737, %v4825
        %4827 = vmatmul.bf16.gmra.mxu0 %v4532
        %v4828 = vpop.f32.mrf.mxu0
        %v4829 = vadd.f32 %v4740, %v4828
        %v4830 = vpop.f32.mrf.mxu0
        %v4831 = vadd.f32 %v4742, %v4830
        %4832 = vmatmul.bf16.gmra.mxu0 %v4535
        %v4833 = vpop.f32.mrf.mxu0
        %v4834 = vadd.f32 %v4745, %v4833
        %v4835 = vpop.f32.mrf.mxu0
        %v4836 = vadd.f32 %v4747, %v4835
        %4837 = vmatmul.bf16.gmra.mxu0 %v4538
        %v4838 = vpop.f32.mrf.mxu0
        %v4839 = vadd.f32 %v4750, %v4838
        %v4840 = vpop.f32.mrf.mxu0
        %v4841 = vadd.f32 %v4752, %v4840
        %4842 = vmatmul.bf16.gmra.mxu0 %v4541
        %v4843 = vpop.f32.mrf.mxu0
        %v4844 = vadd.f32 %v4755, %v4843
        %v4845 = vpop.f32.mrf.mxu0
        %v4846 = vadd.f32 %v4757, %v4845
        %4847 = vmatmul.bf16.gmra.mxu0 %v4544
        %v4848 = vpop.f32.mrf.mxu0
        %v4849 = vadd.f32 %v4760, %v4848
        %v4850 = vpop.f32.mrf.mxu0
        %v4851 = vadd.f32 %v4762, %v4850
        %4852 = vmatmul.bf16.gmra.mxu0 %v4547
        %v4853 = vpop.f32.mrf.mxu0
        %v4854 = vadd.f32 %v4765, %v4853
        %v4855 = vpop.f32.mrf.mxu0
        %v4856 = vadd.f32 %v4767, %v4855
        %4857 = vmatmul.bf16.gmra.mxu0 %v4550
        %v4858 = vpop.f32.mrf.mxu0
        %v4859 = vadd.f32 %v4770, %v4858
        %v4860 = vpop.f32.mrf.mxu0
        %v4861 = vadd.f32 %v4772, %v4860
        %4862 = vmatmul.bf16.gmra.mxu0 %v4553
        %v4863 = vpop.f32.mrf.mxu0
        %v4864 = vadd.f32 %v4775, %v4863
        %v4865 = vpop.f32.mrf.mxu0
        %v4866 = vadd.f32 %v4777, %v4865
        %4867 = vmatmul.bf16.gmra.mxu0 %v4556
        %v4868 = vpop.f32.mrf.mxu0
        %v4869 = vadd.f32 %v4780, %v4868
        %v4870 = vpop.f32.mrf.mxu0
        %v4871 = vadd.f32 %v4782, %v4870
        %4872 = vmatmul.bf16.gmra.mxu0 %v4559
        %v4873 = vpop.f32.mrf.mxu0
        %v4874 = vadd.f32 %v4785, %v4873
        %v4875 = vpop.f32.mrf.mxu0
        %v4876 = vadd.f32 %v4787, %v4875
        %4877 = vmatmul.bf16.gmra.mxu0 %v4562
        %v4878 = vpop.f32.mrf.mxu0
        %v4879 = vadd.f32 %v4790, %v4878
        %v4880 = vpop.f32.mrf.mxu0
        %v4881 = vadd.f32 %v4792, %v4880
        %4882 = vmatmul.bf16.gmra.mxu0 %v4565
        %v4883 = vpop.f32.mrf.mxu0
        %v4884 = vadd.f32 %v4795, %v4883
        %v4885 = vpop.f32.mrf.mxu0
        %v4886 = vadd.f32 %v4797, %v4885
        %4887 = vmatmul.bf16.gmra.mxu0 %v4568
        %v4888 = vpop.f32.mrf.mxu0
        %v4889 = vadd.f32 %v4800, %v4888
        %v4890 = vpop.f32.mrf.mxu0
        %v4891 = vadd.f32 %v4802, %v4890
        %4892 = vmatmul.bf16.gmra.mxu0 %v4571
        %v4893 = vpop.f32.mrf.mxu0
        %v4894 = vadd.f32 %v4805, %v4893
        %v4895 = vpop.f32.mrf.mxu0
        %v4896 = vadd.f32 %v4807, %v4895
        %4897 = vdwg.mxu0
        %4898 = vmatpush.bf16.msra.mxu0 %v4695
        %4899 = vmatpush.bf16.msra.mxu0 %v4694
        %4900 = vmatpush.bf16.msra.mxu0 %v4693
        %4901 = vmatpush.bf16.msra.mxu0 %v4692
        %4902 = vmatpush.bf16.msra.mxu0 %v4691
        %4903 = vmatpush.bf16.msra.mxu0 %v4690
        %4904 = vmatpush.bf16.msra.mxu0 %v4689
        %4905 = vmatpush.bf16.msra.mxu0 %v4688
        %4906 = vmatmul.bf16.gmra.mxu0 %v4527
        %v4907 = vpop.f32.mrf.mxu0
        %v4908 = vadd.f32 %v4819, %v4907
        %v4909 = vpop.f32.mrf.mxu0
        %v4910 = vadd.f32 %v4821, %v4909
        %4911 = vmatmul.bf16.gmra.mxu0 %v4530
        %v4912 = vpop.f32.mrf.mxu0
        %v4913 = vadd.f32 %v4824, %v4912
        %v4914 = vpop.f32.mrf.mxu0
        %v4915 = vadd.f32 %v4826, %v4914
        %4916 = vmatmul.bf16.gmra.mxu0 %v4533
        %v4917 = vpop.f32.mrf.mxu0
        %v4918 = vadd.f32 %v4829, %v4917
        %v4919 = vpop.f32.mrf.mxu0
        %v4920 = vadd.f32 %v4831, %v4919
        %4921 = vmatmul.bf16.gmra.mxu0 %v4536
        %v4922 = vpop.f32.mrf.mxu0
        %v4923 = vadd.f32 %v4834, %v4922
        %v4924 = vpop.f32.mrf.mxu0
        %v4925 = vadd.f32 %v4836, %v4924
        %4926 = vmatmul.bf16.gmra.mxu0 %v4539
        %v4927 = vpop.f32.mrf.mxu0
        %v4928 = vadd.f32 %v4839, %v4927
        %v4929 = vpop.f32.mrf.mxu0
        %v4930 = vadd.f32 %v4841, %v4929
        %4931 = vmatmul.bf16.gmra.mxu0 %v4542
        %v4932 = vpop.f32.mrf.mxu0
        %v4933 = vadd.f32 %v4844, %v4932
        %v4934 = vpop.f32.mrf.mxu0
        %v4935 = vadd.f32 %v4846, %v4934
        %4936 = vmatmul.bf16.gmra.mxu0 %v4545
        %v4937 = vpop.f32.mrf.mxu0
        %v4938 = vadd.f32 %v4849, %v4937
        %v4939 = vpop.f32.mrf.mxu0
        %v4940 = vadd.f32 %v4851, %v4939
        %4941 = vmatmul.bf16.gmra.mxu0 %v4548
        %v4942 = vpop.f32.mrf.mxu0
        %v4943 = vadd.f32 %v4854, %v4942
        %v4944 = vpop.f32.mrf.mxu0
        %v4945 = vadd.f32 %v4856, %v4944
        %4946 = vmatmul.bf16.gmra.mxu0 %v4551
        %v4947 = vpop.f32.mrf.mxu0
        %v4948 = vadd.f32 %v4859, %v4947
        %v4949 = vpop.f32.mrf.mxu0
        %v4950 = vadd.f32 %v4861, %v4949
        %4951 = vmatmul.bf16.gmra.mxu0 %v4554
        %v4952 = vpop.f32.mrf.mxu0
        %v4953 = vadd.f32 %v4864, %v4952
        %v4954 = vpop.f32.mrf.mxu0
        %v4955 = vadd.f32 %v4866, %v4954
        %4956 = vmatmul.bf16.gmra.mxu0 %v4557
        %v4957 = vpop.f32.mrf.mxu0
        %v4958 = vadd.f32 %v4869, %v4957
        %v4959 = vpop.f32.mrf.mxu0
        %v4960 = vadd.f32 %v4871, %v4959
        %4961 = vmatmul.bf16.gmra.mxu0 %v4560
        %v4962 = vpop.f32.mrf.mxu0
        %v4963 = vadd.f32 %v4874, %v4962
        %v4964 = vpop.f32.mrf.mxu0
        %v4965 = vadd.f32 %v4876, %v4964
        %4966 = vmatmul.bf16.gmra.mxu0 %v4563
        %v4967 = vpop.f32.mrf.mxu0
        %v4968 = vadd.f32 %v4879, %v4967
        %v4969 = vpop.f32.mrf.mxu0
        %v4970 = vadd.f32 %v4881, %v4969
        %4971 = vmatmul.bf16.gmra.mxu0 %v4566
        %v4972 = vpop.f32.mrf.mxu0
        %v4973 = vadd.f32 %v4884, %v4972
        %v4974 = vpop.f32.mrf.mxu0
        %v4975 = vadd.f32 %v4886, %v4974
        %4976 = vmatmul.bf16.gmra.mxu0 %v4569
        %v4977 = vpop.f32.mrf.mxu0
        %v4978 = vadd.f32 %v4889, %v4977
        %v4979 = vpop.f32.mrf.mxu0
        %v4980 = vadd.f32 %v4891, %v4979
        %4981 = vmatmul.bf16.gmra.mxu0 %v4572
        %v4982 = vpop.f32.mrf.mxu0
        %v4983 = vadd.f32 %v4894, %v4982
        %v4984 = vpop.f32.mrf.mxu0
        %v4985 = vadd.f32 %v4896, %v4984
        %4986 = vdwg.mxu0
        %v4987 = vmax.f32 %v4908, 0.0
        %v4988 = vmax.f32 %v4910, 0.0
        %v4989 = vmax.f32 %v4913, 0.0
        %v4990 = vmax.f32 %v4915, 0.0
        %v4991 = vmax.f32 %v4918, 0.0
        %v4992 = vmax.f32 %v4920, 0.0
        %v4993 = vmax.f32 %v4923, 0.0
        %v4994 = vmax.f32 %v4925, 0.0
        %v4995 = vmax.f32 %v4928, 0.0
        %v4996 = vmax.f32 %v4930, 0.0
        %v4997 = vmax.f32 %v4933, 0.0
        %v4998 = vmax.f32 %v4935, 0.0
        %v4999 = vmax.f32 %v4938, 0.0
        %v5000 = vmax.f32 %v4940, 0.0
        %v5001 = vmax.f32 %v4943, 0.0
        %v5002 = vmax.f32 %v4945, 0.0
        %v5003 = vmax.f32 %v4948, 0.0
        %v5004 = vmax.f32 %v4950, 0.0
        %v5005 = vmax.f32 %v4953, 0.0
        %v5006 = vmax.f32 %v4955, 0.0
        %v5007 = vmax.f32 %v4958, 0.0
        %v5008 = vmax.f32 %v4960, 0.0
        %v5009 = vmax.f32 %v4963, 0.0
        %v5010 = vmax.f32 %v4965, 0.0
        %v5011 = vmax.f32 %v4968, 0.0
        %v5012 = vmax.f32 %v4970, 0.0
        %v5013 = vmax.f32 %v4973, 0.0
        %v5014 = vmax.f32 %v4975, 0.0
        %v5015 = vmax.f32 %v4978, 0.0
        %v5016 = vmax.f32 %v4980, 0.0
        %v5017 = vmax.f32 %v4983, 0.0
        %v5018 = vmax.f32 %v4985, 0.0
        %s5019 = scalar_lea.vmem [#allocation2], 384
        %v5020 = vld [vmem:[%s5019] sm:$0xf]
        %v5021 = vld [vmem:[%s5019 + $0x4] sm:$0xf]
        %v5022 = vld [vmem:[%s5019 + $0x8] sm:$0xf]
        %v5023 = vld [vmem:[%s5019 + $0xc] sm:$0xf]
        %v5024 = vld [vmem:[%s5019 + $0x10] sm:$0xf]
        %v5025 = vld [vmem:[%s5019 + $0x14] sm:$0xf]
        %v5026 = vld [vmem:[%s5019 + $0x18] sm:$0xf]
        %v5027 = vld [vmem:[%s5019 + $0x1c] sm:$0xf]
        %v5028 = vld [vmem:[%s5019 + $0x20] sm:$0xf]
        %v5029 = vld [vmem:[%s5019 + $0x24] sm:$0xf]
        %v5030 = vld [vmem:[%s5019 + $0x28] sm:$0xf]
        %v5031 = vld [vmem:[%s5019 + $0x2c] sm:$0xf]
        %v5032 = vld [vmem:[%s5019 + $0x30] sm:$0xf]
        %v5033 = vld [vmem:[%s5019 + $0x34] sm:$0xf]
        %v5034 = vld [vmem:[%s5019 + $0x38] sm:$0xf]
        %v5035 = vld [vmem:[%s5019 + $0x3c] sm:$0xf]
        %v5036 = vld [vmem:[%s5019 + $0x40] sm:$0xf]
        %v5037 = vld [vmem:[%s5019 + $0x44] sm:$0xf]
        %v5038 = vld [vmem:[%s5019 + $0x48] sm:$0xf]
        %v5039 = vld [vmem:[%s5019 + $0x4c] sm:$0xf]
        %v5040 = vld [vmem:[%s5019 + $0x50] sm:$0xf]
        %v5041 = vld [vmem:[%s5019 + $0x54] sm:$0xf]
        %v5042 = vld [vmem:[%s5019 + $0x58] sm:$0xf]
        %v5043 = vld [vmem:[%s5019 + $0x5c] sm:$0xf]
        %v5044 = vld [vmem:[%s5019 + $0x60] sm:$0xf]
        %v5045 = vld [vmem:[%s5019 + $0x64] sm:$0xf]
        %v5046 = vld [vmem:[%s5019 + $0x68] sm:$0xf]
        %v5047 = vld [vmem:[%s5019 + $0x6c] sm:$0xf]
        %v5048 = vld [vmem:[%s5019 + $0x70] sm:$0xf]
        %v5049 = vld [vmem:[%s5019 + $0x74] sm:$0xf]
        %v5050 = vld [vmem:[%s5019 + $0x78] sm:$0xf]
        %v5051 = vld [vmem:[%s5019 + $0x7c] sm:$0xf]
        %v5052 = vld [vmem:[%s5019 + $0x80] sm:$0xf]
        %v5053 = vld [vmem:[%s5019 + $0x84] sm:$0xf]
        %v5054 = vld [vmem:[%s5019 + $0x88] sm:$0xf]
        %v5055 = vld [vmem:[%s5019 + $0x8c] sm:$0xf]
        %v5056 = vld [vmem:[%s5019 + $0x90] sm:$0xf]
        %v5057 = vld [vmem:[%s5019 + $0x94] sm:$0xf]
        %v5058 = vld [vmem:[%s5019 + $0x98] sm:$0xf]
        %v5059 = vld [vmem:[%s5019 + $0x9c] sm:$0xf]
        %v5060 = vld [vmem:[%s5019 + $0xa0] sm:$0xf]
        %v5061 = vld [vmem:[%s5019 + $0xa4] sm:$0xf]
        %v5062 = vld [vmem:[%s5019 + $0xa8] sm:$0xf]
        %v5063 = vld [vmem:[%s5019 + $0xac] sm:$0xf]
        %v5064 = vld [vmem:[%s5019 + $0xb0] sm:$0xf]
        %v5065 = vld [vmem:[%s5019 + $0xb4] sm:$0xf]
        %v5066 = vld [vmem:[%s5019 + $0xb8] sm:$0xf]
        %v5067 = vld [vmem:[%s5019 + $0xbc] sm:$0xf]
        %s5068 = scalar_lea.vmem %s7, 2
        %v5069 = vld [vmem:[%s5068] sm:$0x1]
        %v5102 = vrot.slane %v4987, 4
        %v5103 = vsel %vm2568, %v4428, %v5102
        %v5104 = vrot.slane %v4988, 4
        %v5105 = vsel %vm2568, %v5102, %v5104
        %v5106 = vrot.slane %v4989, 4
        %v5107 = vsel %vm2568, %v4428, %v5106
        %v5108 = vrot.slane %v4990, 4
        %v5109 = vsel %vm2568, %v5106, %v5108
        %v5110 = vrot.slane %v4991, 4
        %v5111 = vsel %vm2568, %v4428, %v5110
        %v5112 = vrot.slane %v4992, 4
        %v5113 = vsel %vm2568, %v5110, %v5112
        %v5114 = vrot.slane %v4993, 4
        %v5115 = vsel %vm2568, %v4428, %v5114
        %v5116 = vrot.slane %v4994, 4
        %v5117 = vsel %vm2568, %v5114, %v5116
        %v5118 = vrot.slane %v4995, 4
        %v5119 = vsel %vm2568, %v4428, %v5118
        %v5120 = vrot.slane %v4996, 4
        %v5121 = vsel %vm2568, %v5118, %v5120
        %v5122 = vrot.slane %v4997, 4
        %v5123 = vsel %vm2568, %v4428, %v5122
        %v5124 = vrot.slane %v4998, 4
        %v5125 = vsel %vm2568, %v5122, %v5124
        %v5126 = vrot.slane %v4999, 4
        %v5127 = vsel %vm2568, %v4428, %v5126
        %v5128 = vrot.slane %v5000, 4
        %v5129 = vsel %vm2568, %v5126, %v5128
        %v5130 = vrot.slane %v5001, 4
        %v5131 = vsel %vm2568, %v4428, %v5130
        %v5132 = vrot.slane %v5002, 4
        %v5133 = vsel %vm2568, %v5130, %v5132
        %v5134 = vrot.slane %v5003, 4
        %v5135 = vsel %vm2568, %v4428, %v5134
        %v5136 = vrot.slane %v5004, 4
        %v5137 = vsel %vm2568, %v5134, %v5136
        %v5138 = vrot.slane %v5005, 4
        %v5139 = vsel %vm2568, %v4428, %v5138
        %v5140 = vrot.slane %v5006, 4
        %v5141 = vsel %vm2568, %v5138, %v5140
        %v5142 = vrot.slane %v5007, 4
        %v5143 = vsel %vm2568, %v4428, %v5142
        %v5144 = vrot.slane %v5008, 4
        %v5145 = vsel %vm2568, %v5142, %v5144
        %v5146 = vrot.slane %v5009, 4
        %v5147 = vsel %vm2568, %v4428, %v5146
        %v5148 = vrot.slane %v5010, 4
        %v5149 = vsel %vm2568, %v5146, %v5148
        %v5150 = vrot.slane %v5011, 4
        %v5151 = vsel %vm2568, %v4428, %v5150
        %v5152 = vrot.slane %v5012, 4
        %v5153 = vsel %vm2568, %v5150, %v5152
        %v5154 = vrot.slane %v5013, 4
        %v5155 = vsel %vm2568, %v4428, %v5154
        %v5156 = vrot.slane %v5014, 4
        %v5157 = vsel %vm2568, %v5154, %v5156
        %v5158 = vrot.slane %v5015, 4
        %v5159 = vsel %vm2568, %v4428, %v5158
        %v5160 = vrot.slane %v5016, 4
        %v5161 = vsel %vm2568, %v5158, %v5160
        %v5162 = vrot.slane %v5017, 4
        %v5163 = vsel %vm2568, %v4428, %v5162
        %v5164 = vrot.slane %v5018, 4
        %v5165 = vsel %vm2568, %v5162, %v5164
        %v5198 = vpack.c.bf16 %v4987, 0.0
        %v5199 = vpack.c.bf16 %v5105, %v5103
        %v5200 = vpack.c.bf16 %v4988, %v4987
        %v5201 = vpack.c.bf16 %v4989, 0.0
        %v5202 = vpack.c.bf16 %v5109, %v5107
        %v5203 = vpack.c.bf16 %v4990, %v4989
        %v5204 = vpack.c.bf16 %v4991, 0.0
        %v5205 = vpack.c.bf16 %v5113, %v5111
        %v5206 = vpack.c.bf16 %v4992, %v4991
        %v5207 = vpack.c.bf16 %v4993, 0.0
        %v5208 = vpack.c.bf16 %v5117, %v5115
        %v5209 = vpack.c.bf16 %v4994, %v4993
        %v5210 = vpack.c.bf16 %v4995, 0.0
        %v5211 = vpack.c.bf16 %v5121, %v5119
        %v5212 = vpack.c.bf16 %v4996, %v4995
        %v5213 = vpack.c.bf16 %v4997, 0.0
        %v5214 = vpack.c.bf16 %v5125, %v5123
        %v5215 = vpack.c.bf16 %v4998, %v4997
        %v5216 = vpack.c.bf16 %v4999, 0.0
        %v5217 = vpack.c.bf16 %v5129, %v5127
        %v5218 = vpack.c.bf16 %v5000, %v4999
        %v5219 = vpack.c.bf16 %v5001, 0.0
        %v5220 = vpack.c.bf16 %v5133, %v5131
        %v5221 = vpack.c.bf16 %v5002, %v5001
        %v5222 = vpack.c.bf16 %v5003, 0.0
        %v5223 = vpack.c.bf16 %v5137, %v5135
        %v5224 = vpack.c.bf16 %v5004, %v5003
        %v5225 = vpack.c.bf16 %v5005, 0.0
        %v5226 = vpack.c.bf16 %v5141, %v5139
        %v5227 = vpack.c.bf16 %v5006, %v5005
        %v5228 = vpack.c.bf16 %v5007, 0.0
        %v5229 = vpack.c.bf16 %v5145, %v5143
        %v5230 = vpack.c.bf16 %v5008, %v5007
        %v5231 = vpack.c.bf16 %v5009, 0.0
        %v5232 = vpack.c.bf16 %v5149, %v5147
        %v5233 = vpack.c.bf16 %v5010, %v5009
        %v5234 = vpack.c.bf16 %v5011, 0.0
        %v5235 = vpack.c.bf16 %v5153, %v5151
        %v5236 = vpack.c.bf16 %v5012, %v5011
        %v5237 = vpack.c.bf16 %v5013, 0.0
        %v5238 = vpack.c.bf16 %v5157, %v5155
        %v5239 = vpack.c.bf16 %v5014, %v5013
        %v5240 = vpack.c.bf16 %v5015, 0.0
        %v5241 = vpack.c.bf16 %v5161, %v5159
        %v5242 = vpack.c.bf16 %v5016, %v5015
        %v5243 = vpack.c.bf16 %v5017, 0.0
        %v5244 = vpack.c.bf16 %v5165, %v5163
        %v5245 = vpack.c.bf16 %v5018, %v5017
        %v5247 = vperm.slane %v5069, 0
        %v5297 = vunpack.c.l.b16 %v5020
        %v5298 = vunpack.c.l.b16 %v5021
        %v5299 = vunpack.c.l.b16 %v5022
        %v5300 = vunpack.c.l.b16 %v5023
        %v5301 = vunpack.c.l.b16 %v5024
        %v5302 = vunpack.c.l.b16 %v5025
        %v5303 = vunpack.c.l.b16 %v5026
        %v5304 = vunpack.c.l.b16 %v5027
        %v5305 = vunpack.c.l.b16 %v5028
        %v5306 = vunpack.c.l.b16 %v5029
        %v5307 = vunpack.c.l.b16 %v5030
        %v5308 = vunpack.c.l.b16 %v5031
        %v5309 = vunpack.c.l.b16 %v5032
        %v5310 = vunpack.c.l.b16 %v5033
        %v5311 = vunpack.c.l.b16 %v5034
        %v5312 = vunpack.c.l.b16 %v5035
        %v5313 = vunpack.c.l.b16 %v5036
        %v5314 = vunpack.c.l.b16 %v5037
        %v5315 = vunpack.c.l.b16 %v5038
        %v5316 = vunpack.c.l.b16 %v5039
        %v5317 = vunpack.c.l.b16 %v5040
        %v5318 = vunpack.c.l.b16 %v5041
        %v5319 = vunpack.c.l.b16 %v5042
        %v5320 = vunpack.c.l.b16 %v5043
        %v5321 = vunpack.c.l.b16 %v5044
        %v5322 = vunpack.c.l.b16 %v5045
        %v5323 = vunpack.c.l.b16 %v5046
        %v5324 = vunpack.c.l.b16 %v5047
        %v5325 = vunpack.c.l.b16 %v5048
        %v5326 = vunpack.c.l.b16 %v5049
        %v5327 = vunpack.c.l.b16 %v5050
        %v5328 = vunpack.c.l.b16 %v5051
        %v5329 = vunpack.c.l.b16 %v5052
        %v5330 = vunpack.c.l.b16 %v5053
        %v5331 = vunpack.c.l.b16 %v5054
        %v5332 = vunpack.c.l.b16 %v5055
        %v5333 = vunpack.c.l.b16 %v5056
        %v5334 = vunpack.c.l.b16 %v5057
        %v5335 = vunpack.c.l.b16 %v5058
        %v5336 = vunpack.c.l.b16 %v5059
        %v5337 = vunpack.c.l.b16 %v5060
        %v5338 = vunpack.c.l.b16 %v5061
        %v5339 = vunpack.c.l.b16 %v5062
        %v5340 = vunpack.c.l.b16 %v5063
        %v5341 = vunpack.c.l.b16 %v5064
        %v5342 = vunpack.c.l.b16 %v5065
        %v5343 = vunpack.c.l.b16 %v5066
        %v5344 = vunpack.c.l.b16 %v5067
        %v5345 = vpack.c.b16 %v5298, %v5297
        %v5346 = vpack.c.b16 %v5300, %v5299
        %v5347 = vpack.c.b16 %v5302, %v5301
        %v5348 = vpack.c.b16 %v5304, %v5303
        %v5349 = vpack.c.b16 %v5306, %v5305
        %v5350 = vpack.c.b16 %v5308, %v5307
        %v5351 = vpack.c.b16 %v5310, %v5309
        %v5352 = vpack.c.b16 %v5312, %v5311
        %v5353 = vpack.c.b16 %v5314, %v5313
        %v5354 = vpack.c.b16 %v5316, %v5315
        %v5355 = vpack.c.b16 %v5318, %v5317
        %v5356 = vpack.c.b16 %v5320, %v5319
        %v5357 = vpack.c.b16 %v5322, %v5321
        %v5358 = vpack.c.b16 %v5324, %v5323
        %v5359 = vpack.c.b16 %v5326, %v5325
        %v5360 = vpack.c.b16 %v5328, %v5327
        %v5361 = vpack.c.b16 %v5330, %v5329
        %v5362 = vpack.c.b16 %v5332, %v5331
        %v5363 = vpack.c.b16 %v5334, %v5333
        %v5364 = vpack.c.b16 %v5336, %v5335
        %v5365 = vpack.c.b16 %v5338, %v5337
        %v5366 = vpack.c.b16 %v5340, %v5339
        %v5367 = vpack.c.b16 %v5342, %v5341
        %v5368 = vpack.c.b16 %v5344, %v5343
        %5393 = vmatpush.bf16.msra.mxu0 %v5352
        %5394 = vmatpush.bf16.msra.mxu0 %v5351
        %5395 = vmatpush.bf16.msra.mxu0 %v5350
        %5396 = vmatpush.bf16.msra.mxu0 %v5349
        %5397 = vmatpush.bf16.msra.mxu0 %v5348
        %5398 = vmatpush.bf16.msra.mxu0 %v5347
        %5399 = vmatpush.bf16.msra.mxu0 %v5346
        %5400 = vmatpush.bf16.msra.mxu0 %v5345
        %5401 = vmatmul.bf16.gmra.mxu0 %v5198
        %v5402 = vpop.f32.mrf.mxu0
        %v5403 = vadd.f32 %v5247, %v5402
        %v5404 = vpop.f32.mrf.mxu0
        %v5405 = vadd.f32 %v5247, %v5404
        %5406 = vmatmul.bf16.gmra.mxu0 %v5201
        %v5407 = vpop.f32.mrf.mxu0
        %v5408 = vadd.f32 %v5247, %v5407
        %v5409 = vpop.f32.mrf.mxu0
        %v5410 = vadd.f32 %v5247, %v5409
        %5411 = vmatmul.bf16.gmra.mxu0 %v5204
        %v5412 = vpop.f32.mrf.mxu0
        %v5413 = vadd.f32 %v5247, %v5412
        %v5414 = vpop.f32.mrf.mxu0
        %v5415 = vadd.f32 %v5247, %v5414
        %5416 = vmatmul.bf16.gmra.mxu0 %v5207
        %v5417 = vpop.f32.mrf.mxu0
        %v5418 = vadd.f32 %v5247, %v5417
        %v5419 = vpop.f32.mrf.mxu0
        %v5420 = vadd.f32 %v5247, %v5419
        %5421 = vmatmul.bf16.gmra.mxu0 %v5210
        %v5422 = vpop.f32.mrf.mxu0
        %v5423 = vadd.f32 %v5247, %v5422
        %v5424 = vpop.f32.mrf.mxu0
        %v5425 = vadd.f32 %v5247, %v5424
        %5426 = vmatmul.bf16.gmra.mxu0 %v5213
        %v5427 = vpop.f32.mrf.mxu0
        %v5428 = vadd.f32 %v5247, %v5427
        %v5429 = vpop.f32.mrf.mxu0
        %v5430 = vadd.f32 %v5247, %v5429
        %5431 = vmatmul.bf16.gmra.mxu0 %v5216
        %v5432 = vpop.f32.mrf.mxu0
        %v5433 = vadd.f32 %v5247, %v5432
        %v5434 = vpop.f32.mrf.mxu0
        %v5435 = vadd.f32 %v5247, %v5434
        %5436 = vmatmul.bf16.gmra.mxu0 %v5219
        %v5437 = vpop.f32.mrf.mxu0
        %v5438 = vadd.f32 %v5247, %v5437
        %v5439 = vpop.f32.mrf.mxu0
        %v5440 = vadd.f32 %v5247, %v5439
        %5441 = vmatmul.bf16.gmra.mxu0 %v5222
        %v5442 = vpop.f32.mrf.mxu0
        %v5443 = vadd.f32 %v5247, %v5442
        %v5444 = vpop.f32.mrf.mxu0
        %v5445 = vadd.f32 %v5247, %v5444
        %5446 = vmatmul.bf16.gmra.mxu0 %v5225
        %v5447 = vpop.f32.mrf.mxu0
        %v5448 = vadd.f32 %v5247, %v5447
        %v5449 = vpop.f32.mrf.mxu0
        %v5450 = vadd.f32 %v5247, %v5449
        %5451 = vmatmul.bf16.gmra.mxu0 %v5228
        %v5452 = vpop.f32.mrf.mxu0
        %v5453 = vadd.f32 %v5247, %v5452
        %v5454 = vpop.f32.mrf.mxu0
        %v5455 = vadd.f32 %v5247, %v5454
        %5456 = vmatmul.bf16.gmra.mxu0 %v5231
        %v5457 = vpop.f32.mrf.mxu0
        %v5458 = vadd.f32 %v5247, %v5457
        %v5459 = vpop.f32.mrf.mxu0
        %v5460 = vadd.f32 %v5247, %v5459
        %5461 = vmatmul.bf16.gmra.mxu0 %v5234
        %v5462 = vpop.f32.mrf.mxu0
        %v5463 = vadd.f32 %v5247, %v5462
        %v5464 = vpop.f32.mrf.mxu0
        %v5465 = vadd.f32 %v5247, %v5464
        %5466 = vmatmul.bf16.gmra.mxu0 %v5237
        %v5467 = vpop.f32.mrf.mxu0
        %v5468 = vadd.f32 %v5247, %v5467
        %v5469 = vpop.f32.mrf.mxu0
        %v5470 = vadd.f32 %v5247, %v5469
        %5471 = vmatmul.bf16.gmra.mxu0 %v5240
        %v5472 = vpop.f32.mrf.mxu0
        %v5473 = vadd.f32 %v5247, %v5472
        %v5474 = vpop.f32.mrf.mxu0
        %v5475 = vadd.f32 %v5247, %v5474
        %5476 = vmatmul.bf16.gmra.mxu0 %v5243
        %v5477 = vpop.f32.mrf.mxu0
        %v5478 = vadd.f32 %v5247, %v5477
        %v5479 = vpop.f32.mrf.mxu0
        %v5480 = vadd.f32 %v5247, %v5479
        %5481 = vdwg.mxu0
        %5482 = vmatpush.bf16.msra.mxu0 %v5360
        %5483 = vmatpush.bf16.msra.mxu0 %v5359
        %5484 = vmatpush.bf16.msra.mxu0 %v5358
        %5485 = vmatpush.bf16.msra.mxu0 %v5357
        %5486 = vmatpush.bf16.msra.mxu0 %v5356
        %5487 = vmatpush.bf16.msra.mxu0 %v5355
        %5488 = vmatpush.bf16.msra.mxu0 %v5354
        %5489 = vmatpush.bf16.msra.mxu0 %v5353
        %5490 = vmatmul.bf16.gmra.mxu0 %v5199
        %v5491 = vpop.f32.mrf.mxu0
        %v5492 = vadd.f32 %v5403, %v5491
        %v5493 = vpop.f32.mrf.mxu0
        %v5494 = vadd.f32 %v5405, %v5493
        %5495 = vmatmul.bf16.gmra.mxu0 %v5202
        %v5496 = vpop.f32.mrf.mxu0
        %v5497 = vadd.f32 %v5408, %v5496
        %v5498 = vpop.f32.mrf.mxu0
        %v5499 = vadd.f32 %v5410, %v5498
        %5500 = vmatmul.bf16.gmra.mxu0 %v5205
        %v5501 = vpop.f32.mrf.mxu0
        %v5502 = vadd.f32 %v5413, %v5501
        %v5503 = vpop.f32.mrf.mxu0
        %v5504 = vadd.f32 %v5415, %v5503
        %5505 = vmatmul.bf16.gmra.mxu0 %v5208
        %v5506 = vpop.f32.mrf.mxu0
        %v5507 = vadd.f32 %v5418, %v5506
        %v5508 = vpop.f32.mrf.mxu0
        %v5509 = vadd.f32 %v5420, %v5508
        %5510 = vmatmul.bf16.gmra.mxu0 %v5211
        %v5511 = vpop.f32.mrf.mxu0
        %v5512 = vadd.f32 %v5423, %v5511
        %v5513 = vpop.f32.mrf.mxu0
        %v5514 = vadd.f32 %v5425, %v5513
        %5515 = vmatmul.bf16.gmra.mxu0 %v5214
        %v5516 = vpop.f32.mrf.mxu0
        %v5517 = vadd.f32 %v5428, %v5516
        %v5518 = vpop.f32.mrf.mxu0
        %v5519 = vadd.f32 %v5430, %v5518
        %5520 = vmatmul.bf16.gmra.mxu0 %v5217
        %v5521 = vpop.f32.mrf.mxu0
        %v5522 = vadd.f32 %v5433, %v5521
        %v5523 = vpop.f32.mrf.mxu0
        %v5524 = vadd.f32 %v5435, %v5523
        %5525 = vmatmul.bf16.gmra.mxu0 %v5220
        %v5526 = vpop.f32.mrf.mxu0
        %v5527 = vadd.f32 %v5438, %v5526
        %v5528 = vpop.f32.mrf.mxu0
        %v5529 = vadd.f32 %v5440, %v5528
        %5530 = vmatmul.bf16.gmra.mxu0 %v5223
        %v5531 = vpop.f32.mrf.mxu0
        %v5532 = vadd.f32 %v5443, %v5531
        %v5533 = vpop.f32.mrf.mxu0
        %v5534 = vadd.f32 %v5445, %v5533
        %5535 = vmatmul.bf16.gmra.mxu0 %v5226
        %v5536 = vpop.f32.mrf.mxu0
        %v5537 = vadd.f32 %v5448, %v5536
        %v5538 = vpop.f32.mrf.mxu0
        %v5539 = vadd.f32 %v5450, %v5538
        %5540 = vmatmul.bf16.gmra.mxu0 %v5229
        %v5541 = vpop.f32.mrf.mxu0
        %v5542 = vadd.f32 %v5453, %v5541
        %v5543 = vpop.f32.mrf.mxu0
        %v5544 = vadd.f32 %v5455, %v5543
        %5545 = vmatmul.bf16.gmra.mxu0 %v5232
        %v5546 = vpop.f32.mrf.mxu0
        %v5547 = vadd.f32 %v5458, %v5546
        %v5548 = vpop.f32.mrf.mxu0
        %v5549 = vadd.f32 %v5460, %v5548
        %5550 = vmatmul.bf16.gmra.mxu0 %v5235
        %v5551 = vpop.f32.mrf.mxu0
        %v5552 = vadd.f32 %v5463, %v5551
        %v5553 = vpop.f32.mrf.mxu0
        %v5554 = vadd.f32 %v5465, %v5553
        %5555 = vmatmul.bf16.gmra.mxu0 %v5238
        %v5556 = vpop.f32.mrf.mxu0
        %v5557 = vadd.f32 %v5468, %v5556
        %v5558 = vpop.f32.mrf.mxu0
        %v5559 = vadd.f32 %v5470, %v5558
        %5560 = vmatmul.bf16.gmra.mxu0 %v5241
        %v5561 = vpop.f32.mrf.mxu0
        %v5562 = vadd.f32 %v5473, %v5561
        %v5563 = vpop.f32.mrf.mxu0
        %v5564 = vadd.f32 %v5475, %v5563
        %5565 = vmatmul.bf16.gmra.mxu0 %v5244
        %v5566 = vpop.f32.mrf.mxu0
        %v5567 = vadd.f32 %v5478, %v5566
        %v5568 = vpop.f32.mrf.mxu0
        %v5569 = vadd.f32 %v5480, %v5568
        %5570 = vdwg.mxu0
        %5571 = vmatpush.bf16.msra.mxu0 %v5368
        %5572 = vmatpush.bf16.msra.mxu0 %v5367
        %5573 = vmatpush.bf16.msra.mxu0 %v5366
        %5574 = vmatpush.bf16.msra.mxu0 %v5365
        %5575 = vmatpush.bf16.msra.mxu0 %v5364
        %5576 = vmatpush.bf16.msra.mxu0 %v5363
        %5577 = vmatpush.bf16.msra.mxu0 %v5362
        %5578 = vmatpush.bf16.msra.mxu0 %v5361
        %5579 = vmatmul.bf16.gmra.mxu0 %v5200
        %v5580 = vpop.f32.mrf.mxu0
        %v5581 = vadd.f32 %v5492, %v5580
        %v5582 = vpop.f32.mrf.mxu0
        %v5583 = vadd.f32 %v5494, %v5582
        %5584 = vmatmul.bf16.gmra.mxu0 %v5203
        %v5585 = vpop.f32.mrf.mxu0
        %v5586 = vadd.f32 %v5497, %v5585
        %v5587 = vpop.f32.mrf.mxu0
        %v5588 = vadd.f32 %v5499, %v5587
        %5589 = vmatmul.bf16.gmra.mxu0 %v5206
        %v5590 = vpop.f32.mrf.mxu0
        %v5591 = vadd.f32 %v5502, %v5590
        %v5592 = vpop.f32.mrf.mxu0
        %v5593 = vadd.f32 %v5504, %v5592
        %5594 = vmatmul.bf16.gmra.mxu0 %v5209
        %v5595 = vpop.f32.mrf.mxu0
        %v5596 = vadd.f32 %v5507, %v5595
        %v5597 = vpop.f32.mrf.mxu0
        %v5598 = vadd.f32 %v5509, %v5597
        %5599 = vmatmul.bf16.gmra.mxu0 %v5212
        %v5600 = vpop.f32.mrf.mxu0
        %v5601 = vadd.f32 %v5512, %v5600
        %v5602 = vpop.f32.mrf.mxu0
        %v5603 = vadd.f32 %v5514, %v5602
        %5604 = vmatmul.bf16.gmra.mxu0 %v5215
        %v5605 = vpop.f32.mrf.mxu0
        %v5606 = vadd.f32 %v5517, %v5605
        %v5607 = vpop.f32.mrf.mxu0
        %v5608 = vadd.f32 %v5519, %v5607
        %5609 = vmatmul.bf16.gmra.mxu0 %v5218
        %v5610 = vpop.f32.mrf.mxu0
        %v5611 = vadd.f32 %v5522, %v5610
        %v5612 = vpop.f32.mrf.mxu0
        %v5613 = vadd.f32 %v5524, %v5612
        %5614 = vmatmul.bf16.gmra.mxu0 %v5221
        %v5615 = vpop.f32.mrf.mxu0
        %v5616 = vadd.f32 %v5527, %v5615
        %v5617 = vpop.f32.mrf.mxu0
        %v5618 = vadd.f32 %v5529, %v5617
        %5619 = vmatmul.bf16.gmra.mxu0 %v5224
        %v5620 = vpop.f32.mrf.mxu0
        %v5621 = vadd.f32 %v5532, %v5620
        %v5622 = vpop.f32.mrf.mxu0
        %v5623 = vadd.f32 %v5534, %v5622
        %5624 = vmatmul.bf16.gmra.mxu0 %v5227
        %v5625 = vpop.f32.mrf.mxu0
        %v5626 = vadd.f32 %v5537, %v5625
        %v5627 = vpop.f32.mrf.mxu0
        %v5628 = vadd.f32 %v5539, %v5627
        %5629 = vmatmul.bf16.gmra.mxu0 %v5230
        %v5630 = vpop.f32.mrf.mxu0
        %v5631 = vadd.f32 %v5542, %v5630
        %v5632 = vpop.f32.mrf.mxu0
        %v5633 = vadd.f32 %v5544, %v5632
        %5634 = vmatmul.bf16.gmra.mxu0 %v5233
        %v5635 = vpop.f32.mrf.mxu0
        %v5636 = vadd.f32 %v5547, %v5635
        %v5637 = vpop.f32.mrf.mxu0
        %v5638 = vadd.f32 %v5549, %v5637
        %5639 = vmatmul.bf16.gmra.mxu0 %v5236
        %v5640 = vpop.f32.mrf.mxu0
        %v5641 = vadd.f32 %v5552, %v5640
        %v5642 = vpop.f32.mrf.mxu0
        %v5643 = vadd.f32 %v5554, %v5642
        %5644 = vmatmul.bf16.gmra.mxu0 %v5239
        %v5645 = vpop.f32.mrf.mxu0
        %v5646 = vadd.f32 %v5557, %v5645
        %v5647 = vpop.f32.mrf.mxu0
        %v5648 = vadd.f32 %v5559, %v5647
        %5649 = vmatmul.bf16.gmra.mxu0 %v5242
        %v5650 = vpop.f32.mrf.mxu0
        %v5651 = vadd.f32 %v5562, %v5650
        %v5652 = vpop.f32.mrf.mxu0
        %v5653 = vadd.f32 %v5564, %v5652
        %5654 = vmatmul.bf16.gmra.mxu0 %v5245
        %v5655 = vpop.f32.mrf.mxu0
        %v5656 = vadd.f32 %v5567, %v5655
        %v5657 = vpop.f32.mrf.mxu0
        %v5658 = vadd.f32 %v5569, %v5657
        %5659 = vdwg.mxu0
        %v5660 = vmax.f32 %v5581, 0.0
        %v5661 = vmax.f32 %v5583, 0.0
        %v5662 = vmax.f32 %v5586, 0.0
        %v5663 = vmax.f32 %v5588, 0.0
        %v5664 = vmax.f32 %v5591, 0.0
        %v5665 = vmax.f32 %v5593, 0.0
        %v5666 = vmax.f32 %v5596, 0.0
        %v5667 = vmax.f32 %v5598, 0.0
        %v5668 = vmax.f32 %v5601, 0.0
        %v5669 = vmax.f32 %v5603, 0.0
        %v5670 = vmax.f32 %v5606, 0.0
        %v5671 = vmax.f32 %v5608, 0.0
        %v5672 = vmax.f32 %v5611, 0.0
        %v5673 = vmax.f32 %v5613, 0.0
        %v5674 = vmax.f32 %v5616, 0.0
        %v5675 = vmax.f32 %v5618, 0.0
        %v5676 = vmax.f32 %v5621, 0.0
        %v5677 = vmax.f32 %v5623, 0.0
        %v5678 = vmax.f32 %v5626, 0.0
        %v5679 = vmax.f32 %v5628, 0.0
        %v5680 = vmax.f32 %v5631, 0.0
        %v5681 = vmax.f32 %v5633, 0.0
        %v5682 = vmax.f32 %v5636, 0.0
        %v5683 = vmax.f32 %v5638, 0.0
        %v5684 = vmax.f32 %v5641, 0.0
        %v5685 = vmax.f32 %v5643, 0.0
        %v5686 = vmax.f32 %v5646, 0.0
        %v5687 = vmax.f32 %v5648, 0.0
        %v5688 = vmax.f32 %v5651, 0.0
        %v5689 = vmax.f32 %v5653, 0.0
        %v5690 = vmax.f32 %v5656, 0.0
        %v5691 = vmax.f32 %v5658, 0.0
        %v5692 = vadd.f32 %v5660, %v4312
        %v5693 = vadd.f32 %v5661, %v4313
        %v5694 = vadd.f32 %v5662, %v4314
        %v5695 = vadd.f32 %v5663, %v4315
        %v5696 = vadd.f32 %v5664, %v4316
        %v5697 = vadd.f32 %v5665, %v4317
        %v5698 = vadd.f32 %v5666, %v4318
        %v5699 = vadd.f32 %v5667, %v4319
        %v5700 = vadd.f32 %v5668, %v4320
        %v5701 = vadd.f32 %v5669, %v4321
        %v5702 = vadd.f32 %v5670, %v4322
        %v5703 = vadd.f32 %v5671, %v4323
        %v5704 = vadd.f32 %v5672, %v4324
        %v5705 = vadd.f32 %v5673, %v4325
        %v5706 = vadd.f32 %v5674, %v4326
        %v5707 = vadd.f32 %v5675, %v4327
        %v5708 = vadd.f32 %v5676, %v4328
        %v5709 = vadd.f32 %v5677, %v4329
        %v5710 = vadd.f32 %v5678, %v4330
        %v5711 = vadd.f32 %v5679, %v4331
        %v5712 = vadd.f32 %v5680, %v4332
        %v5713 = vadd.f32 %v5681, %v4333
        %v5714 = vadd.f32 %v5682, %v4334
        %v5715 = vadd.f32 %v5683, %v4335
        %v5716 = vadd.f32 %v5684, %v4336
        %v5717 = vadd.f32 %v5685, %v4337
        %v5718 = vadd.f32 %v5686, %v4338
        %v5719 = vadd.f32 %v5687, %v4339
        %v5720 = vadd.f32 %v5688, %v4340
        %v5721 = vadd.f32 %v5689, %v4341
        %v5722 = vadd.f32 %v5690, %v4342
        %v5723 = vadd.f32 %v5691, %v4343
        %v5724 = vld [vmem:[%s373] sm:$0xff]
        %v5725 = vld [vmem:[%s373 + $0x8] sm:$0xff]
        %v5726 = vlaneseq
        %v5727 = vshrl.u32 %v5726, 7
        %v5728 = vadd.s32 %v5727, 8
        %v5729 = vrot.slane %v5724, 1
        %v5730 = vrot.slane %v5724, 2
        %v5731 = vrot.slane %v5724, 3
        %v5732 = vrot.slane %v5724, 4
        %v5733 = vrot.slane %v5724, 5
        %v5734 = vrot.slane %v5724, 6
        %v5735 = vrot.slane %v5724, 7
        %v5736 = vrot.slane %v5725, 1
        %v5737 = vrot.slane %v5725, 2
        %v5738 = vrot.slane %v5725, 3
        %v5739 = vrot.slane %v5725, 4
        %v5740 = vrot.slane %v5725, 5
        %v5741 = vrot.slane %v5725, 6
        %v5742 = vrot.slane %v5725, 7
        %v5743 = vperm.slane %v5724, 0
        %v5744 = vperm.slane %v5729, 0
        %v5745 = vperm.slane %v5730, 0
        %v5746 = vperm.slane %v5731, 0
        %v5747 = vperm.slane %v5732, 0
        %v5748 = vperm.slane %v5733, 0
        %v5749 = vperm.slane %v5734, 0
        %v5750 = vperm.slane %v5735, 0
        %v5751 = vperm.slane %v5725, 0
        %v5752 = vperm.slane %v5736, 0
        %v5753 = vperm.slane %v5737, 0
        %v5754 = vperm.slane %v5738, 0
        %v5755 = vperm.slane %v5739, 0
        %v5756 = vperm.slane %v5740, 0
        %v5757 = vperm.slane %v5741, 0
        %v5758 = vperm.slane %v5742, 0
        %vm5759 = vcmp.lt.s32.totalorder %v5727, %v5743
        %vm5760 = vcmp.lt.s32.totalorder %v5728, %v5743
        %vm5761 = vcmp.lt.s32.totalorder %v5727, %v5744
        %vm5762 = vcmp.lt.s32.totalorder %v5728, %v5744
        %vm5763 = vcmp.lt.s32.totalorder %v5727, %v5745
        %vm5764 = vcmp.lt.s32.totalorder %v5728, %v5745
        %vm5765 = vcmp.lt.s32.totalorder %v5727, %v5746
        %vm5766 = vcmp.lt.s32.totalorder %v5728, %v5746
        %vm5767 = vcmp.lt.s32.totalorder %v5727, %v5747
        %vm5768 = vcmp.lt.s32.totalorder %v5728, %v5747
        %vm5769 = vcmp.lt.s32.totalorder %v5727, %v5748
        %vm5770 = vcmp.lt.s32.totalorder %v5728, %v5748
        %vm5771 = vcmp.lt.s32.totalorder %v5727, %v5749
        %vm5772 = vcmp.lt.s32.totalorder %v5728, %v5749
        %vm5773 = vcmp.lt.s32.totalorder %v5727, %v5750
        %vm5774 = vcmp.lt.s32.totalorder %v5728, %v5750
        %vm5775 = vcmp.lt.s32.totalorder %v5727, %v5751
        %vm5776 = vcmp.lt.s32.totalorder %v5728, %v5751
        %vm5777 = vcmp.lt.s32.totalorder %v5727, %v5752
        %vm5778 = vcmp.lt.s32.totalorder %v5728, %v5752
        %vm5779 = vcmp.lt.s32.totalorder %v5727, %v5753
        %vm5780 = vcmp.lt.s32.totalorder %v5728, %v5753
        %vm5781 = vcmp.lt.s32.totalorder %v5727, %v5754
        %vm5782 = vcmp.lt.s32.totalorder %v5728, %v5754
        %vm5783 = vcmp.lt.s32.totalorder %v5727, %v5755
        %vm5784 = vcmp.lt.s32.totalorder %v5728, %v5755
        %vm5785 = vcmp.lt.s32.totalorder %v5727, %v5756
        %vm5786 = vcmp.lt.s32.totalorder %v5728, %v5756
        %vm5787 = vcmp.lt.s32.totalorder %v5727, %v5757
        %vm5788 = vcmp.lt.s32.totalorder %v5728, %v5757
        %vm5789 = vcmp.lt.s32.totalorder %v5727, %v5758
        %vm5790 = vcmp.lt.s32.totalorder %v5728, %v5758
        %v5791 = vsel %vm5759, %v5692, 0.0
        %v5792 = vsel %vm5760, %v5693, 0.0
        %v5793 = vsel %vm5761, %v5694, 0.0
        %v5794 = vsel %vm5762, %v5695, 0.0
        %v5795 = vsel %vm5763, %v5696, 0.0
        %v5796 = vsel %vm5764, %v5697, 0.0
        %v5797 = vsel %vm5765, %v5698, 0.0
        %v5798 = vsel %vm5766, %v5699, 0.0
        %v5799 = vsel %vm5767, %v5700, 0.0
        %v5800 = vsel %vm5768, %v5701, 0.0
        %v5801 = vsel %vm5769, %v5702, 0.0
        %v5802 = vsel %vm5770, %v5703, 0.0
        %v5803 = vsel %vm5771, %v5704, 0.0
        %v5804 = vsel %vm5772, %v5705, 0.0
        %v5805 = vsel %vm5773, %v5706, 0.0
        %v5806 = vsel %vm5774, %v5707, 0.0
        %v5807 = vsel %vm5775, %v5708, 0.0
        %v5808 = vsel %vm5776, %v5709, 0.0
        %v5809 = vsel %vm5777, %v5710, 0.0
        %v5810 = vsel %vm5778, %v5711, 0.0
        %v5811 = vsel %vm5779, %v5712, 0.0
        %v5812 = vsel %vm5780, %v5713, 0.0
        %v5813 = vsel %vm5781, %v5714, 0.0
        %v5814 = vsel %vm5782, %v5715, 0.0
        %v5815 = vsel %vm5783, %v5716, 0.0
        %v5816 = vsel %vm5784, %v5717, 0.0
        %v5817 = vsel %vm5785, %v5718, 0.0
        %v5818 = vsel %vm5786, %v5719, 0.0
        %v5819 = vsel %vm5787, %v5720, 0.0
        %v5820 = vsel %vm5788, %v5721, 0.0
        %v5821 = vsel %vm5789, %v5722, 0.0
        %v5822 = vsel %vm5790, %v5723, 0.0
        %v5823 = vadd.f32 %v5791, %v5792
        %v5824 = vrot.slane %v5823, 4
        %v5825 = vadd.f32 %v5823, %v5824
        %v5826 = vrot.slane %v5825, 2
        %v5827 = vadd.f32 %v5825, %v5826
        %v5828 = vrot.slane %v5827, 1
        %v5829 = vadd.f32 %v5827, %v5828
        %v5830 = vadd.f32 %v5793, %v5794
        %v5831 = vrot.slane %v5830, 4
        %v5832 = vadd.f32 %v5830, %v5831
        %v5833 = vrot.slane %v5832, 2
        %v5834 = vadd.f32 %v5832, %v5833
        %v5835 = vrot.slane %v5834, 1
        %v5836 = vadd.f32 %v5834, %v5835
        %v5837 = vadd.f32 %v5795, %v5796
        %v5838 = vrot.slane %v5837, 4
        %v5839 = vadd.f32 %v5837, %v5838
        %v5840 = vrot.slane %v5839, 2
        %v5841 = vadd.f32 %v5839, %v5840
        %v5842 = vrot.slane %v5841, 1
        %v5843 = vadd.f32 %v5841, %v5842
        %v5844 = vadd.f32 %v5797, %v5798
        %v5845 = vrot.slane %v5844, 4
        %v5846 = vadd.f32 %v5844, %v5845
        %v5847 = vrot.slane %v5846, 2
        %v5848 = vadd.f32 %v5846, %v5847
        %v5849 = vrot.slane %v5848, 1
        %v5850 = vadd.f32 %v5848, %v5849
        %v5851 = vadd.f32 %v5799, %v5800
        %v5852 = vrot.slane %v5851, 4
        %v5853 = vadd.f32 %v5851, %v5852
        %v5854 = vrot.slane %v5853, 2
        %v5855 = vadd.f32 %v5853, %v5854
        %v5856 = vrot.slane %v5855, 1
        %v5857 = vadd.f32 %v5855, %v5856
        %v5858 = vadd.f32 %v5801, %v5802
        %v5859 = vrot.slane %v5858, 4
        %v5860 = vadd.f32 %v5858, %v5859
        %v5861 = vrot.slane %v5860, 2
        %v5862 = vadd.f32 %v5860, %v5861
        %v5863 = vrot.slane %v5862, 1
        %v5864 = vadd.f32 %v5862, %v5863
        %v5865 = vadd.f32 %v5803, %v5804
        %v5866 = vrot.slane %v5865, 4
        %v5867 = vadd.f32 %v5865, %v5866
        %v5868 = vrot.slane %v5867, 2
        %v5869 = vadd.f32 %v5867, %v5868
        %v5870 = vrot.slane %v5869, 1
        %v5871 = vadd.f32 %v5869, %v5870
        %v5872 = vadd.f32 %v5805, %v5806
        %v5873 = vrot.slane %v5872, 4
        %v5874 = vadd.f32 %v5872, %v5873
        %v5875 = vrot.slane %v5874, 2
        %v5876 = vadd.f32 %v5874, %v5875
        %v5877 = vrot.slane %v5876, 1
        %v5878 = vadd.f32 %v5876, %v5877
        %v5879 = vadd.f32 %v5807, %v5808
        %v5880 = vrot.slane %v5879, 4
        %v5881 = vadd.f32 %v5879, %v5880
        %v5882 = vrot.slane %v5881, 2
        %v5883 = vadd.f32 %v5881, %v5882
        %v5884 = vrot.slane %v5883, 1
        %v5885 = vadd.f32 %v5883, %v5884
        %v5886 = vadd.f32 %v5809, %v5810
        %v5887 = vrot.slane %v5886, 4
        %v5888 = vadd.f32 %v5886, %v5887
        %v5889 = vrot.slane %v5888, 2
        %v5890 = vadd.f32 %v5888, %v5889
        %v5891 = vrot.slane %v5890, 1
        %v5892 = vadd.f32 %v5890, %v5891
        %v5893 = vadd.f32 %v5811, %v5812
        %v5894 = vrot.slane %v5893, 4
        %v5895 = vadd.f32 %v5893, %v5894
        %v5896 = vrot.slane %v5895, 2
        %v5897 = vadd.f32 %v5895, %v5896
        %v5898 = vrot.slane %v5897, 1
        %v5899 = vadd.f32 %v5897, %v5898
        %v5900 = vadd.f32 %v5813, %v5814
        %v5901 = vrot.slane %v5900, 4
        %v5902 = vadd.f32 %v5900, %v5901
        %v5903 = vrot.slane %v5902, 2
        %v5904 = vadd.f32 %v5902, %v5903
        %v5905 = vrot.slane %v5904, 1
        %v5906 = vadd.f32 %v5904, %v5905
        %v5907 = vadd.f32 %v5815, %v5816
        %v5908 = vrot.slane %v5907, 4
        %v5909 = vadd.f32 %v5907, %v5908
        %v5910 = vrot.slane %v5909, 2
        %v5911 = vadd.f32 %v5909, %v5910
        %v5912 = vrot.slane %v5911, 1
        %v5913 = vadd.f32 %v5911, %v5912
        %v5914 = vadd.f32 %v5817, %v5818
        %v5915 = vrot.slane %v5914, 4
        %v5916 = vadd.f32 %v5914, %v5915
        %v5917 = vrot.slane %v5916, 2
        %v5918 = vadd.f32 %v5916, %v5917
        %v5919 = vrot.slane %v5918, 1
        %v5920 = vadd.f32 %v5918, %v5919
        %v5921 = vadd.f32 %v5819, %v5820
        %v5922 = vrot.slane %v5921, 4
        %v5923 = vadd.f32 %v5921, %v5922
        %v5924 = vrot.slane %v5923, 2
        %v5925 = vadd.f32 %v5923, %v5924
        %v5926 = vrot.slane %v5925, 1
        %v5927 = vadd.f32 %v5925, %v5926
        %v5928 = vadd.f32 %v5821, %v5822
        %v5929 = vrot.slane %v5928, 4
        %v5930 = vadd.f32 %v5928, %v5929
        %v5931 = vrot.slane %v5930, 2
        %v5932 = vadd.f32 %v5930, %v5931
        %v5933 = vrot.slane %v5932, 1
        %v5934 = vadd.f32 %v5932, %v5933
        %vm5935 = vcmp.gt.s32.totalorder %v5724, 1
        %v5936 = vsel %vm5935, %v5724, 1
        %vm5937 = vcmp.gt.s32.totalorder %v5725, 1
        %v5938 = vsel %vm5937, %v5725, 1
        %v5939 = vcvt.s32.f32 %v5936
        %v5940 = vcvt.s32.f32 %v5938
        %v5943 = vrot.slane %v5939, 1
        %v5944 = vrot.slane %v5939, 2
        %v5945 = vrot.slane %v5939, 3
        %v5946 = vrot.slane %v5939, 4
        %v5947 = vrot.slane %v5939, 5
        %v5948 = vrot.slane %v5939, 6
        %v5949 = vrot.slane %v5939, 7
        %v5950 = vrot.slane %v5940, 1
        %v5951 = vrot.slane %v5940, 2
        %v5952 = vrot.slane %v5940, 3
        %v5953 = vrot.slane %v5940, 4
        %v5954 = vrot.slane %v5940, 5
        %v5955 = vrot.slane %v5940, 6
        %v5956 = vrot.slane %v5940, 7
        %v5973 = vrcp.pop %v5939
        %v5974 = vmul.f32 %v5939, %v5973
        %v5975 = vsub.f32 1.0, %v5974
        %v5976 = vmul.f32 %v5973, %v5975
        %v5977 = vadd.f32 %v5973, %v5976
        %vm5978 = vweird.f32 %v5939
        %vm5979 = vweird.f32 %v5973
        %vm5980 = vmor %vm5978, %vm5979
        %v5981 = vsel %vm5980, %v5973, %v5977
        %v5982 = vand.u32 2147483647, %v5939
        %vm5983 = vcmp.eq.f32.partialorder %v5982, 8.507059e+37
        %v5984 = vand.u32 %v5939, 2147483648
        %v5985 = vor.u32 1.1754944e-38, %v5984
        %v5986 = vsel %vm5983, %v5985, %v5981
        %v5987 = vmul.f32 %v5829, %v5986
        %v5988 = vrcp.pop %v5943
        %v5989 = vmul.f32 %v5943, %v5988
        %v5990 = vsub.f32 1.0, %v5989
        %v5991 = vmul.f32 %v5988, %v5990
        %v5992 = vadd.f32 %v5988, %v5991
        %vm5993 = vweird.f32 %v5943
        %vm5994 = vweird.f32 %v5988
        %vm5995 = vmor %vm5993, %vm5994
        %v5996 = vsel %vm5995, %v5988, %v5992
        %v5997 = vand.u32 2147483647, %v5943
        %vm5998 = vcmp.eq.f32.partialorder %v5997, 8.507059e+37
        %v5999 = vand.u32 %v5943, 2147483648
        %v6000 = vor.u32 1.1754944e-38, %v5999
        %v6001 = vsel %vm5998, %v6000, %v5996
        %v6002 = vmul.f32 %v5836, %v6001
        %v6003 = vrcp.pop %v5944
        %v6004 = vmul.f32 %v5944, %v6003
        %v6005 = vsub.f32 1.0, %v6004
        %v6006 = vmul.f32 %v6003, %v6005
        %v6007 = vadd.f32 %v6003, %v6006
        %vm6008 = vweird.f32 %v5944
        %vm6009 = vweird.f32 %v6003
        %vm6010 = vmor %vm6008, %vm6009
        %v6011 = vsel %vm6010, %v6003, %v6007
        %v6012 = vand.u32 2147483647, %v5944
        %vm6013 = vcmp.eq.f32.partialorder %v6012, 8.507059e+37
        %v6014 = vand.u32 %v5944, 2147483648
        %v6015 = vor.u32 1.1754944e-38, %v6014
        %v6016 = vsel %vm6013, %v6015, %v6011
        %v6017 = vmul.f32 %v5843, %v6016
        %v6018 = vrcp.pop %v5945
        %v6019 = vmul.f32 %v5945, %v6018
        %v6020 = vsub.f32 1.0, %v6019
        %v6021 = vmul.f32 %v6018, %v6020
        %v6022 = vadd.f32 %v6018, %v6021
        %vm6023 = vweird.f32 %v5945
        %vm6024 = vweird.f32 %v6018
        %vm6025 = vmor %vm6023, %vm6024
        %v6026 = vsel %vm6025, %v6018, %v6022
        %v6027 = vand.u32 2147483647, %v5945
        %vm6028 = vcmp.eq.f32.partialorder %v6027, 8.507059e+37
        %v6029 = vand.u32 %v5945, 2147483648
        %v6030 = vor.u32 1.1754944e-38, %v6029
        %v6031 = vsel %vm6028, %v6030, %v6026
        %v6032 = vmul.f32 %v5850, %v6031
        %v6033 = vrcp.pop %v5946
        %v6034 = vmul.f32 %v5946, %v6033
        %v6035 = vsub.f32 1.0, %v6034
        %v6036 = vmul.f32 %v6033, %v6035
        %v6037 = vadd.f32 %v6033, %v6036
        %vm6038 = vweird.f32 %v5946
        %vm6039 = vweird.f32 %v6033
        %vm6040 = vmor %vm6038, %vm6039
        %v6041 = vsel %vm6040, %v6033, %v6037
        %v6042 = vand.u32 2147483647, %v5946
        %vm6043 = vcmp.eq.f32.partialorder %v6042, 8.507059e+37
        %v6044 = vand.u32 %v5946, 2147483648
        %v6045 = vor.u32 1.1754944e-38, %v6044
        %v6046 = vsel %vm6043, %v6045, %v6041
        %v6047 = vmul.f32 %v5857, %v6046
        %v6048 = vrcp.pop %v5947
        %v6049 = vmul.f32 %v5947, %v6048
        %v6050 = vsub.f32 1.0, %v6049
        %v6051 = vmul.f32 %v6048, %v6050
        %v6052 = vadd.f32 %v6048, %v6051
        %vm6053 = vweird.f32 %v5947
        %vm6054 = vweird.f32 %v6048
        %vm6055 = vmor %vm6053, %vm6054
        %v6056 = vsel %vm6055, %v6048, %v6052
        %v6057 = vand.u32 2147483647, %v5947
        %vm6058 = vcmp.eq.f32.partialorder %v6057, 8.507059e+37
        %v6059 = vand.u32 %v5947, 2147483648
        %v6060 = vor.u32 1.1754944e-38, %v6059
        %v6061 = vsel %vm6058, %v6060, %v6056
        %v6062 = vmul.f32 %v5864, %v6061
        %v6063 = vrcp.pop %v5948
        %v6064 = vmul.f32 %v5948, %v6063
        %v6065 = vsub.f32 1.0, %v6064
        %v6066 = vmul.f32 %v6063, %v6065
        %v6067 = vadd.f32 %v6063, %v6066
        %vm6068 = vweird.f32 %v5948
        %vm6069 = vweird.f32 %v6063
        %vm6070 = vmor %vm6068, %vm6069
        %v6071 = vsel %vm6070, %v6063, %v6067
        %v6072 = vand.u32 2147483647, %v5948
        %vm6073 = vcmp.eq.f32.partialorder %v6072, 8.507059e+37
        %v6074 = vand.u32 %v5948, 2147483648
        %v6075 = vor.u32 1.1754944e-38, %v6074
        %v6076 = vsel %vm6073, %v6075, %v6071
        %v6077 = vmul.f32 %v5871, %v6076
        %v6078 = vrcp.pop %v5949
        %v6079 = vmul.f32 %v5949, %v6078
        %v6080 = vsub.f32 1.0, %v6079
        %v6081 = vmul.f32 %v6078, %v6080
        %v6082 = vadd.f32 %v6078, %v6081
        %vm6083 = vweird.f32 %v5949
        %vm6084 = vweird.f32 %v6078
        %vm6085 = vmor %vm6083, %vm6084
        %v6086 = vsel %vm6085, %v6078, %v6082
        %v6087 = vand.u32 2147483647, %v5949
        %vm6088 = vcmp.eq.f32.partialorder %v6087, 8.507059e+37
        %v6089 = vand.u32 %v5949, 2147483648
        %v6090 = vor.u32 1.1754944e-38, %v6089
        %v6091 = vsel %vm6088, %v6090, %v6086
        %v6092 = vmul.f32 %v5878, %v6091
        %v6093 = vrcp.pop %v5940
        %v6094 = vmul.f32 %v5940, %v6093
        %v6095 = vsub.f32 1.0, %v6094
        %v6096 = vmul.f32 %v6093, %v6095
        %v6097 = vadd.f32 %v6093, %v6096
        %vm6098 = vweird.f32 %v5940
        %vm6099 = vweird.f32 %v6093
        %vm6100 = vmor %vm6098, %vm6099
        %v6101 = vsel %vm6100, %v6093, %v6097
        %v6102 = vand.u32 2147483647, %v5940
        %vm6103 = vcmp.eq.f32.partialorder %v6102, 8.507059e+37
        %v6104 = vand.u32 %v5940, 2147483648
        %v6105 = vor.u32 1.1754944e-38, %v6104
        %v6106 = vsel %vm6103, %v6105, %v6101
        %v6107 = vmul.f32 %v5885, %v6106
        %v6108 = vrcp.pop %v5950
        %v6109 = vmul.f32 %v5950, %v6108
        %v6110 = vsub.f32 1.0, %v6109
        %v6111 = vmul.f32 %v6108, %v6110
        %v6112 = vadd.f32 %v6108, %v6111
        %vm6113 = vweird.f32 %v5950
        %vm6114 = vweird.f32 %v6108
        %vm6115 = vmor %vm6113, %vm6114
        %v6116 = vsel %vm6115, %v6108, %v6112
        %v6117 = vand.u32 2147483647, %v5950
        %vm6118 = vcmp.eq.f32.partialorder %v6117, 8.507059e+37
        %v6119 = vand.u32 %v5950, 2147483648
        %v6120 = vor.u32 1.1754944e-38, %v6119
        %v6121 = vsel %vm6118, %v6120, %v6116
        %v6122 = vmul.f32 %v5892, %v6121
        %v6123 = vrcp.pop %v5951
        %v6124 = vmul.f32 %v5951, %v6123
        %v6125 = vsub.f32 1.0, %v6124
        %v6126 = vmul.f32 %v6123, %v6125
        %v6127 = vadd.f32 %v6123, %v6126
        %vm6128 = vweird.f32 %v5951
        %vm6129 = vweird.f32 %v6123
        %vm6130 = vmor %vm6128, %vm6129
        %v6131 = vsel %vm6130, %v6123, %v6127
        %v6132 = vand.u32 2147483647, %v5951
        %vm6133 = vcmp.eq.f32.partialorder %v6132, 8.507059e+37
        %v6134 = vand.u32 %v5951, 2147483648
        %v6135 = vor.u32 1.1754944e-38, %v6134
        %v6136 = vsel %vm6133, %v6135, %v6131
        %v6137 = vmul.f32 %v5899, %v6136
        %v6138 = vrcp.pop %v5952
        %v6139 = vmul.f32 %v5952, %v6138
        %v6140 = vsub.f32 1.0, %v6139
        %v6141 = vmul.f32 %v6138, %v6140
        %v6142 = vadd.f32 %v6138, %v6141
        %vm6143 = vweird.f32 %v5952
        %vm6144 = vweird.f32 %v6138
        %vm6145 = vmor %vm6143, %vm6144
        %v6146 = vsel %vm6145, %v6138, %v6142
        %v6147 = vand.u32 2147483647, %v5952
        %vm6148 = vcmp.eq.f32.partialorder %v6147, 8.507059e+37
        %v6149 = vand.u32 %v5952, 2147483648
        %v6150 = vor.u32 1.1754944e-38, %v6149
        %v6151 = vsel %vm6148, %v6150, %v6146
        %v6152 = vmul.f32 %v5906, %v6151
        %v6153 = vrcp.pop %v5953
        %v6154 = vmul.f32 %v5953, %v6153
        %v6155 = vsub.f32 1.0, %v6154
        %v6156 = vmul.f32 %v6153, %v6155
        %v6157 = vadd.f32 %v6153, %v6156
        %vm6158 = vweird.f32 %v5953
        %vm6159 = vweird.f32 %v6153
        %vm6160 = vmor %vm6158, %vm6159
        %v6161 = vsel %vm6160, %v6153, %v6157
        %v6162 = vand.u32 2147483647, %v5953
        %vm6163 = vcmp.eq.f32.partialorder %v6162, 8.507059e+37
        %v6164 = vand.u32 %v5953, 2147483648
        %v6165 = vor.u32 1.1754944e-38, %v6164
        %v6166 = vsel %vm6163, %v6165, %v6161
        %v6167 = vmul.f32 %v5913, %v6166
        %v6168 = vrcp.pop %v5954
        %v6169 = vmul.f32 %v5954, %v6168
        %v6170 = vsub.f32 1.0, %v6169
        %v6171 = vmul.f32 %v6168, %v6170
        %v6172 = vadd.f32 %v6168, %v6171
        %vm6173 = vweird.f32 %v5954
        %vm6174 = vweird.f32 %v6168
        %vm6175 = vmor %vm6173, %vm6174
        %v6176 = vsel %vm6175, %v6168, %v6172
        %v6177 = vand.u32 2147483647, %v5954
        %vm6178 = vcmp.eq.f32.partialorder %v6177, 8.507059e+37
        %v6179 = vand.u32 %v5954, 2147483648
        %v6180 = vor.u32 1.1754944e-38, %v6179
        %v6181 = vsel %vm6178, %v6180, %v6176
        %v6182 = vmul.f32 %v5920, %v6181
        %v6183 = vrcp.pop %v5955
        %v6184 = vmul.f32 %v5955, %v6183
        %v6185 = vsub.f32 1.0, %v6184
        %v6186 = vmul.f32 %v6183, %v6185
        %v6187 = vadd.f32 %v6183, %v6186
        %vm6188 = vweird.f32 %v5955
        %vm6189 = vweird.f32 %v6183
        %vm6190 = vmor %vm6188, %vm6189
        %v6191 = vsel %vm6190, %v6183, %v6187
        %v6192 = vand.u32 2147483647, %v5955
        %vm6193 = vcmp.eq.f32.partialorder %v6192, 8.507059e+37
        %v6194 = vand.u32 %v5955, 2147483648
        %v6195 = vor.u32 1.1754944e-38, %v6194
        %v6196 = vsel %vm6193, %v6195, %v6191
        %v6197 = vmul.f32 %v5927, %v6196
        %v6198 = vrcp.pop %v5956
        %v6199 = vmul.f32 %v5956, %v6198
        %v6200 = vsub.f32 1.0, %v6199
        %v6201 = vmul.f32 %v6198, %v6200
        %v6202 = vadd.f32 %v6198, %v6201
        %vm6203 = vweird.f32 %v5956
        %vm6204 = vweird.f32 %v6198
        %vm6205 = vmor %vm6203, %vm6204
        %v6206 = vsel %vm6205, %v6198, %v6202
        %v6207 = vand.u32 2147483647, %v5956
        %vm6208 = vcmp.eq.f32.partialorder %v6207, 8.507059e+37
        %v6209 = vand.u32 %v5956, 2147483648
        %v6210 = vor.u32 1.1754944e-38, %v6209
        %v6211 = vsel %vm6208, %v6210, %v6206
        %v6212 = vmul.f32 %v5934, %v6211
        %v6213 = vld [vmem:[%s8] sm:$0x1]
        %v6215 = vperm.slane %v6213, 0
        %v6217 = vmul.f32 %v5987, %v6215
        %v6218 = vmul.f32 %v6002, %v6215
        %v6219 = vmul.f32 %v6017, %v6215
        %v6220 = vmul.f32 %v6032, %v6215
        %v6221 = vmul.f32 %v6047, %v6215
        %v6222 = vmul.f32 %v6062, %v6215
        %v6223 = vmul.f32 %v6077, %v6215
        %v6224 = vmul.f32 %v6092, %v6215
        %v6225 = vmul.f32 %v6107, %v6215
        %v6226 = vmul.f32 %v6122, %v6215
        %v6227 = vmul.f32 %v6137, %v6215
        %v6228 = vmul.f32 %v6152, %v6215
        %v6229 = vmul.f32 %v6167, %v6215
        %v6230 = vmul.f32 %v6182, %v6215
        %v6231 = vmul.f32 %v6197, %v6215
        %v6232 = vmul.f32 %v6212, %v6215
        %v6249 = vrot.slane %v6218, 7
        %vm6250 = vcmask 1041409
        %v6251 = vsel %vm6250, %v6249, %v6217
        %v6252 = vrot.slane %v6219, 6
        %vm6253 = vcmask 1042434
        %v6254 = vsel %vm6253, %v6252, %v6251
        %v6255 = vrot.slane %v6220, 5
        %vm6256 = vcmask 1043459
        %v6257 = vsel %vm6256, %v6255, %v6254
        %v6258 = vrot.slane %v6221, 4
        %vm6259 = vcmask 1044484
        %v6260 = vsel %vm6259, %v6258, %v6257
        %v6261 = vrot.slane %v6222, 3
        %vm6262 = vcmask 1045509
        %v6263 = vsel %vm6262, %v6261, %v6260
        %v6264 = vrot.slane %v6223, 2
        %vm6265 = vcmask 1046534
        %v6266 = vsel %vm6265, %v6264, %v6263
        %v6267 = vrot.slane %v6224, 1
        %vm6268 = vcmask 1047559
        %v6269 = vsel %vm6268, %v6267, %v6266
        %v6270 = vrot.slane %v6226, 7
        %v6271 = vsel %vm6250, %v6270, %v6225
        %v6272 = vrot.slane %v6227, 6
        %v6273 = vsel %vm6253, %v6272, %v6271
        %v6274 = vrot.slane %v6228, 5
        %v6275 = vsel %vm6256, %v6274, %v6273
        %v6276 = vrot.slane %v6229, 4
        %v6277 = vsel %vm6259, %v6276, %v6275
        %v6278 = vrot.slane %v6230, 3
        %v6279 = vsel %vm6262, %v6278, %v6277
        %v6280 = vrot.slane %v6231, 2
        %v6281 = vsel %vm6265, %v6280, %v6279
        %v6282 = vrot.slane %v6232, 1
        %v6283 = vsel %vm6268, %v6282, %v6281
        %6286 = vst [vmem:[%s361] sm:$0xff] %v6269
        %6287 = vst [vmem:[%s361 + $0x8] sm:$0xff] %v6283
        %s6288 = sand.u32 %s231, 1
        %s6289 = scalar_lea.sflag [#allocation4], %s6288
        %s6290 = sand.u32 %s231, 1
        %s6291 = smul.addr %s6290, 16
        %s6292 = scalar_lea.vmem [#allocation5], %s6291
        // Predicated region
        $region61: #{tpu_custom_call.1} parent=55 // pred_check
          %p6293 = pneg %p241
        $region62: #{tpu_custom_call.1} parent=55 // pred_check_branch
          %6295 = sbr.rel (%p6293) target = $region64
        $region63: #{tpu_custom_call.1} parent=55 // pred_region
          %s6296 = smul.u32 2, %s24
          %6298 = vsyncadd %s6289, 0
          %s6299 = smul.addr %s6296, 8
          %s6300 = scalar_lea.hbm %s9, %s6299
          %s6301 = sshll.u32 %s6292, 4
          %s6302 = int_to_ptr.vmem [resolvable:$true] %s6301
          %s6303 = sshll.u32 %s6300, 4
          %s6304 = int_to_ptr.hbm [resolvable:$true] %s6303
          %6309 = dma.vmem_to_hbm [thread:$0]  %s6302, 256, %s6304, %s6289, 128, 128, 8
        $region64: #{tpu_custom_call.1} parent=55 // pred_fallthru
          _
      $region56: #{tpu_custom_call.1} parent=5 // pred_fallthru
        _
      %p6310 = scmp.le.s32.totalorder 2, %s19
      // Predicated region
      $region65: #{tpu_custom_call.1} parent=5 // pred_check
        %p6311 = pneg %p6310
      $region66: #{tpu_custom_call.1} parent=5 // pred_check_branch
        %6313 = sbr.rel (%p6311) target = $region68
      $region67: #{tpu_custom_call.1} parent=5 // pred_region
        %s6314 = ssub.s32 %s19, 2
        // Predicated region
        $region69: #{tpu_custom_call.1} parent=67 // pred_check
          %p6315 = pneg %p247
        $region70: #{tpu_custom_call.1} parent=67 // pred_check_branch
          %6317 = sbr.rel (%p6315) target = $region72
        $region71: #{tpu_custom_call.1} parent=67 // pred_region
          %s6318 = sand.u32 %s232, 1
          %s6319 = scalar_lea.sflag [#allocation4], %s6318
          %s6320 = sand.u32 %s232, 1
          %s6321 = smul.addr %s6320, 16
          %s6322 = scalar_lea.vmem [#allocation5], %s6321
          %6324 = dma.done %s6319, 256
        $region72: #{tpu_custom_call.1} parent=67 // pred_fallthru
          _
      $region68: #{tpu_custom_call.1} parent=5 // pred_fallthru
        _
    $region6: #{tpu_custom_call.1} parent=1 // loop_footer
      %s23 = sadd.s32 1, %s19
    $region7: #{tpu_custom_call.1} parent=1 // loop_footer_branch
      %18 = sbr.rel target = $region3
    $region8: #{tpu_custom_call.1} parent=1 // loop_exit
      _
    %6325 = vsyncpa [#allocation3], 1
    %s6326 = scalar_lea.sflag [#allocation3], 1
    %6327 = vsyncpa %s6326, 1
    %6328 = vsyncpa [#allocation4], 1
    %s6329 = scalar_lea.sflag [#allocation4], 1
    %6330 = vsyncpa %s6329, 1

</llo_original>
